<compile_context>
chip_gen: v5e
topology: v5e:2x2
jax: 0.10.0
libtpu: 0.0.40
codegen_flags: <defaults>
</compile_context>

<pallas_src>
import functools

import jax
import jax.numpy as jnp
from jax.experimental import pallas as pl
from jax.experimental.pallas import tpu as pltpu

# ----------------------------- problem sizes (small, module-consistent) ------
N = 128      # total nodes in the PyG-style batched graph (2 graphs x 64 nodes)
F = 128      # feature dim (stands in for 768)
H = 4        # attention heads (stands in for 12)
B = 2        # graphs in the batch
HID = 128    # MLP hidden dim
C = 8        # number of classes
C_PAD = 128  # lane-dense logits slab written by the kernel (first C cols real)


# ----------------------------- fused Pallas kernel ---------------------------
def net_kernel(x_ref, adj_ref, pool_ref,
               w1_ref, wa1_ref, b1_ref,
               w2_ref, wa2_ref, b2_ref,
               mw1_ref, mb1_ref, mw2_ref, mb2_ref,
               o_ref, *, heads):
    """conv1 -> conv2 -> scatter_mean -> MLP, fully fused in VMEM."""
    x = x_ref[...]                                            # [N, F]
    # adjacency additive mask, hoisted out of both layers' head loops
    mask_bias = jnp.where(adj_ref[...] > 0.0, 0.0, -1e30)     # [N, N]
    inv_heads = 1.0 / heads

    def gat_layer(x_in, w, wa, bias):
        f = x_in.shape[1]
        # all heads' projections in one MXU matmul: [N, H*F]
        xh_all = jnp.dot(x_in, w, preferred_element_type=jnp.float32)
        # attention score terms for src AND dst of all heads in one matmul:
        # s_all[:, :H] = a_src.(W_h x),  s_all[:, H:] = a_dst.(W_h x)
        s_all = jnp.dot(x_in, wa, preferred_element_type=jnp.float32)   # [N, 2H]
        s_src_t = jnp.transpose(s_all[:, :heads])                        # [H, N]

        acc = None
        for h in range(heads):                                # static unroll
            # e[i, j] = LeakyReLU(a_dst.(W_h x_i) + a_src.(W_h x_j)), masked
            e = s_all[:, heads + h:heads + h + 1] + s_src_t[h:h + 1, :]  # [N, N]
            e = jnp.maximum(e, 0.2 * e) + mask_bias           # LeakyReLU(0.2) + mask
            # softmax over incoming neighbours j (self-loops keep rows finite)
            e = e - jnp.max(e, axis=-1, keepdims=True)
            p = jnp.exp(e)
            inv_l = pl.reciprocal(jnp.sum(p, axis=-1, keepdims=True), approx=True)
            p = p * (inv_l * inv_heads)                       # fold mean over heads
            # aligned 128-lane view of this head's projection -> MXU matmul
            contrib = jnp.dot(p, xh_all[:, h * f:(h + 1) * f],
                              preferred_element_type=jnp.float32)
            acc = contrib if acc is None else acc + contrib
        return acc + bias                                     # [N, F]

    x1 = gat_layer(x, w1_ref[...], wa1_ref[...], b1_ref[...])
    x2 = gat_layer(x1, w2_ref[...], wa2_ref[...], b2_ref[...])

    # scatter_mean over graphs (pool_mat @ x) followed by the MLP head
    pooled = jnp.dot(pool_ref[...], x2, preferred_element_type=jnp.float32)   # [B, F]
    hdn = jnp.dot(pooled, mw1_ref[...],
                  preferred_element_type=jnp.float32) + mb1_ref[...]          # [B, HID]
    hdn = jnp.maximum(hdn, 0.0)
    o_ref[...] = jnp.dot(hdn, mw2_ref[...],
                         preferred_element_type=jnp.float32) + mb2_ref[...]   # [B, C_PAD]


# ----------------------------- wrapper ----------------------------------------
_VMEM = pl.BlockSpec(memory_space=pltpu.MemorySpace.VMEM)


@jax.jit
def net_forward(x, adj, pool_mat, params):
    def fold_att(w, att_src, att_dst):
        f_in = w.shape[0]
        heads, f_out = att_src.shape
        w3 = w.reshape(f_in, heads, f_out)
        # WA_*[g, h] = sum_f W[g, h*F+f] * a_*[h, f]  =>  (x @ WA_*)[:, h] == a_* . (W_h x)
        wa_src = jnp.einsum("ghf,hf->gh", w3, att_src)
        wa_dst = jnp.einsum("ghf,hf->gh", w3, att_dst)
        return jnp.concatenate([wa_src, wa_dst], axis=1)      # [F, 2H]

    w1, a1s, a1d, b1 = params["conv1"]
    w2, a2s, a2d, b2 = params["conv2"]
    mw1, mb1, mw2, mb2 = params["mlp"]
    wa1 = fold_att(w1, a1s, a1d)
    wa2 = fold_att(w2, a2s, a2d)

    # lane-dense classifier slab: pad final layer to 128 output columns
    mw2p = jnp.pad(mw2, ((0, 0), (0, C_PAD - mw2.shape[1])))
    mb2p = jnp.pad(mb2, ((0, 0), (0, C_PAD - mb2.shape[1])))

    logits_pad = pl.pallas_call(
        functools.partial(net_kernel, heads=H),
        out_shape=jax.ShapeDtypeStruct((pool_mat.shape[0], C_PAD), jnp.float32),
        in_specs=[_VMEM] * 13,
        out_specs=_VMEM,
    )(x, adj, pool_mat,
      w1, wa1, b1,
      w2, wa2, b2,
      mw1, mb1, mw2p, mb2p)
    return logits_pad[:, :C]


# ----------------------------- parameter init ---------------------------------
def init_params(key):
    ks = jax.random.split(key, 10)
    scale = 1.0 / jnp.sqrt(jnp.float32(F))

    def gat_params(k0, k1, k2, k3):
        w = jax.random.normal(k0, (F, H * F), jnp.float32) * scale
        a_src = jax.random.normal(k1, (H, F), jnp.float32) * scale
        a_dst = jax.random.normal(k2, (H, F), jnp.float32) * scale
        bias = jax.random.normal(k3, (1, F), jnp.float32) * 0.01
        return (w, a_src, a_dst, bias)

    w1 = jax.random.normal(ks[8], (F, HID), jnp.float32) * scale
    b1 = jnp.zeros((1, HID), jnp.float32)
    w2 = jax.random.normal(ks[9], (HID, C), jnp.float32) * (1.0 / jnp.sqrt(jnp.float32(HID)))
    b2 = jnp.zeros((1, C), jnp.float32)

    return {
        "conv1": gat_params(ks[0], ks[1], ks[2], ks[3]),
        "conv2": gat_params(ks[4], ks[5], ks[6], ks[7]),
        "mlp": (w1, b1, w2, b2),
    }


# ----------------------------- main --------------------------------------------
if __name__ == "__main__":
    key = jax.random.PRNGKey(0)
    k_x, k_e, k_p = jax.random.split(key, 3)

    # node features
    x = jax.random.normal(k_x, (N, F), jnp.float32)

    # random sparse edge set -> dense adjacency mask (adj[i, j] = edge j -> i),
    # plus self-loops (GATConv default add_self_loops=True)
    rand_adj = (jax.random.uniform(k_e, (N, N)) < 0.1).astype(jnp.float32)
    adj = jnp.maximum(rand_adj, jnp.eye(N, dtype=jnp.float32))

    # data.batch : first half of nodes belong to graph 0, rest to graph 1
    batch = jnp.concatenate([jnp.zeros((N // 2,), jnp.int32),
                             jnp.ones((N - N // 2,), jnp.int32)])
    onehot = (batch[None, :] == jnp.arange(B, dtype=jnp.int32)[:, None]).astype(jnp.float32)
    counts = jnp.maximum(jnp.sum(onehot, axis=1, keepdims=True), 1.0)
    pool_mat = onehot / counts                      # [B, N], scatter_mean matrix

    params = init_params(k_p)

    out = net_forward(x, adj, pool_mat, params)
    out = jax.block_until_ready(out)
    assert out.shape == (B, C) and bool(jnp.all(jnp.isfinite(out)))
    print("KERNEL_OK")
</pallas_src>

<mosaic_0001>
module attributes {stable_mosaic.version = 11 : i64} {
  func.func @net_kernel(%arg0: memref<128x128xf32, #tpu.memory_space<vmem>>, %arg1: memref<128x128xf32, #tpu.memory_space<vmem>>, %arg2: memref<2x128xf32, #tpu.memory_space<vmem>>, %arg3: memref<128x512xf32, #tpu.memory_space<vmem>>, %arg4: memref<128x8xf32, #tpu.memory_space<vmem>>, %arg5: memref<1x128xf32, #tpu.memory_space<vmem>>, %arg6: memref<128x512xf32, #tpu.memory_space<vmem>>, %arg7: memref<128x8xf32, #tpu.memory_space<vmem>>, %arg8: memref<1x128xf32, #tpu.memory_space<vmem>>, %arg9: memref<128x128xf32, #tpu.memory_space<vmem>>, %arg10: memref<1x128xf32, #tpu.memory_space<vmem>>, %arg11: memref<128x128xf32, #tpu.memory_space<vmem>>, %arg12: memref<1x128xf32, #tpu.memory_space<vmem>>, %arg13: memref<2x128xf32, #tpu.memory_space<vmem>>) attributes {dimension_semantics = [], scalar_prefetch = 0 : i64, scratch_operands = 0 : i64, tpu.core_type = #tpu.core_type<tc>} {
    %c0 = arith.constant 0 : index
    %c0_0 = arith.constant 0 : index
    %0 = vector.load %arg0[%c0, %c0_0] : memref<128x128xf32, #tpu.memory_space<vmem>>, vector<128x128xf32>
    %c0_1 = arith.constant 0 : index
    %c0_2 = arith.constant 0 : index
    %1 = vector.load %arg1[%c0_1, %c0_2] : memref<128x128xf32, #tpu.memory_space<vmem>>, vector<128x128xf32>
    %cst = arith.constant 0.000000e+00 : f32
    %2 = vector.broadcast %cst : f32 to vector<128x128xf32>
    %3 = arith.cmpf ogt, %1, %2 : vector<128x128xf32>
    %cst_3 = arith.constant 0.000000e+00 : f32
    %cst_4 = arith.constant -1.000000e+30 : f32
    %4 = vector.broadcast %cst_3 : f32 to vector<128x128xf32>
    %5 = vector.broadcast %cst_4 : f32 to vector<128x128xf32>
    %6 = arith.select %3, %4, %5 : vector<128x128xi1>, vector<128x128xf32>
    %c0_5 = arith.constant 0 : index
    %c0_6 = arith.constant 0 : index
    %7 = vector.load %arg3[%c0_5, %c0_6] : memref<128x512xf32, #tpu.memory_space<vmem>>, vector<128x512xf32>
    %c0_7 = arith.constant 0 : index
    %c0_8 = arith.constant 0 : index
    %8 = vector.load %arg4[%c0_7, %c0_8] : memref<128x8xf32, #tpu.memory_space<vmem>>, vector<128x8xf32>
    %c0_9 = arith.constant 0 : index
    %c0_10 = arith.constant 0 : index
    %9 = vector.load %arg5[%c0_9, %c0_10] : memref<1x128xf32, #tpu.memory_space<vmem>>, vector<1x128xf32>
    %cst_11 = arith.constant dense<0.000000e+00> : vector<128x512xf32>
    %10 = tpu.matmul %0, %7, %cst_11 {dimension_numbers = #tpu.dot_dimension_numbers<[1], [0], [0], [1], [0, 0, 1, 1], [], []>} : vector<128x128xf32>, vector<128x512xf32>, vector<128x512xf32> -> vector<128x512xf32>
    %cst_12 = arith.constant dense<0.000000e+00> : vector<128x8xf32>
    %11 = tpu.matmul %0, %8, %cst_12 {dimension_numbers = #tpu.dot_dimension_numbers<[1], [0], [0], [1], [0, 0, 1, 1], [], []>} : vector<128x128xf32>, vector<128x8xf32>, vector<128x8xf32> -> vector<128x8xf32>
    %12 = vector.extract_strided_slice %11 {offsets = [0, 0], sizes = [128, 4], strides = [1, 1]} : vector<128x8xf32> to vector<128x4xf32>
    %13 = tpu.transpose %12, [1, 0] : vector<128x4xf32> -> vector<4x128xf32>
    %14 = vector.extract_strided_slice %11 {offsets = [0, 4], sizes = [128, 1], strides = [1, 1]} : vector<128x8xf32> to vector<128x1xf32>
    %15 = vector.extract_strided_slice %13 {offsets = [0, 0], sizes = [1, 128], strides = [1, 1]} : vector<4x128xf32> to vector<1x128xf32>
    %16 = vector.broadcast %14 : vector<128x1xf32> to vector<128x128xf32>
    %17 = vector.broadcast %15 : vector<1x128xf32> to vector<128x128xf32>
    %18 = arith.addf %16, %17 : vector<128x128xf32>
    %cst_13 = arith.constant 2.000000e-01 : f32
    %19 = vector.broadcast %cst_13 : f32 to vector<128x128xf32>
    %20 = arith.mulf %19, %18 : vector<128x128xf32>
    %21 = arith.maximumf %18, %20 : vector<128x128xf32>
    %22 = arith.addf %21, %6 : vector<128x128xf32>
    %cst_14 = arith.constant dense<0xFF800000> : vector<128xf32>
    %23 = vector.multi_reduction <maximumf>, %22, %cst_14 [1] : vector<128x128xf32> to vector<128xf32>
    %24 = vector.shape_cast %23 : vector<128xf32> to vector<128x1xf32>
    %25 = vector.broadcast %24 : vector<128x1xf32> to vector<128x128xf32>
    %26 = arith.subf %22, %25 : vector<128x128xf32>
    %27 = math.exp %26 : vector<128x128xf32>
    %cst_15 = arith.constant dense<0.000000e+00> : vector<128xf32>
    %28 = vector.multi_reduction <add>, %27, %cst_15 [1] : vector<128x128xf32> to vector<128xf32>
    %29 = vector.shape_cast %28 : vector<128xf32> to vector<128x1xf32>
    %30 = tpu.reciprocal %29 {approx = true} : vector<128x1xf32> -> vector<128x1xf32>
    %cst_16 = arith.constant 2.500000e-01 : f32
    %31 = vector.broadcast %cst_16 : f32 to vector<128x1xf32>
    %32 = arith.mulf %30, %31 : vector<128x1xf32>
    %33 = vector.broadcast %32 : vector<128x1xf32> to vector<128x128xf32>
    %34 = arith.mulf %27, %33 : vector<128x128xf32>
    %35 = vector.extract_strided_slice %10 {offsets = [0, 0], sizes = [128, 128], strides = [1, 1]} : vector<128x512xf32> to vector<128x128xf32>
    %cst_17 = arith.constant dense<0.000000e+00> : vector<128x128xf32>
    %36 = tpu.matmul %34, %35, %cst_17 {dimension_numbers = #tpu.dot_dimension_numbers<[1], [0], [0], [1], [0, 0, 1, 1], [], []>} : vector<128x128xf32>, vector<128x128xf32>, vector<128x128xf32> -> vector<128x128xf32>
    %37 = vector.extract_strided_slice %11 {offsets = [0, 5], sizes = [128, 1], strides = [1, 1]} : vector<128x8xf32> to vector<128x1xf32>
    %38 = vector.extract_strided_slice %13 {offsets = [1, 0], sizes = [1, 128], strides = [1, 1]} : vector<4x128xf32> to vector<1x128xf32>
    %39 = vector.broadcast %37 : vector<128x1xf32> to vector<128x128xf32>
    %40 = vector.broadcast %38 : vector<1x128xf32> to vector<128x128xf32>
    %41 = arith.addf %39, %40 : vector<128x128xf32>
    %cst_18 = arith.constant 2.000000e-01 : f32
    %42 = vector.broadcast %cst_18 : f32 to vector<128x128xf32>
    %43 = arith.mulf %42, %41 : vector<128x128xf32>
    %44 = arith.maximumf %41, %43 : vector<128x128xf32>
    %45 = arith.addf %44, %6 : vector<128x128xf32>
    %cst_19 = arith.constant dense<0xFF800000> : vector<128xf32>
    %46 = vector.multi_reduction <maximumf>, %45, %cst_19 [1] : vector<128x128xf32> to vector<128xf32>
    %47 = vector.shape_cast %46 : vector<128xf32> to vector<128x1xf32>
    %48 = vector.broadcast %47 : vector<128x1xf32> to vector<128x128xf32>
    %49 = arith.subf %45, %48 : vector<128x128xf32>
    %50 = math.exp %49 : vector<128x128xf32>
    %cst_20 = arith.constant dense<0.000000e+00> : vector<128xf32>
    %51 = vector.multi_reduction <add>, %50, %cst_20 [1] : vector<128x128xf32> to vector<128xf32>
    %52 = vector.shape_cast %51 : vector<128xf32> to vector<128x1xf32>
    %53 = tpu.reciprocal %52 {approx = true} : vector<128x1xf32> -> vector<128x1xf32>
    %cst_21 = arith.constant 2.500000e-01 : f32
    %54 = vector.broadcast %cst_21 : f32 to vector<128x1xf32>
    %55 = arith.mulf %53, %54 : vector<128x1xf32>
    %56 = vector.broadcast %55 : vector<128x1xf32> to vector<128x128xf32>
    %57 = arith.mulf %50, %56 : vector<128x128xf32>
    %58 = vector.extract_strided_slice %10 {offsets = [0, 128], sizes = [128, 128], strides = [1, 1]} : vector<128x512xf32> to vector<128x128xf32>
    %cst_22 = arith.constant dense<0.000000e+00> : vector<128x128xf32>
    %59 = tpu.matmul %57, %58, %cst_22 {dimension_numbers = #tpu.dot_dimension_numbers<[1], [0], [0], [1], [0, 0, 1, 1], [], []>} : vector<128x128xf32>, vector<128x128xf32>, vector<128x128xf32> -> vector<128x128xf32>
    %60 = arith.addf %36, %59 : vector<128x128xf32>
    %61 = vector.extract_strided_slice %11 {offsets = [0, 6], sizes = [128, 1], strides = [1, 1]} : vector<128x8xf32> to vector<128x1xf32>
    %62 = vector.extract_strided_slice %13 {offsets = [2, 0], sizes = [1, 128], strides = [1, 1]} : vector<4x128xf32> to vector<1x128xf32>
    %63 = vector.broadcast %61 : vector<128x1xf32> to vector<128x128xf32>
    %64 = vector.broadcast %62 : vector<1x128xf32> to vector<128x128xf32>
    %65 = arith.addf %63, %64 : vector<128x128xf32>
    %cst_23 = arith.constant 2.000000e-01 : f32
    %66 = vector.broadcast %cst_23 : f32 to vector<128x128xf32>
    %67 = arith.mulf %66, %65 : vector<128x128xf32>
    %68 = arith.maximumf %65, %67 : vector<128x128xf32>
    %69 = arith.addf %68, %6 : vector<128x128xf32>
    %cst_24 = arith.constant dense<0xFF800000> : vector<128xf32>
    %70 = vector.multi_reduction <maximumf>, %69, %cst_24 [1] : vector<128x128xf32> to vector<128xf32>
    %71 = vector.shape_cast %70 : vector<128xf32> to vector<128x1xf32>
    %72 = vector.broadcast %71 : vector<128x1xf32> to vector<128x128xf32>
    %73 = arith.subf %69, %72 : vector<128x128xf32>
    %74 = math.exp %73 : vector<128x128xf32>
    %cst_25 = arith.constant dense<0.000000e+00> : vector<128xf32>
    %75 = vector.multi_reduction <add>, %74, %cst_25 [1] : vector<128x128xf32> to vector<128xf32>
    %76 = vector.shape_cast %75 : vector<128xf32> to vector<128x1xf32>
    %77 = tpu.reciprocal %76 {approx = true} : vector<128x1xf32> -> vector<128x1xf32>
    %cst_26 = arith.constant 2.500000e-01 : f32
    %78 = vector.broadcast %cst_26 : f32 to vector<128x1xf32>
    %79 = arith.mulf %77, %78 : vector<128x1xf32>
    %80 = vector.broadcast %79 : vector<128x1xf32> to vector<128x128xf32>
    %81 = arith.mulf %74, %80 : vector<128x128xf32>
    %82 = vector.extract_strided_slice %10 {offsets = [0, 256], sizes = [128, 128], strides = [1, 1]} : vector<128x512xf32> to vector<128x128xf32>
    %cst_27 = arith.constant dense<0.000000e+00> : vector<128x128xf32>
    %83 = tpu.matmul %81, %82, %cst_27 {dimension_numbers = #tpu.dot_dimension_numbers<[1], [0], [0], [1], [0, 0, 1, 1], [], []>} : vector<128x128xf32>, vector<128x128xf32>, vector<128x128xf32> -> vector<128x128xf32>
    %84 = arith.addf %60, %83 : vector<128x128xf32>
    %85 = vector.extract_strided_slice %11 {offsets = [0, 7], sizes = [128, 1], strides = [1, 1]} : vector<128x8xf32> to vector<128x1xf32>
    %86 = vector.extract_strided_slice %13 {offsets = [3, 0], sizes = [1, 128], strides = [1, 1]} : vector<4x128xf32> to vector<1x128xf32>
    %87 = vector.broadcast %85 : vector<128x1xf32> to vector<128x128xf32>
    %88 = vector.broadcast %86 : vector<1x128xf32> to vector<128x128xf32>
    %89 = arith.addf %87, %88 : vector<128x128xf32>
    %cst_28 = arith.constant 2.000000e-01 : f32
    %90 = vector.broadcast %cst_28 : f32 to vector<128x128xf32>
    %91 = arith.mulf %90, %89 : vector<128x128xf32>
    %92 = arith.maximumf %89, %91 : vector<128x128xf32>
    %93 = arith.addf %92, %6 : vector<128x128xf32>
    %cst_29 = arith.constant dense<0xFF800000> : vector<128xf32>
    %94 = vector.multi_reduction <maximumf>, %93, %cst_29 [1] : vector<128x128xf32> to vector<128xf32>
    %95 = vector.shape_cast %94 : vector<128xf32> to vector<128x1xf32>
    %96 = vector.broadcast %95 : vector<128x1xf32> to vector<128x128xf32>
    %97 = arith.subf %93, %96 : vector<128x128xf32>
    %98 = math.exp %97 : vector<128x128xf32>
    %cst_30 = arith.constant dense<0.000000e+00> : vector<128xf32>
    %99 = vector.multi_reduction <add>, %98, %cst_30 [1] : vector<128x128xf32> to vector<128xf32>
    %100 = vector.shape_cast %99 : vector<128xf32> to vector<128x1xf32>
    %101 = tpu.reciprocal %100 {approx = true} : vector<128x1xf32> -> vector<128x1xf32>
    %cst_31 = arith.constant 2.500000e-01 : f32
    %102 = vector.broadcast %cst_31 : f32 to vector<128x1xf32>
    %103 = arith.mulf %101, %102 : vector<128x1xf32>
    %104 = vector.broadcast %103 : vector<128x1xf32> to vector<128x128xf32>
    %105 = arith.mulf %98, %104 : vector<128x128xf32>
    %106 = vector.extract_strided_slice %10 {offsets = [0, 384], sizes = [128, 128], strides = [1, 1]} : vector<128x512xf32> to vector<128x128xf32>
    %cst_32 = arith.constant dense<0.000000e+00> : vector<128x128xf32>
    %107 = tpu.matmul %105, %106, %cst_32 {dimension_numbers = #tpu.dot_dimension_numbers<[1], [0], [0], [1], [0, 0, 1, 1], [], []>} : vector<128x128xf32>, vector<128x128xf32>, vector<128x128xf32> -> vector<128x128xf32>
    %108 = arith.addf %84, %107 : vector<128x128xf32>
    %109 = vector.broadcast %9 : vector<1x128xf32> to vector<128x128xf32>
    %110 = arith.addf %108, %109 : vector<128x128xf32>
    %c0_33 = arith.constant 0 : index
    %c0_34 = arith.constant 0 : index
    %111 = vector.load %arg6[%c0_33, %c0_34] : memref<128x512xf32, #tpu.memory_space<vmem>>, vector<128x512xf32>
    %c0_35 = arith.constant 0 : index
    %c0_36 = arith.constant 0 : index
    %112 = vector.load %arg7[%c0_35, %c0_36] : memref<128x8xf32, #tpu.memory_space<vmem>>, vector<128x8xf32>
    %c0_37 = arith.constant 0 : index
    %c0_38 = arith.constant 0 : index
    %113 = vector.load %arg8[%c0_37, %c0_38] : memref<1x128xf32, #tpu.memory_space<vmem>>, vector<1x128xf32>
    %cst_39 = arith.constant dense<0.000000e+00> : vector<128x512xf32>
    %114 = tpu.matmul %110, %111, %cst_39 {dimension_numbers = #tpu.dot_dimension_numbers<[1], [0], [0], [1], [0, 0, 1, 1], [], []>} : vector<128x128xf32>, vector<128x512xf32>, vector<128x512xf32> -> vector<128x512xf32>
    %cst_40 = arith.constant dense<0.000000e+00> : vector<128x8xf32>
    %115 = tpu.matmul %110, %112, %cst_40 {dimension_numbers = #tpu.dot_dimension_numbers<[1], [0], [0], [1], [0, 0, 1, 1], [], []>} : vector<128x128xf32>, vector<128x8xf32>, vector<128x8xf32> -> vector<128x8xf32>
    %116 = vector.extract_strided_slice %115 {offsets = [0, 0], sizes = [128, 4], strides = [1, 1]} : vector<128x8xf32> to vector<128x4xf32>
    %117 = tpu.transpose %116, [1, 0] : vector<128x4xf32> -> vector<4x128xf32>
    %118 = vector.extract_strided_slice %115 {offsets = [0, 4], sizes = [128, 1], strides = [1, 1]} : vector<128x8xf32> to vector<128x1xf32>
    %119 = vector.extract_strided_slice %117 {offsets = [0, 0], sizes = [1, 128], strides = [1, 1]} : vector<4x128xf32> to vector<1x128xf32>
    %120 = vector.broadcast %118 : vector<128x1xf32> to vector<128x128xf32>
    %121 = vector.broadcast %119 : vector<1x128xf32> to vector<128x128xf32>
    %122 = arith.addf %120, %121 : vector<128x128xf32>
    %cst_41 = arith.constant 2.000000e-01 : f32
    %123 = vector.broadcast %cst_41 : f32 to vector<128x128xf32>
    %124 = arith.mulf %123, %122 : vector<128x128xf32>
    %125 = arith.maximumf %122, %124 : vector<128x128xf32>
    %126 = arith.addf %125, %6 : vector<128x128xf32>
    %cst_42 = arith.constant dense<0xFF800000> : vector<128xf32>
    %127 = vector.multi_reduction <maximumf>, %126, %cst_42 [1] : vector<128x128xf32> to vector<128xf32>
    %128 = vector.shape_cast %127 : vector<128xf32> to vector<128x1xf32>
    %129 = vector.broadcast %128 : vector<128x1xf32> to vector<128x128xf32>
    %130 = arith.subf %126, %129 : vector<128x128xf32>
    %131 = math.exp %130 : vector<128x128xf32>
    %cst_43 = arith.constant dense<0.000000e+00> : vector<128xf32>
    %132 = vector.multi_reduction <add>, %131, %cst_43 [1] : vector<128x128xf32> to vector<128xf32>
    %133 = vector.shape_cast %132 : vector<128xf32> to vector<128x1xf32>
    %134 = tpu.reciprocal %133 {approx = true} : vector<128x1xf32> -> vector<128x1xf32>
    %cst_44 = arith.constant 2.500000e-01 : f32
    %135 = vector.broadcast %cst_44 : f32 to vector<128x1xf32>
    %136 = arith.mulf %134, %135 : vector<128x1xf32>
    %137 = vector.broadcast %136 : vector<128x1xf32> to vector<128x128xf32>
    %138 = arith.mulf %131, %137 : vector<128x128xf32>
    %139 = vector.extract_strided_slice %114 {offsets = [0, 0], sizes = [128, 128], strides = [1, 1]} : vector<128x512xf32> to vector<128x128xf32>
    %cst_45 = arith.constant dense<0.000000e+00> : vector<128x128xf32>
    %140 = tpu.matmul %138, %139, %cst_45 {dimension_numbers = #tpu.dot_dimension_numbers<[1], [0], [0], [1], [0, 0, 1, 1], [], []>} : vector<128x128xf32>, vector<128x128xf32>, vector<128x128xf32> -> vector<128x128xf32>
    %141 = vector.extract_strided_slice %115 {offsets = [0, 5], sizes = [128, 1], strides = [1, 1]} : vector<128x8xf32> to vector<128x1xf32>
    %142 = vector.extract_strided_slice %117 {offsets = [1, 0], sizes = [1, 128], strides = [1, 1]} : vector<4x128xf32> to vector<1x128xf32>
    %143 = vector.broadcast %141 : vector<128x1xf32> to vector<128x128xf32>
    %144 = vector.broadcast %142 : vector<1x128xf32> to vector<128x128xf32>
    %145 = arith.addf %143, %144 : vector<128x128xf32>
    %cst_46 = arith.constant 2.000000e-01 : f32
    %146 = vector.broadcast %cst_46 : f32 to vector<128x128xf32>
    %147 = arith.mulf %146, %145 : vector<128x128xf32>
    %148 = arith.maximumf %145, %147 : vector<128x128xf32>
    %149 = arith.addf %148, %6 : vector<128x128xf32>
    %cst_47 = arith.constant dense<0xFF800000> : vector<128xf32>
    %150 = vector.multi_reduction <maximumf>, %149, %cst_47 [1] : vector<128x128xf32> to vector<128xf32>
    %151 = vector.shape_cast %150 : vector<128xf32> to vector<128x1xf32>
    %152 = vector.broadcast %151 : vector<128x1xf32> to vector<128x128xf32>
    %153 = arith.subf %149, %152 : vector<128x128xf32>
    %154 = math.exp %153 : vector<128x128xf32>
    %cst_48 = arith.constant dense<0.000000e+00> : vector<128xf32>
    %155 = vector.multi_reduction <add>, %154, %cst_48 [1] : vector<128x128xf32> to vector<128xf32>
    %156 = vector.shape_cast %155 : vector<128xf32> to vector<128x1xf32>
    %157 = tpu.reciprocal %156 {approx = true} : vector<128x1xf32> -> vector<128x1xf32>
    %cst_49 = arith.constant 2.500000e-01 : f32
    %158 = vector.broadcast %cst_49 : f32 to vector<128x1xf32>
    %159 = arith.mulf %157, %158 : vector<128x1xf32>
    %160 = vector.broadcast %159 : vector<128x1xf32> to vector<128x128xf32>
    %161 = arith.mulf %154, %160 : vector<128x128xf32>
    %162 = vector.extract_strided_slice %114 {offsets = [0, 128], sizes = [128, 128], strides = [1, 1]} : vector<128x512xf32> to vector<128x128xf32>
    %cst_50 = arith.constant dense<0.000000e+00> : vector<128x128xf32>
    %163 = tpu.matmul %161, %162, %cst_50 {dimension_numbers = #tpu.dot_dimension_numbers<[1], [0], [0], [1], [0, 0, 1, 1], [], []>} : vector<128x128xf32>, vector<128x128xf32>, vector<128x128xf32> -> vector<128x128xf32>
    %164 = arith.addf %140, %163 : vector<128x128xf32>
    %165 = vector.extract_strided_slice %115 {offsets = [0, 6], sizes = [128, 1], strides = [1, 1]} : vector<128x8xf32> to vector<128x1xf32>
    %166 = vector.extract_strided_slice %117 {offsets = [2, 0], sizes = [1, 128], strides = [1, 1]} : vector<4x128xf32> to vector<1x128xf32>
    %167 = vector.broadcast %165 : vector<128x1xf32> to vector<128x128xf32>
    %168 = vector.broadcast %166 : vector<1x128xf32> to vector<128x128xf32>
    %169 = arith.addf %167, %168 : vector<128x128xf32>
    %cst_51 = arith.constant 2.000000e-01 : f32
    %170 = vector.broadcast %cst_51 : f32 to vector<128x128xf32>
    %171 = arith.mulf %170, %169 : vector<128x128xf32>
    %172 = arith.maximumf %169, %171 : vector<128x128xf32>
    %173 = arith.addf %172, %6 : vector<128x128xf32>
    %cst_52 = arith.constant dense<0xFF800000> : vector<128xf32>
    %174 = vector.multi_reduction <maximumf>, %173, %cst_52 [1] : vector<128x128xf32> to vector<128xf32>
    %175 = vector.shape_cast %174 : vector<128xf32> to vector<128x1xf32>
    %176 = vector.broadcast %175 : vector<128x1xf32> to vector<128x128xf32>
    %177 = arith.subf %173, %176 : vector<128x128xf32>
    %178 = math.exp %177 : vector<128x128xf32>
    %cst_53 = arith.constant dense<0.000000e+00> : vector<128xf32>
    %179 = vector.multi_reduction <add>, %178, %cst_53 [1] : vector<128x128xf32> to vector<128xf32>
    %180 = vector.shape_cast %179 : vector<128xf32> to vector<128x1xf32>
    %181 = tpu.reciprocal %180 {approx = true} : vector<128x1xf32> -> vector<128x1xf32>
    %cst_54 = arith.constant 2.500000e-01 : f32
    %182 = vector.broadcast %cst_54 : f32 to vector<128x1xf32>
    %183 = arith.mulf %181, %182 : vector<128x1xf32>
    %184 = vector.broadcast %183 : vector<128x1xf32> to vector<128x128xf32>
    %185 = arith.mulf %178, %184 : vector<128x128xf32>
    %186 = vector.extract_strided_slice %114 {offsets = [0, 256], sizes = [128, 128], strides = [1, 1]} : vector<128x512xf32> to vector<128x128xf32>
    %cst_55 = arith.constant dense<0.000000e+00> : vector<128x128xf32>
    %187 = tpu.matmul %185, %186, %cst_55 {dimension_numbers = #tpu.dot_dimension_numbers<[1], [0], [0], [1], [0, 0, 1, 1], [], []>} : vector<128x128xf32>, vector<128x128xf32>, vector<128x128xf32> -> vector<128x128xf32>
    %188 = arith.addf %164, %187 : vector<128x128xf32>
    %189 = vector.extract_strided_slice %115 {offsets = [0, 7], sizes = [128, 1], strides = [1, 1]} : vector<128x8xf32> to vector<128x1xf32>
    %190 = vector.extract_strided_slice %117 {offsets = [3, 0], sizes = [1, 128], strides = [1, 1]} : vector<4x128xf32> to vector<1x128xf32>
    %191 = vector.broadcast %189 : vector<128x1xf32> to vector<128x128xf32>
    %192 = vector.broadcast %190 : vector<1x128xf32> to vector<128x128xf32>
    %193 = arith.addf %191, %192 : vector<128x128xf32>
    %cst_56 = arith.constant 2.000000e-01 : f32
    %194 = vector.broadcast %cst_56 : f32 to vector<128x128xf32>
    %195 = arith.mulf %194, %193 : vector<128x128xf32>
    %196 = arith.maximumf %193, %195 : vector<128x128xf32>
    %197 = arith.addf %196, %6 : vector<128x128xf32>
    %cst_57 = arith.constant dense<0xFF800000> : vector<128xf32>
    %198 = vector.multi_reduction <maximumf>, %197, %cst_57 [1] : vector<128x128xf32> to vector<128xf32>
    %199 = vector.shape_cast %198 : vector<128xf32> to vector<128x1xf32>
    %200 = vector.broadcast %199 : vector<128x1xf32> to vector<128x128xf32>
    %201 = arith.subf %197, %200 : vector<128x128xf32>
    %202 = math.exp %201 : vector<128x128xf32>
    %cst_58 = arith.constant dense<0.000000e+00> : vector<128xf32>
    %203 = vector.multi_reduction <add>, %202, %cst_58 [1] : vector<128x128xf32> to vector<128xf32>
    %204 = vector.shape_cast %203 : vector<128xf32> to vector<128x1xf32>
    %205 = tpu.reciprocal %204 {approx = true} : vector<128x1xf32> -> vector<128x1xf32>
    %cst_59 = arith.constant 2.500000e-01 : f32
    %206 = vector.broadcast %cst_59 : f32 to vector<128x1xf32>
    %207 = arith.mulf %205, %206 : vector<128x1xf32>
    %208 = vector.broadcast %207 : vector<128x1xf32> to vector<128x128xf32>
    %209 = arith.mulf %202, %208 : vector<128x128xf32>
    %210 = vector.extract_strided_slice %114 {offsets = [0, 384], sizes = [128, 128], strides = [1, 1]} : vector<128x512xf32> to vector<128x128xf32>
    %cst_60 = arith.constant dense<0.000000e+00> : vector<128x128xf32>
    %211 = tpu.matmul %209, %210, %cst_60 {dimension_numbers = #tpu.dot_dimension_numbers<[1], [0], [0], [1], [0, 0, 1, 1], [], []>} : vector<128x128xf32>, vector<128x128xf32>, vector<128x128xf32> -> vector<128x128xf32>
    %212 = arith.addf %188, %211 : vector<128x128xf32>
    %213 = vector.broadcast %113 : vector<1x128xf32> to vector<128x128xf32>
    %214 = arith.addf %212, %213 : vector<128x128xf32>
    %c0_61 = arith.constant 0 : index
    %c0_62 = arith.constant 0 : index
    %215 = vector.load %arg2[%c0_61, %c0_62] : memref<2x128xf32, #tpu.memory_space<vmem>>, vector<2x128xf32>
    %cst_63 = arith.constant dense<0.000000e+00> : vector<2x128xf32>
    %216 = tpu.matmul %215, %214, %cst_63 {dimension_numbers = #tpu.dot_dimension_numbers<[1], [0], [0], [1], [0, 0, 1, 1], [], []>} : vector<2x128xf32>, vector<128x128xf32>, vector<2x128xf32> -> vector<2x128xf32>
    %c0_64 = arith.constant 0 : index
    %c0_65 = arith.constant 0 : index
    %217 = vector.load %arg9[%c0_64, %c0_65] : memref<128x128xf32, #tpu.memory_space<vmem>>, vector<128x128xf32>
    %cst_66 = arith.constant dense<0.000000e+00> : vector<2x128xf32>
    %218 = tpu.matmul %216, %217, %cst_66 {dimension_numbers = #tpu.dot_dimension_numbers<[1], [0], [0], [1], [0, 0, 1, 1], [], []>} : vector<2x128xf32>, vector<128x128xf32>, vector<2x128xf32> -> vector<2x128xf32>
    %c0_67 = arith.constant 0 : index
    %c0_68 = arith.constant 0 : index
    %219 = vector.load %arg10[%c0_67, %c0_68] : memref<1x128xf32, #tpu.memory_space<vmem>>, vector<1x128xf32>
    %220 = vector.broadcast %219 : vector<1x128xf32> to vector<2x128xf32>
    %221 = arith.addf %218, %220 : vector<2x128xf32>
    %cst_69 = arith.constant 0.000000e+00 : f32
    %222 = vector.broadcast %cst_69 : f32 to vector<2x128xf32>
    %223 = arith.maximumf %221, %222 : vector<2x128xf32>
    %c0_70 = arith.constant 0 : index
    %c0_71 = arith.constant 0 : index
    %224 = vector.load %arg11[%c0_70, %c0_71] : memref<128x128xf32, #tpu.memory_space<vmem>>, vector<128x128xf32>
    %cst_72 = arith.constant dense<0.000000e+00> : vector<2x128xf32>
    %225 = tpu.matmul %223, %224, %cst_72 {dimension_numbers = #tpu.dot_dimension_numbers<[1], [0], [0], [1], [0, 0, 1, 1], [], []>} : vector<2x128xf32>, vector<128x128xf32>, vector<2x128xf32> -> vector<2x128xf32>
    %c0_73 = arith.constant 0 : index
    %c0_74 = arith.constant 0 : index
    %226 = vector.load %arg12[%c0_73, %c0_74] : memref<1x128xf32, #tpu.memory_space<vmem>>, vector<1x128xf32>
    %227 = vector.broadcast %226 : vector<1x128xf32> to vector<2x128xf32>
    %228 = arith.addf %225, %227 : vector<2x128xf32>
    %c0_75 = arith.constant 0 : index
    %c0_76 = arith.constant 0 : index
    %229 = vector.load %arg13[%c0_75, %c0_76] : memref<2x128xf32, #tpu.memory_space<vmem>>, vector<2x128xf32>
    tpu.vector_store %arg13[%c0_75, %c0_76], %228 {strides = array<i32>} : memref<2x128xf32, #tpu.memory_space<vmem>>, vector<2x128xf32>,
    return
  }
}

</mosaic_0001>

<llo_original>
// kernel: net_forward.1
$region0: #{net_forward.1}
  #allocation0 [shape = 'u32[]', space=smem, size = 0x4, offset = 0x4, fixed_abs, tag = 'smem constant byte address 0x4 - core index']
  #allocation1 [shape = 'u32[72,128]{1,0:T(1,128)}', space=vmem, size = 0x9000, scoped, tag = 'internal scratch']
  %s0 = inlined_call_operand.vmem [shape: f32[128,128], index: 0, kind: input, shape index: {}]
  %s1 = inlined_call_operand.vmem [shape: f32[128,128], index: 1, kind: input, shape index: {}]
  %s2 = inlined_call_operand.vmem [shape: f32[2,128], index: 2, kind: input, shape index: {}]
  %s3 = inlined_call_operand.vmem [shape: f32[128,512], index: 3, kind: input, shape index: {}]
  %s4 = inlined_call_operand.vmem [shape: f32[128,8], index: 4, kind: input, shape index: {}]
  %s5 = inlined_call_operand.vmem [shape: f32[1,128], index: 5, kind: input, shape index: {}]
  %s6 = inlined_call_operand.vmem [shape: f32[128,512], index: 6, kind: input, shape index: {}]
  %s7 = inlined_call_operand.vmem [shape: f32[128,8], index: 7, kind: input, shape index: {}]
  %s8 = inlined_call_operand.vmem [shape: f32[1,128], index: 8, kind: input, shape index: {}]
  %s9 = inlined_call_operand.vmem [shape: f32[128,128], index: 9, kind: input, shape index: {}]
  %s10 = inlined_call_operand.vmem [shape: f32[1,128], index: 10, kind: input, shape index: {}]
  %s11 = inlined_call_operand.vmem [shape: f32[128,128], index: 11, kind: input, shape index: {}]
  %s12 = inlined_call_operand.vmem [shape: f32[1,128], index: 12, kind: input, shape index: {}]
  %s13 = inlined_call_operand.hbm [shape: f32[2,128], index: 13, kind: output, shape index: {}]
  %s14 = sld [smem:[#allocation0]]
  $region62: #{net_forward.1} parent=0
    _
  %s16 = ssub.s32 1, %s14
  %s17 = scalar_select 0, %s16, %s14
  $region1: #{net_forward.1} parent=0
    #allocation2 [shape = 'u8[1024]{0}', space=vmem, size = 0x400, scoped, tag = 'output window, operand 0, single buffered']
    #allocation3 [shape = 's32[1]{0}', space=sflag, size = 0x4, scoped, tag = 'scoped memory for net_forward.1']
    %18 = vsyncpa [#allocation3], 0
    // Predicated region
    $region2: #{net_forward.1} parent=1 // pred_check
      _
    $region3: #{net_forward.1} parent=1 // pred_check_branch
      %20 = sbr.rel (0) target = $region5
    $region4: #{net_forward.1} parent=1 // pred_region
      _
    $region5: #{net_forward.1} parent=1 // pred_fallthru
      _
    // Predicated region
    $region6: #{net_forward.1} parent=1 // pred_check
      _
    $region7: #{net_forward.1} parent=1 // pred_check_branch
      %22 = sbr.rel (0) target = $region9
    $region8: #{net_forward.1} parent=1 // pred_region
      _
    $region9: #{net_forward.1} parent=1 // pred_fallthru
      _
    // Predicated region
    $region10: #{net_forward.1} parent=1 // pred_check
      _
    $region11: #{net_forward.1} parent=1 // pred_check_branch
      %24 = sbr.rel (0) target = $region13
    $region12: #{net_forward.1} parent=1 // pred_region
      _
    $region13: #{net_forward.1} parent=1 // pred_fallthru
      _
    // Predicated region
    $region14: #{net_forward.1} parent=1 // pred_check
      _
    $region15: #{net_forward.1} parent=1 // pred_check_branch
      %26 = sbr.rel (0) target = $region17
    $region16: #{net_forward.1} parent=1 // pred_region
      _
    $region17: #{net_forward.1} parent=1 // pred_fallthru
      _
    // Predicated region
    $region18: #{net_forward.1} parent=1 // pred_check
      _
    $region19: #{net_forward.1} parent=1 // pred_check_branch
      %28 = sbr.rel (0) target = $region21
    $region20: #{net_forward.1} parent=1 // pred_region
      _
    $region21: #{net_forward.1} parent=1 // pred_fallthru
      _
    // Predicated region
    $region22: #{net_forward.1} parent=1 // pred_check
      _
    $region23: #{net_forward.1} parent=1 // pred_check_branch
      %30 = sbr.rel (0) target = $region25
    $region24: #{net_forward.1} parent=1 // pred_region
      _
    $region25: #{net_forward.1} parent=1 // pred_fallthru
      _
    // Predicated region
    $region26: #{net_forward.1} parent=1 // pred_check
      _
    $region27: #{net_forward.1} parent=1 // pred_check_branch
      %32 = sbr.rel (0) target = $region29
    $region28: #{net_forward.1} parent=1 // pred_region
      _
    $region29: #{net_forward.1} parent=1 // pred_fallthru
      _
    // Predicated region
    $region30: #{net_forward.1} parent=1 // pred_check
      _
    $region31: #{net_forward.1} parent=1 // pred_check_branch
      %34 = sbr.rel (0) target = $region33
    $region32: #{net_forward.1} parent=1 // pred_region
      _
    $region33: #{net_forward.1} parent=1 // pred_fallthru
      _
    // Predicated region
    $region34: #{net_forward.1} parent=1 // pred_check
      _
    $region35: #{net_forward.1} parent=1 // pred_check_branch
      %36 = sbr.rel (0) target = $region37
    $region36: #{net_forward.1} parent=1 // pred_region
      _
    $region37: #{net_forward.1} parent=1 // pred_fallthru
      _
    // Predicated region
    $region38: #{net_forward.1} parent=1 // pred_check
      _
    $region39: #{net_forward.1} parent=1 // pred_check_branch
      %38 = sbr.rel (0) target = $region41
    $region40: #{net_forward.1} parent=1 // pred_region
      _
    $region41: #{net_forward.1} parent=1 // pred_fallthru
      _
    // Predicated region
    $region42: #{net_forward.1} parent=1 // pred_check
      _
    $region43: #{net_forward.1} parent=1 // pred_check_branch
      %40 = sbr.rel (0) target = $region45
    $region44: #{net_forward.1} parent=1 // pred_region
      _
    $region45: #{net_forward.1} parent=1 // pred_fallthru
      _
    // Predicated region
    $region46: #{net_forward.1} parent=1 // pred_check
      _
    $region47: #{net_forward.1} parent=1 // pred_check_branch
      %42 = sbr.rel (0) target = $region49
    $region48: #{net_forward.1} parent=1 // pred_region
      _
    $region49: #{net_forward.1} parent=1 // pred_fallthru
      _
    // Predicated region
    $region50: #{net_forward.1} parent=1 // pred_check
      _
    $region51: #{net_forward.1} parent=1 // pred_check_branch
      %44 = sbr.rel (0) target = $region53
    $region52: #{net_forward.1} parent=1 // pred_region
      _
    $region53: #{net_forward.1} parent=1 // pred_fallthru
      _
    %v45 = vld [vmem:[%s0] sm:$0xff]
    %v46 = vld [vmem:[%s0 + $0x8] sm:$0xff]
    %v47 = vld [vmem:[%s0 + $0x10] sm:$0xff]
    %v48 = vld [vmem:[%s0 + $0x18] sm:$0xff]
    %v49 = vld [vmem:[%s0 + $0x20] sm:$0xff]
    %v50 = vld [vmem:[%s0 + $0x28] sm:$0xff]
    %v51 = vld [vmem:[%s0 + $0x30] sm:$0xff]
    %v52 = vld [vmem:[%s0 + $0x38] sm:$0xff]
    %v53 = vld [vmem:[%s0 + $0x40] sm:$0xff]
    %v54 = vld [vmem:[%s0 + $0x48] sm:$0xff]
    %v55 = vld [vmem:[%s0 + $0x50] sm:$0xff]
    %v56 = vld [vmem:[%s0 + $0x58] sm:$0xff]
    %v57 = vld [vmem:[%s0 + $0x60] sm:$0xff]
    %v58 = vld [vmem:[%s0 + $0x68] sm:$0xff]
    %v59 = vld [vmem:[%s0 + $0x70] sm:$0xff]
    %v60 = vld [vmem:[%s0 + $0x78] sm:$0xff]
    %v61 = vld [vmem:[%s1] sm:$0xff]
    %v62 = vld [vmem:[%s1 + $0x8] sm:$0xff]
    %v63 = vld [vmem:[%s1 + $0x10] sm:$0xff]
    %v64 = vld [vmem:[%s1 + $0x18] sm:$0xff]
    %v65 = vld [vmem:[%s1 + $0x20] sm:$0xff]
    %v66 = vld [vmem:[%s1 + $0x28] sm:$0xff]
    %v67 = vld [vmem:[%s1 + $0x30] sm:$0xff]
    %v68 = vld [vmem:[%s1 + $0x38] sm:$0xff]
    %v69 = vld [vmem:[%s1 + $0x40] sm:$0xff]
    %v70 = vld [vmem:[%s1 + $0x48] sm:$0xff]
    %v71 = vld [vmem:[%s1 + $0x50] sm:$0xff]
    %v72 = vld [vmem:[%s1 + $0x58] sm:$0xff]
    %v73 = vld [vmem:[%s1 + $0x60] sm:$0xff]
    %v74 = vld [vmem:[%s1 + $0x68] sm:$0xff]
    %v75 = vld [vmem:[%s1 + $0x70] sm:$0xff]
    %v76 = vld [vmem:[%s1 + $0x78] sm:$0xff]
    %vm77 = vcmp.gt.f32.partialorder %v61, 0.0
    %vm78 = vcmp.gt.f32.partialorder %v62, 0.0
    %vm79 = vcmp.gt.f32.partialorder %v63, 0.0
    %vm80 = vcmp.gt.f32.partialorder %v64, 0.0
    %vm81 = vcmp.gt.f32.partialorder %v65, 0.0
    %vm82 = vcmp.gt.f32.partialorder %v66, 0.0
    %vm83 = vcmp.gt.f32.partialorder %v67, 0.0
    %vm84 = vcmp.gt.f32.partialorder %v68, 0.0
    %vm85 = vcmp.gt.f32.partialorder %v69, 0.0
    %vm86 = vcmp.gt.f32.partialorder %v70, 0.0
    %vm87 = vcmp.gt.f32.partialorder %v71, 0.0
    %vm88 = vcmp.gt.f32.partialorder %v72, 0.0
    %vm89 = vcmp.gt.f32.partialorder %v73, 0.0
    %vm90 = vcmp.gt.f32.partialorder %v74, 0.0
    %vm91 = vcmp.gt.f32.partialorder %v75, 0.0
    %vm92 = vcmp.gt.f32.partialorder %v76, 0.0
    %v93 = vsel %vm77, 0.0, -1e+30
    %v94 = vsel %vm78, 0.0, -1e+30
    %v95 = vsel %vm79, 0.0, -1e+30
    %v96 = vsel %vm80, 0.0, -1e+30
    %v97 = vsel %vm81, 0.0, -1e+30
    %v98 = vsel %vm82, 0.0, -1e+30
    %v99 = vsel %vm83, 0.0, -1e+30
    %v100 = vsel %vm84, 0.0, -1e+30
    %v101 = vsel %vm85, 0.0, -1e+30
    %v102 = vsel %vm86, 0.0, -1e+30
    %v103 = vsel %vm87, 0.0, -1e+30
    %v104 = vsel %vm88, 0.0, -1e+30
    %v105 = vsel %vm89, 0.0, -1e+30
    %v106 = vsel %vm90, 0.0, -1e+30
    %v107 = vsel %vm91, 0.0, -1e+30
    %v108 = vsel %vm92, 0.0, -1e+30
    %v109 = vld [vmem:[%s3] sm:$0xff]
    %v110 = vld [vmem:[%s3 + $0x8] sm:$0xff]
    %v111 = vld [vmem:[%s3 + $0x10] sm:$0xff]
    %v112 = vld [vmem:[%s3 + $0x18] sm:$0xff]
    %v113 = vld [vmem:[%s3 + $0x20] sm:$0xff]
    %v114 = vld [vmem:[%s3 + $0x28] sm:$0xff]
    %v115 = vld [vmem:[%s3 + $0x30] sm:$0xff]
    %v116 = vld [vmem:[%s3 + $0x38] sm:$0xff]
    %v117 = vld [vmem:[%s3 + $0x40] sm:$0xff]
    %v118 = vld [vmem:[%s3 + $0x48] sm:$0xff]
    %v119 = vld [vmem:[%s3 + $0x50] sm:$0xff]
    %v120 = vld [vmem:[%s3 + $0x58] sm:$0xff]
    %v121 = vld [vmem:[%s3 + $0x60] sm:$0xff]
    %v122 = vld [vmem:[%s3 + $0x68] sm:$0xff]
    %v123 = vld [vmem:[%s3 + $0x70] sm:$0xff]
    %v124 = vld [vmem:[%s3 + $0x78] sm:$0xff]
    %v125 = vld [vmem:[%s3 + $0x80] sm:$0xff]
    %v126 = vld [vmem:[%s3 + $0x88] sm:$0xff]
    %v127 = vld [vmem:[%s3 + $0x90] sm:$0xff]
    %v128 = vld [vmem:[%s3 + $0x98] sm:$0xff]
    %v129 = vld [vmem:[%s3 + $0xa0] sm:$0xff]
    %v130 = vld [vmem:[%s3 + $0xa8] sm:$0xff]
    %v131 = vld [vmem:[%s3 + $0xb0] sm:$0xff]
    %v132 = vld [vmem:[%s3 + $0xb8] sm:$0xff]
    %v133 = vld [vmem:[%s3 + $0xc0] sm:$0xff]
    %v134 = vld [vmem:[%s3 + $0xc8] sm:$0xff]
    %v135 = vld [vmem:[%s3 + $0xd0] sm:$0xff]
    %v136 = vld [vmem:[%s3 + $0xd8] sm:$0xff]
    %v137 = vld [vmem:[%s3 + $0xe0] sm:$0xff]
    %v138 = vld [vmem:[%s3 + $0xe8] sm:$0xff]
    %v139 = vld [vmem:[%s3 + $0xf0] sm:$0xff]
    %v140 = vld [vmem:[%s3 + $0xf8] sm:$0xff]
    %v141 = vld [vmem:[%s3 + $0x100] sm:$0xff]
    %v142 = vld [vmem:[%s3 + $0x108] sm:$0xff]
    %v143 = vld [vmem:[%s3 + $0x110] sm:$0xff]
    %v144 = vld [vmem:[%s3 + $0x118] sm:$0xff]
    %v145 = vld [vmem:[%s3 + $0x120] sm:$0xff]
    %v146 = vld [vmem:[%s3 + $0x128] sm:$0xff]
    %v147 = vld [vmem:[%s3 + $0x130] sm:$0xff]
    %v148 = vld [vmem:[%s3 + $0x138] sm:$0xff]
    %v149 = vld [vmem:[%s3 + $0x140] sm:$0xff]
    %v150 = vld [vmem:[%s3 + $0x148] sm:$0xff]
    %v151 = vld [vmem:[%s3 + $0x150] sm:$0xff]
    %v152 = vld [vmem:[%s3 + $0x158] sm:$0xff]
    %v153 = vld [vmem:[%s3 + $0x160] sm:$0xff]
    %v154 = vld [vmem:[%s3 + $0x168] sm:$0xff]
    %v155 = vld [vmem:[%s3 + $0x170] sm:$0xff]
    %v156 = vld [vmem:[%s3 + $0x178] sm:$0xff]
    %v157 = vld [vmem:[%s3 + $0x180] sm:$0xff]
    %v158 = vld [vmem:[%s3 + $0x188] sm:$0xff]
    %v159 = vld [vmem:[%s3 + $0x190] sm:$0xff]
    %v160 = vld [vmem:[%s3 + $0x198] sm:$0xff]
    %v161 = vld [vmem:[%s3 + $0x1a0] sm:$0xff]
    %v162 = vld [vmem:[%s3 + $0x1a8] sm:$0xff]
    %v163 = vld [vmem:[%s3 + $0x1b0] sm:$0xff]
    %v164 = vld [vmem:[%s3 + $0x1b8] sm:$0xff]
    %v165 = vld [vmem:[%s3 + $0x1c0] sm:$0xff]
    %v166 = vld [vmem:[%s3 + $0x1c8] sm:$0xff]
    %v167 = vld [vmem:[%s3 + $0x1d0] sm:$0xff]
    %v168 = vld [vmem:[%s3 + $0x1d8] sm:$0xff]
    %v169 = vld [vmem:[%s3 + $0x1e0] sm:$0xff]
    %v170 = vld [vmem:[%s3 + $0x1e8] sm:$0xff]
    %v171 = vld [vmem:[%s3 + $0x1f0] sm:$0xff]
    %v172 = vld [vmem:[%s3 + $0x1f8] sm:$0xff]
    %v173 = vld [vmem:[%s4] sm:$0xff]
    %v174 = vld [vmem:[%s4 + $0x8] sm:$0xff]
    %v175 = vld [vmem:[%s4 + $0x10] sm:$0xff]
    %v176 = vld [vmem:[%s4 + $0x18] sm:$0xff]
    %v177 = vld [vmem:[%s4 + $0x20] sm:$0xff]
    %v178 = vld [vmem:[%s4 + $0x28] sm:$0xff]
    %v179 = vld [vmem:[%s4 + $0x30] sm:$0xff]
    %v180 = vld [vmem:[%s4 + $0x38] sm:$0xff]
    %v181 = vld [vmem:[%s4 + $0x40] sm:$0xff]
    %v182 = vld [vmem:[%s4 + $0x48] sm:$0xff]
    %v183 = vld [vmem:[%s4 + $0x50] sm:$0xff]
    %v184 = vld [vmem:[%s4 + $0x58] sm:$0xff]
    %v185 = vld [vmem:[%s4 + $0x60] sm:$0xff]
    %v186 = vld [vmem:[%s4 + $0x68] sm:$0xff]
    %v187 = vld [vmem:[%s4 + $0x70] sm:$0xff]
    %v188 = vld [vmem:[%s4 + $0x78] sm:$0xff]
    %v189 = vld [vmem:[%s5] sm:$0x1]
    %190 = vmatpush.msra.mxu0 %v169
    %191 = vmatpush.msra.mxu0 %v165
    %192 = vmatpush.msra.mxu0 %v161
    %193 = vmatpush.msra.mxu0 %v157
    %194 = vmatpush.msra.mxu0 %v153
    %195 = vmatpush.msra.mxu0 %v149
    %196 = vmatpush.msra.mxu0 %v145
    %197 = vmatpush.msra.mxu0 %v141
    %198 = vmatpush.msra.mxu0 %v137
    %199 = vmatpush.msra.mxu0 %v133
    %200 = vmatpush.msra.mxu0 %v129
    %201 = vmatpush.msra.mxu0 %v125
    %202 = vmatpush.msra.mxu0 %v121
    %203 = vmatpush.msra.mxu0 %v117
    %204 = vmatpush.msra.mxu0 %v113
    %205 = vmatpush.msra.mxu0 %v109
    %206 = vmatmul.f32.gmra.mxu0 %v45
    %v207 = vpop.f32.mrf.mxu0
    %v208 = vadd.f32 0.0, %v207
    %209 = vmatmul.f32.gmra.mxu0 %v46
    %v210 = vpop.f32.mrf.mxu0
    %v211 = vadd.f32 0.0, %v210
    %212 = vmatmul.f32.gmra.mxu0 %v47
    %v213 = vpop.f32.mrf.mxu0
    %v214 = vadd.f32 0.0, %v213
    %215 = vmatmul.f32.gmra.mxu0 %v48
    %v216 = vpop.f32.mrf.mxu0
    %v217 = vadd.f32 0.0, %v216
    %218 = vmatmul.f32.gmra.mxu0 %v49
    %v219 = vpop.f32.mrf.mxu0
    %v220 = vadd.f32 0.0, %v219
    %221 = vmatmul.f32.gmra.mxu0 %v50
    %v222 = vpop.f32.mrf.mxu0
    %v223 = vadd.f32 0.0, %v222
    %224 = vmatmul.f32.gmra.mxu0 %v51
    %v225 = vpop.f32.mrf.mxu0
    %v226 = vadd.f32 0.0, %v225
    %227 = vmatmul.f32.gmra.mxu0 %v52
    %v228 = vpop.f32.mrf.mxu0
    %v229 = vadd.f32 0.0, %v228
    %230 = vmatmul.f32.gmra.mxu0 %v53
    %v231 = vpop.f32.mrf.mxu0
    %v232 = vadd.f32 0.0, %v231
    %233 = vmatmul.f32.gmra.mxu0 %v54
    %v234 = vpop.f32.mrf.mxu0
    %v235 = vadd.f32 0.0, %v234
    %236 = vmatmul.f32.gmra.mxu0 %v55
    %v237 = vpop.f32.mrf.mxu0
    %v238 = vadd.f32 0.0, %v237
    %239 = vmatmul.f32.gmra.mxu0 %v56
    %v240 = vpop.f32.mrf.mxu0
    %v241 = vadd.f32 0.0, %v240
    %242 = vmatmul.f32.gmra.mxu0 %v57
    %v243 = vpop.f32.mrf.mxu0
    %v244 = vadd.f32 0.0, %v243
    %245 = vmatmul.f32.gmra.mxu0 %v58
    %v246 = vpop.f32.mrf.mxu0
    %v247 = vadd.f32 0.0, %v246
    %248 = vmatmul.f32.gmra.mxu0 %v59
    %v249 = vpop.f32.mrf.mxu0
    %v250 = vadd.f32 0.0, %v249
    %251 = vmatmul.f32.gmra.mxu0 %v60
    %v252 = vpop.f32.mrf.mxu0
    %v253 = vadd.f32 0.0, %v252
    %254 = vdwg.mxu0
    %255 = vmatpush.msra.mxu0 %v170
    %256 = vmatpush.msra.mxu0 %v166
    %257 = vmatpush.msra.mxu0 %v162
    %258 = vmatpush.msra.mxu0 %v158
    %259 = vmatpush.msra.mxu0 %v154
    %260 = vmatpush.msra.mxu0 %v150
    %261 = vmatpush.msra.mxu0 %v146
    %262 = vmatpush.msra.mxu0 %v142
    %263 = vmatpush.msra.mxu0 %v138
    %264 = vmatpush.msra.mxu0 %v134
    %265 = vmatpush.msra.mxu0 %v130
    %266 = vmatpush.msra.mxu0 %v126
    %267 = vmatpush.msra.mxu0 %v122
    %268 = vmatpush.msra.mxu0 %v118
    %269 = vmatpush.msra.mxu0 %v114
    %270 = vmatpush.msra.mxu0 %v110
    %271 = vmatmul.f32.gmra.mxu0 %v45
    %v272 = vpop.f32.mrf.mxu0
    %v273 = vadd.f32 0.0, %v272
    %274 = vmatmul.f32.gmra.mxu0 %v46
    %v275 = vpop.f32.mrf.mxu0
    %v276 = vadd.f32 0.0, %v275
    %277 = vmatmul.f32.gmra.mxu0 %v47
    %v278 = vpop.f32.mrf.mxu0
    %v279 = vadd.f32 0.0, %v278
    %280 = vmatmul.f32.gmra.mxu0 %v48
    %v281 = vpop.f32.mrf.mxu0
    %v282 = vadd.f32 0.0, %v281
    %283 = vmatmul.f32.gmra.mxu0 %v49
    %v284 = vpop.f32.mrf.mxu0
    %v285 = vadd.f32 0.0, %v284
    %286 = vmatmul.f32.gmra.mxu0 %v50
    %v287 = vpop.f32.mrf.mxu0
    %v288 = vadd.f32 0.0, %v287
    %289 = vmatmul.f32.gmra.mxu0 %v51
    %v290 = vpop.f32.mrf.mxu0
    %v291 = vadd.f32 0.0, %v290
    %292 = vmatmul.f32.gmra.mxu0 %v52
    %v293 = vpop.f32.mrf.mxu0
    %v294 = vadd.f32 0.0, %v293
    %295 = vmatmul.f32.gmra.mxu0 %v53
    %v296 = vpop.f32.mrf.mxu0
    %v297 = vadd.f32 0.0, %v296
    %298 = vmatmul.f32.gmra.mxu0 %v54
    %v299 = vpop.f32.mrf.mxu0
    %v300 = vadd.f32 0.0, %v299
    %301 = vmatmul.f32.gmra.mxu0 %v55
    %v302 = vpop.f32.mrf.mxu0
    %v303 = vadd.f32 0.0, %v302
    %304 = vmatmul.f32.gmra.mxu0 %v56
    %v305 = vpop.f32.mrf.mxu0
    %v306 = vadd.f32 0.0, %v305
    %307 = vmatmul.f32.gmra.mxu0 %v57
    %v308 = vpop.f32.mrf.mxu0
    %v309 = vadd.f32 0.0, %v308
    %310 = vmatmul.f32.gmra.mxu0 %v58
    %v311 = vpop.f32.mrf.mxu0
    %v312 = vadd.f32 0.0, %v311
    %313 = vmatmul.f32.gmra.mxu0 %v59
    %v314 = vpop.f32.mrf.mxu0
    %v315 = vadd.f32 0.0, %v314
    %316 = vmatmul.f32.gmra.mxu0 %v60
    %v317 = vpop.f32.mrf.mxu0
    %v318 = vadd.f32 0.0, %v317
    %319 = vdwg.mxu0
    %320 = vmatpush.msra.mxu0 %v171
    %321 = vmatpush.msra.mxu0 %v167
    %322 = vmatpush.msra.mxu0 %v163
    %323 = vmatpush.msra.mxu0 %v159
    %324 = vmatpush.msra.mxu0 %v155
    %325 = vmatpush.msra.mxu0 %v151
    %326 = vmatpush.msra.mxu0 %v147
    %327 = vmatpush.msra.mxu0 %v143
    %328 = vmatpush.msra.mxu0 %v139
    %329 = vmatpush.msra.mxu0 %v135
    %330 = vmatpush.msra.mxu0 %v131
    %331 = vmatpush.msra.mxu0 %v127
    %332 = vmatpush.msra.mxu0 %v123
    %333 = vmatpush.msra.mxu0 %v119
    %334 = vmatpush.msra.mxu0 %v115
    %335 = vmatpush.msra.mxu0 %v111
    %336 = vmatmul.f32.gmra.mxu0 %v45
    %v337 = vpop.f32.mrf.mxu0
    %v338 = vadd.f32 0.0, %v337
    %339 = vmatmul.f32.gmra.mxu0 %v46
    %v340 = vpop.f32.mrf.mxu0
    %v341 = vadd.f32 0.0, %v340
    %342 = vmatmul.f32.gmra.mxu0 %v47
    %v343 = vpop.f32.mrf.mxu0
    %v344 = vadd.f32 0.0, %v343
    %345 = vmatmul.f32.gmra.mxu0 %v48
    %v346 = vpop.f32.mrf.mxu0
    %v347 = vadd.f32 0.0, %v346
    %348 = vmatmul.f32.gmra.mxu0 %v49
    %v349 = vpop.f32.mrf.mxu0
    %v350 = vadd.f32 0.0, %v349
    %351 = vmatmul.f32.gmra.mxu0 %v50
    %v352 = vpop.f32.mrf.mxu0
    %v353 = vadd.f32 0.0, %v352
    %354 = vmatmul.f32.gmra.mxu0 %v51
    %v355 = vpop.f32.mrf.mxu0
    %v356 = vadd.f32 0.0, %v355
    %357 = vmatmul.f32.gmra.mxu0 %v52
    %v358 = vpop.f32.mrf.mxu0
    %v359 = vadd.f32 0.0, %v358
    %360 = vmatmul.f32.gmra.mxu0 %v53
    %v361 = vpop.f32.mrf.mxu0
    %v362 = vadd.f32 0.0, %v361
    %363 = vmatmul.f32.gmra.mxu0 %v54
    %v364 = vpop.f32.mrf.mxu0
    %v365 = vadd.f32 0.0, %v364
    %366 = vmatmul.f32.gmra.mxu0 %v55
    %v367 = vpop.f32.mrf.mxu0
    %v368 = vadd.f32 0.0, %v367
    %369 = vmatmul.f32.gmra.mxu0 %v56
    %v370 = vpop.f32.mrf.mxu0
    %v371 = vadd.f32 0.0, %v370
    %372 = vmatmul.f32.gmra.mxu0 %v57
    %v373 = vpop.f32.mrf.mxu0
    %v374 = vadd.f32 0.0, %v373
    %375 = vmatmul.f32.gmra.mxu0 %v58
    %v376 = vpop.f32.mrf.mxu0
    %v377 = vadd.f32 0.0, %v376
    %378 = vmatmul.f32.gmra.mxu0 %v59
    %v379 = vpop.f32.mrf.mxu0
    %v380 = vadd.f32 0.0, %v379
    %381 = vmatmul.f32.gmra.mxu0 %v60
    %v382 = vpop.f32.mrf.mxu0
    %v383 = vadd.f32 0.0, %v382
    %384 = vdwg.mxu0
    %385 = vmatpush.msra.mxu0 %v172
    %386 = vmatpush.msra.mxu0 %v168
    %387 = vmatpush.msra.mxu0 %v164
    %388 = vmatpush.msra.mxu0 %v160
    %389 = vmatpush.msra.mxu0 %v156
    %390 = vmatpush.msra.mxu0 %v152
    %391 = vmatpush.msra.mxu0 %v148
    %392 = vmatpush.msra.mxu0 %v144
    %393 = vmatpush.msra.mxu0 %v140
    %394 = vmatpush.msra.mxu0 %v136
    %395 = vmatpush.msra.mxu0 %v132
    %396 = vmatpush.msra.mxu0 %v128
    %397 = vmatpush.msra.mxu0 %v124
    %398 = vmatpush.msra.mxu0 %v120
    %399 = vmatpush.msra.mxu0 %v116
    %400 = vmatpush.msra.mxu0 %v112
    %401 = vmatmul.f32.gmra.mxu0 %v45
    %v402 = vpop.f32.mrf.mxu0
    %v403 = vadd.f32 0.0, %v402
    %404 = vmatmul.f32.gmra.mxu0 %v46
    %v405 = vpop.f32.mrf.mxu0
    %v406 = vadd.f32 0.0, %v405
    %407 = vmatmul.f32.gmra.mxu0 %v47
    %v408 = vpop.f32.mrf.mxu0
    %v409 = vadd.f32 0.0, %v408
    %410 = vmatmul.f32.gmra.mxu0 %v48
    %v411 = vpop.f32.mrf.mxu0
    %v412 = vadd.f32 0.0, %v411
    %413 = vmatmul.f32.gmra.mxu0 %v49
    %v414 = vpop.f32.mrf.mxu0
    %v415 = vadd.f32 0.0, %v414
    %416 = vmatmul.f32.gmra.mxu0 %v50
    %v417 = vpop.f32.mrf.mxu0
    %v418 = vadd.f32 0.0, %v417
    %419 = vmatmul.f32.gmra.mxu0 %v51
    %v420 = vpop.f32.mrf.mxu0
    %v421 = vadd.f32 0.0, %v420
    %422 = vmatmul.f32.gmra.mxu0 %v52
    %v423 = vpop.f32.mrf.mxu0
    %v424 = vadd.f32 0.0, %v423
    %425 = vmatmul.f32.gmra.mxu0 %v53
    %v426 = vpop.f32.mrf.mxu0
    %v427 = vadd.f32 0.0, %v426
    %428 = vmatmul.f32.gmra.mxu0 %v54
    %v429 = vpop.f32.mrf.mxu0
    %v430 = vadd.f32 0.0, %v429
    %431 = vmatmul.f32.gmra.mxu0 %v55
    %v432 = vpop.f32.mrf.mxu0
    %v433 = vadd.f32 0.0, %v432
    %434 = vmatmul.f32.gmra.mxu0 %v56
    %v435 = vpop.f32.mrf.mxu0
    %v436 = vadd.f32 0.0, %v435
    %437 = vmatmul.f32.gmra.mxu0 %v57
    %v438 = vpop.f32.mrf.mxu0
    %v439 = vadd.f32 0.0, %v438
    %440 = vmatmul.f32.gmra.mxu0 %v58
    %v441 = vpop.f32.mrf.mxu0
    %v442 = vadd.f32 0.0, %v441
    %443 = vmatmul.f32.gmra.mxu0 %v59
    %v444 = vpop.f32.mrf.mxu0
    %v445 = vadd.f32 0.0, %v444
    %446 = vmatmul.f32.gmra.mxu0 %v60
    %v447 = vpop.f32.mrf.mxu0
    %v448 = vadd.f32 0.0, %v447
    %449 = vdwg.mxu0
    %450 = vmatpush.msra.mxu0 %v188
    %451 = vmatpush.msra.mxu0 %v187
    %452 = vmatpush.msra.mxu0 %v186
    %453 = vmatpush.msra.mxu0 %v185
    %454 = vmatpush.msra.mxu0 %v184
    %455 = vmatpush.msra.mxu0 %v183
    %456 = vmatpush.msra.mxu0 %v182
    %457 = vmatpush.msra.mxu0 %v181
    %458 = vmatpush.msra.mxu0 %v180
    %459 = vmatpush.msra.mxu0 %v179
    %460 = vmatpush.msra.mxu0 %v178
    %461 = vmatpush.msra.mxu0 %v177
    %462 = vmatpush.msra.mxu0 %v176
    %463 = vmatpush.msra.mxu0 %v175
    %464 = vmatpush.msra.mxu0 %v174
    %465 = vmatpush.msra.mxu0 %v173
    %466 = vmatmul.f32.gmra.mxu0 %v45
    %v467 = vpop.f32.mrf.mxu0
    %v468 = vadd.f32 0.0, %v467
    %469 = vmatmul.f32.gmra.mxu0 %v46
    %v470 = vpop.f32.mrf.mxu0
    %v471 = vadd.f32 0.0, %v470
    %472 = vmatmul.f32.gmra.mxu0 %v47
    %v473 = vpop.f32.mrf.mxu0
    %v474 = vadd.f32 0.0, %v473
    %475 = vmatmul.f32.gmra.mxu0 %v48
    %v476 = vpop.f32.mrf.mxu0
    %v477 = vadd.f32 0.0, %v476
    %478 = vmatmul.f32.gmra.mxu0 %v49
    %v479 = vpop.f32.mrf.mxu0
    %v480 = vadd.f32 0.0, %v479
    %481 = vmatmul.f32.gmra.mxu0 %v50
    %v482 = vpop.f32.mrf.mxu0
    %v483 = vadd.f32 0.0, %v482
    %484 = vmatmul.f32.gmra.mxu0 %v51
    %v485 = vpop.f32.mrf.mxu0
    %v486 = vadd.f32 0.0, %v485
    %487 = vmatmul.f32.gmra.mxu0 %v52
    %v488 = vpop.f32.mrf.mxu0
    %v489 = vadd.f32 0.0, %v488
    %490 = vmatmul.f32.gmra.mxu0 %v53
    %v491 = vpop.f32.mrf.mxu0
    %v492 = vadd.f32 0.0, %v491
    %493 = vmatmul.f32.gmra.mxu0 %v54
    %v494 = vpop.f32.mrf.mxu0
    %v495 = vadd.f32 0.0, %v494
    %496 = vmatmul.f32.gmra.mxu0 %v55
    %v497 = vpop.f32.mrf.mxu0
    %v498 = vadd.f32 0.0, %v497
    %499 = vmatmul.f32.gmra.mxu0 %v56
    %v500 = vpop.f32.mrf.mxu0
    %v501 = vadd.f32 0.0, %v500
    %502 = vmatmul.f32.gmra.mxu0 %v57
    %v503 = vpop.f32.mrf.mxu0
    %v504 = vadd.f32 0.0, %v503
    %505 = vmatmul.f32.gmra.mxu0 %v58
    %v506 = vpop.f32.mrf.mxu0
    %v507 = vadd.f32 0.0, %v506
    %508 = vmatmul.f32.gmra.mxu0 %v59
    %v509 = vpop.f32.mrf.mxu0
    %v510 = vadd.f32 0.0, %v509
    %511 = vmatmul.f32.gmra.mxu0 %v60
    %v512 = vpop.f32.mrf.mxu0
    %v513 = vadd.f32 0.0, %v512
    %514 = vdwg.mxu0
    %515 = vxpose.xlu0.b32.start [1/16] %v468, 128
    %516 = vxpose.xlu0.b32.cont [2/16] %v471, 128
    %517 = vxpose.xlu0.b32.cont [3/16] %v474, 128
    %518 = vxpose.xlu0.b32.cont [4/16] %v477, 128
    %519 = vxpose.xlu0.b32.cont [5/16] %v480, 128
    %520 = vxpose.xlu0.b32.cont [6/16] %v483, 128
    %521 = vxpose.xlu0.b32.cont [7/16] %v486, 128
    %522 = vxpose.xlu0.b32.cont [8/16] %v489, 128
    %523 = vxpose.xlu0.b32.cont [9/16] %v492, 128
    %524 = vxpose.xlu0.b32.cont [10/16] %v495, 128
    %525 = vxpose.xlu0.b32.cont [11/16] %v498, 128
    %526 = vxpose.xlu0.b32.cont [12/16] %v501, 128
    %527 = vxpose.xlu0.b32.cont [13/16] %v504, 128
    %528 = vxpose.xlu0.b32.cont [14/16] %v507, 128
    %529 = vxpose.xlu0.b32.cont [15/16] %v510, 128
    %530 = vxpose.xlu0.b32.end [16/16] %v513, 128
    %v531 = vpop.trf.xlu0
    %v532 = vpop.trf.xlu0
    %v533 = vpop.trf.xlu0
    %v534 = vpop.trf.xlu0
    %v535 = vpop.trf.xlu0
    %v536 = vpop.trf.xlu0
    %v537 = vpop.trf.xlu0
    %v538 = vpop.trf.xlu0
    %v539 = vpop.trf.xlu0
    %v540 = vpop.trf.xlu0
    %v541 = vpop.trf.xlu0
    %v542 = vpop.trf.xlu0
    %v543 = vpop.trf.xlu0
    %v544 = vpop.trf.xlu0
    %v545 = vpop.trf.xlu0
    %v546 = vpop.trf.xlu0
    %548 = vset.pattern.permute.xlu0 4
    %549 = vperm.xlu0 %548, %v468
    %v550 = vpop.permute.xlu0 %549
    %553 = vset.pattern.permute.xlu0 4
    %554 = vperm.xlu0 %553, %v471
    %v555 = vpop.permute.xlu0 %554
    %558 = vset.pattern.permute.xlu0 4
    %559 = vperm.xlu0 %558, %v474
    %v560 = vpop.permute.xlu0 %559
    %563 = vset.pattern.permute.xlu0 4
    %564 = vperm.xlu0 %563, %v477
    %v565 = vpop.permute.xlu0 %564
    %568 = vset.pattern.permute.xlu0 4
    %569 = vperm.xlu0 %568, %v480
    %v570 = vpop.permute.xlu0 %569
    %573 = vset.pattern.permute.xlu0 4
    %574 = vperm.xlu0 %573, %v483
    %v575 = vpop.permute.xlu0 %574
    %578 = vset.pattern.permute.xlu0 4
    %579 = vperm.xlu0 %578, %v486
    %v580 = vpop.permute.xlu0 %579
    %583 = vset.pattern.permute.xlu0 4
    %584 = vperm.xlu0 %583, %v489
    %v585 = vpop.permute.xlu0 %584
    %588 = vset.pattern.permute.xlu0 4
    %589 = vperm.xlu0 %588, %v492
    %v590 = vpop.permute.xlu0 %589
    %593 = vset.pattern.permute.xlu0 4
    %594 = vperm.xlu0 %593, %v495
    %v595 = vpop.permute.xlu0 %594
    %598 = vset.pattern.permute.xlu0 4
    %599 = vperm.xlu0 %598, %v498
    %v600 = vpop.permute.xlu0 %599
    %603 = vset.pattern.permute.xlu0 4
    %604 = vperm.xlu0 %603, %v501
    %v605 = vpop.permute.xlu0 %604
    %608 = vset.pattern.permute.xlu0 4
    %609 = vperm.xlu0 %608, %v504
    %v610 = vpop.permute.xlu0 %609
    %613 = vset.pattern.permute.xlu0 4
    %614 = vperm.xlu0 %613, %v507
    %v615 = vpop.permute.xlu0 %614
    %618 = vset.pattern.permute.xlu0 4
    %619 = vperm.xlu0 %618, %v510
    %v620 = vpop.permute.xlu0 %619
    %623 = vset.pattern.permute.xlu0 4
    %624 = vperm.xlu0 %623, %v513
    %v625 = vpop.permute.xlu0 %624
    %v627 = vperm.slane %v531, 0
    %v628 = vadd.f32 %v550, %v627
    %v629 = vadd.f32 %v555, %v627
    %v630 = vadd.f32 %v560, %v627
    %v631 = vadd.f32 %v565, %v627
    %v632 = vadd.f32 %v570, %v627
    %v633 = vadd.f32 %v575, %v627
    %v634 = vadd.f32 %v580, %v627
    %v635 = vadd.f32 %v585, %v627
    %v636 = vadd.f32 %v590, %v627
    %v637 = vadd.f32 %v595, %v627
    %v638 = vadd.f32 %v600, %v627
    %v639 = vadd.f32 %v605, %v627
    %v640 = vadd.f32 %v610, %v627
    %v641 = vadd.f32 %v615, %v627
    %v642 = vadd.f32 %v620, %v627
    %v643 = vadd.f32 %v625, %v627
    %v644 = vmul.f32 %v628, 0.2
    %v645 = vmul.f32 %v629, 0.2
    %v646 = vmul.f32 %v630, 0.2
    %v647 = vmul.f32 %v631, 0.2
    %v648 = vmul.f32 %v632, 0.2
    %v649 = vmul.f32 %v633, 0.2
    %v650 = vmul.f32 %v634, 0.2
    %v651 = vmul.f32 %v635, 0.2
    %v652 = vmul.f32 %v636, 0.2
    %v653 = vmul.f32 %v637, 0.2
    %v654 = vmul.f32 %v638, 0.2
    %v655 = vmul.f32 %v639, 0.2
    %v656 = vmul.f32 %v640, 0.2
    %v657 = vmul.f32 %v641, 0.2
    %v658 = vmul.f32 %v642, 0.2
    %v659 = vmul.f32 %v643, 0.2
    %v660 = vmax.f32 %v628, %v644
    %v661 = vmax.f32 %v629, %v645
    %v662 = vmax.f32 %v630, %v646
    %v663 = vmax.f32 %v631, %v647
    %v664 = vmax.f32 %v632, %v648
    %v665 = vmax.f32 %v633, %v649
    %v666 = vmax.f32 %v634, %v650
    %v667 = vmax.f32 %v635, %v651
    %v668 = vmax.f32 %v636, %v652
    %v669 = vmax.f32 %v637, %v653
    %v670 = vmax.f32 %v638, %v654
    %v671 = vmax.f32 %v639, %v655
    %v672 = vmax.f32 %v640, %v656
    %v673 = vmax.f32 %v641, %v657
    %v674 = vmax.f32 %v642, %v658
    %v675 = vmax.f32 %v643, %v659
    %v676 = vadd.f32 %v660, %v93
    %v677 = vadd.f32 %v661, %v94
    %v678 = vadd.f32 %v662, %v95
    %v679 = vadd.f32 %v663, %v96
    %v680 = vadd.f32 %v664, %v97
    %v681 = vadd.f32 %v665, %v98
    %v682 = vadd.f32 %v666, %v99
    %v683 = vadd.f32 %v667, %v100
    %v684 = vadd.f32 %v668, %v101
    %v685 = vadd.f32 %v669, %v102
    %v686 = vadd.f32 %v670, %v103
    %v687 = vadd.f32 %v671, %v104
    %v688 = vadd.f32 %v672, %v105
    %v689 = vadd.f32 %v673, %v106
    %v690 = vadd.f32 %v674, %v107
    %v691 = vadd.f32 %v675, %v108
    %692 = vmax.xlane.f32.xlu0 %v676
    %v693 = vpop.xlane.xlu0 %692
    %694 = vmax.xlane.f32.xlu0 %v677
    %v695 = vpop.xlane.xlu0 %694
    %696 = vmax.xlane.f32.xlu0 %v678
    %v697 = vpop.xlane.xlu0 %696
    %698 = vmax.xlane.f32.xlu0 %v679
    %v699 = vpop.xlane.xlu0 %698
    %700 = vmax.xlane.f32.xlu0 %v680
    %v701 = vpop.xlane.xlu0 %700
    %702 = vmax.xlane.f32.xlu0 %v681
    %v703 = vpop.xlane.xlu0 %702
    %704 = vmax.xlane.f32.xlu0 %v682
    %v705 = vpop.xlane.xlu0 %704
    %706 = vmax.xlane.f32.xlu0 %v683
    %v707 = vpop.xlane.xlu0 %706
    %708 = vmax.xlane.f32.xlu0 %v684
    %v709 = vpop.xlane.xlu0 %708
    %710 = vmax.xlane.f32.xlu0 %v685
    %v711 = vpop.xlane.xlu0 %710
    %712 = vmax.xlane.f32.xlu0 %v686
    %v713 = vpop.xlane.xlu0 %712
    %714 = vmax.xlane.f32.xlu0 %v687
    %v715 = vpop.xlane.xlu0 %714
    %716 = vmax.xlane.f32.xlu0 %v688
    %v717 = vpop.xlane.xlu0 %716
    %718 = vmax.xlane.f32.xlu0 %v689
    %v719 = vpop.xlane.xlu0 %718
    %720 = vmax.xlane.f32.xlu0 %v690
    %v721 = vpop.xlane.xlu0 %720
    %722 = vmax.xlane.f32.xlu0 %v691
    %v723 = vpop.xlane.xlu0 %722
    %v724 = vsub.f32 %v676, %v693
    %v725 = vsub.f32 %v677, %v695
    %v726 = vsub.f32 %v678, %v697
    %v727 = vsub.f32 %v679, %v699
    %v728 = vsub.f32 %v680, %v701
    %v729 = vsub.f32 %v681, %v703
    %v730 = vsub.f32 %v682, %v705
    %v731 = vsub.f32 %v683, %v707
    %v732 = vsub.f32 %v684, %v709
    %v733 = vsub.f32 %v685, %v711
    %v734 = vsub.f32 %v686, %v713
    %v735 = vsub.f32 %v687, %v715
    %v736 = vsub.f32 %v688, %v717
    %v737 = vsub.f32 %v689, %v719
    %v738 = vsub.f32 %v690, %v721
    %v739 = vsub.f32 %v691, %v723
    %v740 = vmul.f32 %v724, 1.442695
    %v741 = vpow.pop %v740
    %v742 = vmul.f32 %v725, 1.442695
    %v743 = vpow.pop %v742
    %v744 = vmul.f32 %v726, 1.442695
    %v745 = vpow.pop %v744
    %v746 = vmul.f32 %v727, 1.442695
    %v747 = vpow.pop %v746
    %v748 = vmul.f32 %v728, 1.442695
    %v749 = vpow.pop %v748
    %v750 = vmul.f32 %v729, 1.442695
    %v751 = vpow.pop %v750
    %v752 = vmul.f32 %v730, 1.442695
    %v753 = vpow.pop %v752
    %v754 = vmul.f32 %v731, 1.442695
    %v755 = vpow.pop %v754
    %v756 = vmul.f32 %v732, 1.442695
    %v757 = vpow.pop %v756
    %v758 = vmul.f32 %v733, 1.442695
    %v759 = vpow.pop %v758
    %v760 = vmul.f32 %v734, 1.442695
    %v761 = vpow.pop %v760
    %v762 = vmul.f32 %v735, 1.442695
    %v763 = vpow.pop %v762
    %v764 = vmul.f32 %v736, 1.442695
    %v765 = vpow.pop %v764
    %v766 = vmul.f32 %v737, 1.442695
    %v767 = vpow.pop %v766
    %v768 = vmul.f32 %v738, 1.442695
    %v769 = vpow.pop %v768
    %v770 = vmul.f32 %v739, 1.442695
    %v771 = vpow.pop %v770
    %772 = vadd.xlane.f32.xlu0 %v741
    %v773 = vpop.xlane.xlu0 %772
    %774 = vadd.xlane.f32.xlu0 %v743
    %v775 = vpop.xlane.xlu0 %774
    %776 = vadd.xlane.f32.xlu0 %v745
    %v777 = vpop.xlane.xlu0 %776
    %778 = vadd.xlane.f32.xlu0 %v747
    %v779 = vpop.xlane.xlu0 %778
    %780 = vadd.xlane.f32.xlu0 %v749
    %v781 = vpop.xlane.xlu0 %780
    %782 = vadd.xlane.f32.xlu0 %v751
    %v783 = vpop.xlane.xlu0 %782
    %784 = vadd.xlane.f32.xlu0 %v753
    %v785 = vpop.xlane.xlu0 %784
    %786 = vadd.xlane.f32.xlu0 %v755
    %v787 = vpop.xlane.xlu0 %786
    %788 = vadd.xlane.f32.xlu0 %v757
    %v789 = vpop.xlane.xlu0 %788
    %790 = vadd.xlane.f32.xlu0 %v759
    %v791 = vpop.xlane.xlu0 %790
    %792 = vadd.xlane.f32.xlu0 %v761
    %v793 = vpop.xlane.xlu0 %792
    %794 = vadd.xlane.f32.xlu0 %v763
    %v795 = vpop.xlane.xlu0 %794
    %796 = vadd.xlane.f32.xlu0 %v765
    %v797 = vpop.xlane.xlu0 %796
    %798 = vadd.xlane.f32.xlu0 %v767
    %v799 = vpop.xlane.xlu0 %798
    %800 = vadd.xlane.f32.xlu0 %v769
    %v801 = vpop.xlane.xlu0 %800
    %802 = vadd.xlane.f32.xlu0 %v771
    %v803 = vpop.xlane.xlu0 %802
    %v804 = vrcp.pop %v773
    %v805 = vrcp.pop %v775
    %v806 = vrcp.pop %v777
    %v807 = vrcp.pop %v779
    %v808 = vrcp.pop %v781
    %v809 = vrcp.pop %v783
    %v810 = vrcp.pop %v785
    %v811 = vrcp.pop %v787
    %v812 = vrcp.pop %v789
    %v813 = vrcp.pop %v791
    %v814 = vrcp.pop %v793
    %v815 = vrcp.pop %v795
    %v816 = vrcp.pop %v797
    %v817 = vrcp.pop %v799
    %v818 = vrcp.pop %v801
    %v819 = vrcp.pop %v803
    %v820 = vmul.f32 %v804, 0.25
    %v821 = vmul.f32 %v805, 0.25
    %v822 = vmul.f32 %v806, 0.25
    %v823 = vmul.f32 %v807, 0.25
    %v824 = vmul.f32 %v808, 0.25
    %v825 = vmul.f32 %v809, 0.25
    %v826 = vmul.f32 %v810, 0.25
    %v827 = vmul.f32 %v811, 0.25
    %v828 = vmul.f32 %v812, 0.25
    %v829 = vmul.f32 %v813, 0.25
    %v830 = vmul.f32 %v814, 0.25
    %v831 = vmul.f32 %v815, 0.25
    %v832 = vmul.f32 %v816, 0.25
    %v833 = vmul.f32 %v817, 0.25
    %v834 = vmul.f32 %v818, 0.25
    %v835 = vmul.f32 %v819, 0.25
    %v836 = vmul.f32 %v741, %v820
    %v837 = vmul.f32 %v743, %v821
    %v838 = vmul.f32 %v745, %v822
    %v839 = vmul.f32 %v747, %v823
    %v840 = vmul.f32 %v749, %v824
    %v841 = vmul.f32 %v751, %v825
    %v842 = vmul.f32 %v753, %v826
    %v843 = vmul.f32 %v755, %v827
    %v844 = vmul.f32 %v757, %v828
    %v845 = vmul.f32 %v759, %v829
    %v846 = vmul.f32 %v761, %v830
    %v847 = vmul.f32 %v763, %v831
    %v848 = vmul.f32 %v765, %v832
    %v849 = vmul.f32 %v767, %v833
    %v850 = vmul.f32 %v769, %v834
    %v851 = vmul.f32 %v771, %v835
    %852 = vset.pattern.permute.xlu0 5
    %853 = vperm.xlu0 %852, %v468
    %v854 = vpop.permute.xlu0 %853
    %856 = vset.pattern.permute.xlu0 5
    %857 = vperm.xlu0 %856, %v471
    %v858 = vpop.permute.xlu0 %857
    %860 = vset.pattern.permute.xlu0 5
    %861 = vperm.xlu0 %860, %v474
    %v862 = vpop.permute.xlu0 %861
    %864 = vset.pattern.permute.xlu0 5
    %865 = vperm.xlu0 %864, %v477
    %v866 = vpop.permute.xlu0 %865
    %868 = vset.pattern.permute.xlu0 5
    %869 = vperm.xlu0 %868, %v480
    %v870 = vpop.permute.xlu0 %869
    %872 = vset.pattern.permute.xlu0 5
    %873 = vperm.xlu0 %872, %v483
    %v874 = vpop.permute.xlu0 %873
    %876 = vset.pattern.permute.xlu0 5
    %877 = vperm.xlu0 %876, %v486
    %v878 = vpop.permute.xlu0 %877
    %880 = vset.pattern.permute.xlu0 5
    %881 = vperm.xlu0 %880, %v489
    %v882 = vpop.permute.xlu0 %881
    %884 = vset.pattern.permute.xlu0 5
    %885 = vperm.xlu0 %884, %v492
    %v886 = vpop.permute.xlu0 %885
    %888 = vset.pattern.permute.xlu0 5
    %889 = vperm.xlu0 %888, %v495
    %v890 = vpop.permute.xlu0 %889
    %892 = vset.pattern.permute.xlu0 5
    %893 = vperm.xlu0 %892, %v498
    %v894 = vpop.permute.xlu0 %893
    %896 = vset.pattern.permute.xlu0 5
    %897 = vperm.xlu0 %896, %v501
    %v898 = vpop.permute.xlu0 %897
    %900 = vset.pattern.permute.xlu0 5
    %901 = vperm.xlu0 %900, %v504
    %v902 = vpop.permute.xlu0 %901
    %904 = vset.pattern.permute.xlu0 5
    %905 = vperm.xlu0 %904, %v507
    %v906 = vpop.permute.xlu0 %905
    %908 = vset.pattern.permute.xlu0 5
    %909 = vperm.xlu0 %908, %v510
    %v910 = vpop.permute.xlu0 %909
    %912 = vset.pattern.permute.xlu0 5
    %913 = vperm.xlu0 %912, %v513
    %v914 = vpop.permute.xlu0 %913
    %v916 = vperm.slane %v531, 1
    %v917 = vadd.f32 %v854, %v916
    %v918 = vadd.f32 %v858, %v916
    %v919 = vadd.f32 %v862, %v916
    %v920 = vadd.f32 %v866, %v916
    %v921 = vadd.f32 %v870, %v916
    %v922 = vadd.f32 %v874, %v916
    %v923 = vadd.f32 %v878, %v916
    %v924 = vadd.f32 %v882, %v916
    %v925 = vadd.f32 %v886, %v916
    %v926 = vadd.f32 %v890, %v916
    %v927 = vadd.f32 %v894, %v916
    %v928 = vadd.f32 %v898, %v916
    %v929 = vadd.f32 %v902, %v916
    %v930 = vadd.f32 %v906, %v916
    %v931 = vadd.f32 %v910, %v916
    %v932 = vadd.f32 %v914, %v916
    %v933 = vmul.f32 %v917, 0.2
    %v934 = vmul.f32 %v918, 0.2
    %v935 = vmul.f32 %v919, 0.2
    %v936 = vmul.f32 %v920, 0.2
    %v937 = vmul.f32 %v921, 0.2
    %v938 = vmul.f32 %v922, 0.2
    %v939 = vmul.f32 %v923, 0.2
    %v940 = vmul.f32 %v924, 0.2
    %v941 = vmul.f32 %v925, 0.2
    %v942 = vmul.f32 %v926, 0.2
    %v943 = vmul.f32 %v927, 0.2
    %v944 = vmul.f32 %v928, 0.2
    %v945 = vmul.f32 %v929, 0.2
    %v946 = vmul.f32 %v930, 0.2
    %v947 = vmul.f32 %v931, 0.2
    %v948 = vmul.f32 %v932, 0.2
    %v949 = vmax.f32 %v917, %v933
    %v950 = vmax.f32 %v918, %v934
    %v951 = vmax.f32 %v919, %v935
    %v952 = vmax.f32 %v920, %v936
    %v953 = vmax.f32 %v921, %v937
    %v954 = vmax.f32 %v922, %v938
    %v955 = vmax.f32 %v923, %v939
    %v956 = vmax.f32 %v924, %v940
    %v957 = vmax.f32 %v925, %v941
    %v958 = vmax.f32 %v926, %v942
    %v959 = vmax.f32 %v927, %v943
    %v960 = vmax.f32 %v928, %v944
    %v961 = vmax.f32 %v929, %v945
    %v962 = vmax.f32 %v930, %v946
    %v963 = vmax.f32 %v931, %v947
    %v964 = vmax.f32 %v932, %v948
    %v965 = vadd.f32 %v949, %v93
    %v966 = vadd.f32 %v950, %v94
    %v967 = vadd.f32 %v951, %v95
    %v968 = vadd.f32 %v952, %v96
    %v969 = vadd.f32 %v953, %v97
    %v970 = vadd.f32 %v954, %v98
    %v971 = vadd.f32 %v955, %v99
    %v972 = vadd.f32 %v956, %v100
    %v973 = vadd.f32 %v957, %v101
    %v974 = vadd.f32 %v958, %v102
    %v975 = vadd.f32 %v959, %v103
    %v976 = vadd.f32 %v960, %v104
    %v977 = vadd.f32 %v961, %v105
    %v978 = vadd.f32 %v962, %v106
    %v979 = vadd.f32 %v963, %v107
    %v980 = vadd.f32 %v964, %v108
    %981 = vmax.xlane.f32.xlu0 %v965
    %v982 = vpop.xlane.xlu0 %981
    %983 = vmax.xlane.f32.xlu0 %v966
    %v984 = vpop.xlane.xlu0 %983
    %985 = vmax.xlane.f32.xlu0 %v967
    %v986 = vpop.xlane.xlu0 %985
    %987 = vmax.xlane.f32.xlu0 %v968
    %v988 = vpop.xlane.xlu0 %987
    %989 = vmax.xlane.f32.xlu0 %v969
    %v990 = vpop.xlane.xlu0 %989
    %991 = vmax.xlane.f32.xlu0 %v970
    %v992 = vpop.xlane.xlu0 %991
    %993 = vmax.xlane.f32.xlu0 %v971
    %v994 = vpop.xlane.xlu0 %993
    %995 = vmax.xlane.f32.xlu0 %v972
    %v996 = vpop.xlane.xlu0 %995
    %997 = vmax.xlane.f32.xlu0 %v973
    %v998 = vpop.xlane.xlu0 %997
    %999 = vmax.xlane.f32.xlu0 %v974
    %v1000 = vpop.xlane.xlu0 %999
    %1001 = vmax.xlane.f32.xlu0 %v975
    %v1002 = vpop.xlane.xlu0 %1001
    %1003 = vmax.xlane.f32.xlu0 %v976
    %v1004 = vpop.xlane.xlu0 %1003
    %1005 = vmax.xlane.f32.xlu0 %v977
    %v1006 = vpop.xlane.xlu0 %1005
    %1007 = vmax.xlane.f32.xlu0 %v978
    %v1008 = vpop.xlane.xlu0 %1007
    %1009 = vmax.xlane.f32.xlu0 %v979
    %v1010 = vpop.xlane.xlu0 %1009
    %1011 = vmax.xlane.f32.xlu0 %v980
    %v1012 = vpop.xlane.xlu0 %1011
    %v1013 = vsub.f32 %v965, %v982
    %v1014 = vsub.f32 %v966, %v984
    %v1015 = vsub.f32 %v967, %v986
    %v1016 = vsub.f32 %v968, %v988
    %v1017 = vsub.f32 %v969, %v990
    %v1018 = vsub.f32 %v970, %v992
    %v1019 = vsub.f32 %v971, %v994
    %v1020 = vsub.f32 %v972, %v996
    %v1021 = vsub.f32 %v973, %v998
    %v1022 = vsub.f32 %v974, %v1000
    %v1023 = vsub.f32 %v975, %v1002
    %v1024 = vsub.f32 %v976, %v1004
    %v1025 = vsub.f32 %v977, %v1006
    %v1026 = vsub.f32 %v978, %v1008
    %v1027 = vsub.f32 %v979, %v1010
    %v1028 = vsub.f32 %v980, %v1012
    %v1029 = vmul.f32 %v1013, 1.442695
    %v1030 = vpow.pop %v1029
    %v1031 = vmul.f32 %v1014, 1.442695
    %v1032 = vpow.pop %v1031
    %v1033 = vmul.f32 %v1015, 1.442695
    %v1034 = vpow.pop %v1033
    %v1035 = vmul.f32 %v1016, 1.442695
    %v1036 = vpow.pop %v1035
    %v1037 = vmul.f32 %v1017, 1.442695
    %v1038 = vpow.pop %v1037
    %v1039 = vmul.f32 %v1018, 1.442695
    %v1040 = vpow.pop %v1039
    %v1041 = vmul.f32 %v1019, 1.442695
    %v1042 = vpow.pop %v1041
    %v1043 = vmul.f32 %v1020, 1.442695
    %v1044 = vpow.pop %v1043
    %v1045 = vmul.f32 %v1021, 1.442695
    %v1046 = vpow.pop %v1045
    %v1047 = vmul.f32 %v1022, 1.442695
    %v1048 = vpow.pop %v1047
    %v1049 = vmul.f32 %v1023, 1.442695
    %v1050 = vpow.pop %v1049
    %v1051 = vmul.f32 %v1024, 1.442695
    %v1052 = vpow.pop %v1051
    %v1053 = vmul.f32 %v1025, 1.442695
    %v1054 = vpow.pop %v1053
    %v1055 = vmul.f32 %v1026, 1.442695
    %v1056 = vpow.pop %v1055
    %v1057 = vmul.f32 %v1027, 1.442695
    %v1058 = vpow.pop %v1057
    %v1059 = vmul.f32 %v1028, 1.442695
    %v1060 = vpow.pop %v1059
    %1061 = vadd.xlane.f32.xlu0 %v1030
    %v1062 = vpop.xlane.xlu0 %1061
    %1063 = vadd.xlane.f32.xlu0 %v1032
    %v1064 = vpop.xlane.xlu0 %1063
    %1065 = vadd.xlane.f32.xlu0 %v1034
    %v1066 = vpop.xlane.xlu0 %1065
    %1067 = vadd.xlane.f32.xlu0 %v1036
    %v1068 = vpop.xlane.xlu0 %1067
    %1069 = vadd.xlane.f32.xlu0 %v1038
    %v1070 = vpop.xlane.xlu0 %1069
    %1071 = vadd.xlane.f32.xlu0 %v1040
    %v1072 = vpop.xlane.xlu0 %1071
    %1073 = vadd.xlane.f32.xlu0 %v1042
    %v1074 = vpop.xlane.xlu0 %1073
    %1075 = vadd.xlane.f32.xlu0 %v1044
    %v1076 = vpop.xlane.xlu0 %1075
    %1077 = vadd.xlane.f32.xlu0 %v1046
    %v1078 = vpop.xlane.xlu0 %1077
    %1079 = vadd.xlane.f32.xlu0 %v1048
    %v1080 = vpop.xlane.xlu0 %1079
    %1081 = vadd.xlane.f32.xlu0 %v1050
    %v1082 = vpop.xlane.xlu0 %1081
    %1083 = vadd.xlane.f32.xlu0 %v1052
    %v1084 = vpop.xlane.xlu0 %1083
    %1085 = vadd.xlane.f32.xlu0 %v1054
    %v1086 = vpop.xlane.xlu0 %1085
    %1087 = vadd.xlane.f32.xlu0 %v1056
    %v1088 = vpop.xlane.xlu0 %1087
    %1089 = vadd.xlane.f32.xlu0 %v1058
    %v1090 = vpop.xlane.xlu0 %1089
    %1091 = vadd.xlane.f32.xlu0 %v1060
    %v1092 = vpop.xlane.xlu0 %1091
    %v1093 = vrcp.pop %v1062
    %v1094 = vrcp.pop %v1064
    %v1095 = vrcp.pop %v1066
    %v1096 = vrcp.pop %v1068
    %v1097 = vrcp.pop %v1070
    %v1098 = vrcp.pop %v1072
    %v1099 = vrcp.pop %v1074
    %v1100 = vrcp.pop %v1076
    %v1101 = vrcp.pop %v1078
    %v1102 = vrcp.pop %v1080
    %v1103 = vrcp.pop %v1082
    %v1104 = vrcp.pop %v1084
    %v1105 = vrcp.pop %v1086
    %v1106 = vrcp.pop %v1088
    %v1107 = vrcp.pop %v1090
    %v1108 = vrcp.pop %v1092
    %v1109 = vmul.f32 %v1093, 0.25
    %v1110 = vmul.f32 %v1094, 0.25
    %v1111 = vmul.f32 %v1095, 0.25
    %v1112 = vmul.f32 %v1096, 0.25
    %v1113 = vmul.f32 %v1097, 0.25
    %v1114 = vmul.f32 %v1098, 0.25
    %v1115 = vmul.f32 %v1099, 0.25
    %v1116 = vmul.f32 %v1100, 0.25
    %v1117 = vmul.f32 %v1101, 0.25
    %v1118 = vmul.f32 %v1102, 0.25
    %v1119 = vmul.f32 %v1103, 0.25
    %v1120 = vmul.f32 %v1104, 0.25
    %v1121 = vmul.f32 %v1105, 0.25
    %v1122 = vmul.f32 %v1106, 0.25
    %v1123 = vmul.f32 %v1107, 0.25
    %v1124 = vmul.f32 %v1108, 0.25
    %v1125 = vmul.f32 %v1030, %v1109
    %v1126 = vmul.f32 %v1032, %v1110
    %v1127 = vmul.f32 %v1034, %v1111
    %v1128 = vmul.f32 %v1036, %v1112
    %v1129 = vmul.f32 %v1038, %v1113
    %v1130 = vmul.f32 %v1040, %v1114
    %v1131 = vmul.f32 %v1042, %v1115
    %v1132 = vmul.f32 %v1044, %v1116
    %v1133 = vmul.f32 %v1046, %v1117
    %v1134 = vmul.f32 %v1048, %v1118
    %v1135 = vmul.f32 %v1050, %v1119
    %v1136 = vmul.f32 %v1052, %v1120
    %v1137 = vmul.f32 %v1054, %v1121
    %v1138 = vmul.f32 %v1056, %v1122
    %v1139 = vmul.f32 %v1058, %v1123
    %v1140 = vmul.f32 %v1060, %v1124
    %1141 = vmatpush.msra.mxu0 %v318
    %1142 = vmatpush.msra.mxu0 %v315
    %1143 = vmatpush.msra.mxu0 %v312
    %1144 = vmatpush.msra.mxu0 %v309
    %1145 = vmatpush.msra.mxu0 %v306
    %1146 = vmatpush.msra.mxu0 %v303
    %1147 = vmatpush.msra.mxu0 %v300
    %1148 = vmatpush.msra.mxu0 %v297
    %1149 = vmatpush.msra.mxu0 %v294
    %1150 = vmatpush.msra.mxu0 %v291
    %1151 = vmatpush.msra.mxu0 %v288
    %1152 = vmatpush.msra.mxu0 %v285
    %1153 = vmatpush.msra.mxu0 %v282
    %1154 = vmatpush.msra.mxu0 %v279
    %1155 = vmatpush.msra.mxu0 %v276
    %1156 = vmatpush.msra.mxu0 %v273
    %1157 = vmatmul.f32.gmra.mxu0 %v1125
    %v1158 = vpop.f32.mrf.mxu0
    %v1159 = vadd.f32 0.0, %v1158
    %1160 = vmatmul.f32.gmra.mxu0 %v1126
    %v1161 = vpop.f32.mrf.mxu0
    %v1162 = vadd.f32 0.0, %v1161
    %1163 = vmatmul.f32.gmra.mxu0 %v1127
    %v1164 = vpop.f32.mrf.mxu0
    %v1165 = vadd.f32 0.0, %v1164
    %1166 = vmatmul.f32.gmra.mxu0 %v1128
    %v1167 = vpop.f32.mrf.mxu0
    %v1168 = vadd.f32 0.0, %v1167
    %1169 = vmatmul.f32.gmra.mxu0 %v1129
    %v1170 = vpop.f32.mrf.mxu0
    %v1171 = vadd.f32 0.0, %v1170
    %1172 = vmatmul.f32.gmra.mxu0 %v1130
    %v1173 = vpop.f32.mrf.mxu0
    %v1174 = vadd.f32 0.0, %v1173
    %1175 = vmatmul.f32.gmra.mxu0 %v1131
    %v1176 = vpop.f32.mrf.mxu0
    %v1177 = vadd.f32 0.0, %v1176
    %1178 = vmatmul.f32.gmra.mxu0 %v1132
    %v1179 = vpop.f32.mrf.mxu0
    %v1180 = vadd.f32 0.0, %v1179
    %1181 = vmatmul.f32.gmra.mxu0 %v1133
    %v1182 = vpop.f32.mrf.mxu0
    %v1183 = vadd.f32 0.0, %v1182
    %1184 = vmatmul.f32.gmra.mxu0 %v1134
    %v1185 = vpop.f32.mrf.mxu0
    %v1186 = vadd.f32 0.0, %v1185
    %1187 = vmatmul.f32.gmra.mxu0 %v1135
    %v1188 = vpop.f32.mrf.mxu0
    %v1189 = vadd.f32 0.0, %v1188
    %1190 = vmatmul.f32.gmra.mxu0 %v1136
    %v1191 = vpop.f32.mrf.mxu0
    %v1192 = vadd.f32 0.0, %v1191
    %1193 = vmatmul.f32.gmra.mxu0 %v1137
    %v1194 = vpop.f32.mrf.mxu0
    %v1195 = vadd.f32 0.0, %v1194
    %1196 = vmatmul.f32.gmra.mxu0 %v1138
    %v1197 = vpop.f32.mrf.mxu0
    %v1198 = vadd.f32 0.0, %v1197
    %1199 = vmatmul.f32.gmra.mxu0 %v1139
    %v1200 = vpop.f32.mrf.mxu0
    %v1201 = vadd.f32 0.0, %v1200
    %1202 = vmatmul.f32.gmra.mxu0 %v1140
    %v1203 = vpop.f32.mrf.mxu0
    %v1204 = vadd.f32 0.0, %v1203
    %1205 = vdwg.mxu0
    %1206 = vmatpush.msra.mxu0 %v253
    %1207 = vmatpush.msra.mxu0 %v250
    %1208 = vmatpush.msra.mxu0 %v247
    %1209 = vmatpush.msra.mxu0 %v244
    %1210 = vmatpush.msra.mxu0 %v241
    %1211 = vmatpush.msra.mxu0 %v238
    %1212 = vmatpush.msra.mxu0 %v235
    %1213 = vmatpush.msra.mxu0 %v232
    %1214 = vmatpush.msra.mxu0 %v229
    %1215 = vmatpush.msra.mxu0 %v226
    %1216 = vmatpush.msra.mxu0 %v223
    %1217 = vmatpush.msra.mxu0 %v220
    %1218 = vmatpush.msra.mxu0 %v217
    %1219 = vmatpush.msra.mxu0 %v214
    %1220 = vmatpush.msra.mxu0 %v211
    %1221 = vmatpush.msra.mxu0 %v208
    %1222 = vmatmul.f32.gmra.mxu0 %v836
    %v1223 = vpop.f32.mrf.mxu0
    %v1224 = vadd.f32 %v1159, %v1223
    %1225 = vmatmul.f32.gmra.mxu0 %v837
    %v1226 = vpop.f32.mrf.mxu0
    %v1227 = vadd.f32 %v1162, %v1226
    %1228 = vmatmul.f32.gmra.mxu0 %v838
    %v1229 = vpop.f32.mrf.mxu0
    %v1230 = vadd.f32 %v1165, %v1229
    %1231 = vmatmul.f32.gmra.mxu0 %v839
    %v1232 = vpop.f32.mrf.mxu0
    %v1233 = vadd.f32 %v1168, %v1232
    %1234 = vmatmul.f32.gmra.mxu0 %v840
    %v1235 = vpop.f32.mrf.mxu0
    %v1236 = vadd.f32 %v1171, %v1235
    %1237 = vmatmul.f32.gmra.mxu0 %v841
    %v1238 = vpop.f32.mrf.mxu0
    %v1239 = vadd.f32 %v1174, %v1238
    %1240 = vmatmul.f32.gmra.mxu0 %v842
    %v1241 = vpop.f32.mrf.mxu0
    %v1242 = vadd.f32 %v1177, %v1241
    %1243 = vmatmul.f32.gmra.mxu0 %v843
    %v1244 = vpop.f32.mrf.mxu0
    %v1245 = vadd.f32 %v1180, %v1244
    %1246 = vmatmul.f32.gmra.mxu0 %v844
    %v1247 = vpop.f32.mrf.mxu0
    %v1248 = vadd.f32 %v1183, %v1247
    %1249 = vmatmul.f32.gmra.mxu0 %v845
    %v1250 = vpop.f32.mrf.mxu0
    %v1251 = vadd.f32 %v1186, %v1250
    %1252 = vmatmul.f32.gmra.mxu0 %v846
    %v1253 = vpop.f32.mrf.mxu0
    %v1254 = vadd.f32 %v1189, %v1253
    %1255 = vmatmul.f32.gmra.mxu0 %v847
    %v1256 = vpop.f32.mrf.mxu0
    %v1257 = vadd.f32 %v1192, %v1256
    %1258 = vmatmul.f32.gmra.mxu0 %v848
    %v1259 = vpop.f32.mrf.mxu0
    %v1260 = vadd.f32 %v1195, %v1259
    %1261 = vmatmul.f32.gmra.mxu0 %v849
    %v1262 = vpop.f32.mrf.mxu0
    %v1263 = vadd.f32 %v1198, %v1262
    %1264 = vmatmul.f32.gmra.mxu0 %v850
    %v1265 = vpop.f32.mrf.mxu0
    %v1266 = vadd.f32 %v1201, %v1265
    %1267 = vmatmul.f32.gmra.mxu0 %v851
    %v1268 = vpop.f32.mrf.mxu0
    %v1269 = vadd.f32 %v1204, %v1268
    %1270 = vdwg.mxu0
    %1271 = vset.pattern.permute.xlu0 6
    %1272 = vperm.xlu0 %1271, %v468
    %v1273 = vpop.permute.xlu0 %1272
    %1275 = vset.pattern.permute.xlu0 6
    %1276 = vperm.xlu0 %1275, %v471
    %v1277 = vpop.permute.xlu0 %1276
    %1279 = vset.pattern.permute.xlu0 6
    %1280 = vperm.xlu0 %1279, %v474
    %v1281 = vpop.permute.xlu0 %1280
    %1283 = vset.pattern.permute.xlu0 6
    %1284 = vperm.xlu0 %1283, %v477
    %v1285 = vpop.permute.xlu0 %1284
    %1287 = vset.pattern.permute.xlu0 6
    %1288 = vperm.xlu0 %1287, %v480
    %v1289 = vpop.permute.xlu0 %1288
    %1291 = vset.pattern.permute.xlu0 6
    %1292 = vperm.xlu0 %1291, %v483
    %v1293 = vpop.permute.xlu0 %1292
    %1295 = vset.pattern.permute.xlu0 6
    %1296 = vperm.xlu0 %1295, %v486
    %v1297 = vpop.permute.xlu0 %1296
    %1299 = vset.pattern.permute.xlu0 6
    %1300 = vperm.xlu0 %1299, %v489
    %v1301 = vpop.permute.xlu0 %1300
    %1303 = vset.pattern.permute.xlu0 6
    %1304 = vperm.xlu0 %1303, %v492
    %v1305 = vpop.permute.xlu0 %1304
    %1307 = vset.pattern.permute.xlu0 6
    %1308 = vperm.xlu0 %1307, %v495
    %v1309 = vpop.permute.xlu0 %1308
    %1311 = vset.pattern.permute.xlu0 6
    %1312 = vperm.xlu0 %1311, %v498
    %v1313 = vpop.permute.xlu0 %1312
    %1315 = vset.pattern.permute.xlu0 6
    %1316 = vperm.xlu0 %1315, %v501
    %v1317 = vpop.permute.xlu0 %1316
    %1319 = vset.pattern.permute.xlu0 6
    %1320 = vperm.xlu0 %1319, %v504
    %v1321 = vpop.permute.xlu0 %1320
    %1323 = vset.pattern.permute.xlu0 6
    %1324 = vperm.xlu0 %1323, %v507
    %v1325 = vpop.permute.xlu0 %1324
    %1327 = vset.pattern.permute.xlu0 6
    %1328 = vperm.xlu0 %1327, %v510
    %v1329 = vpop.permute.xlu0 %1328
    %1331 = vset.pattern.permute.xlu0 6
    %1332 = vperm.xlu0 %1331, %v513
    %v1333 = vpop.permute.xlu0 %1332
    %v1335 = vperm.slane %v531, 2
    %v1336 = vadd.f32 %v1273, %v1335
    %v1337 = vadd.f32 %v1277, %v1335
    %v1338 = vadd.f32 %v1281, %v1335
    %v1339 = vadd.f32 %v1285, %v1335
    %v1340 = vadd.f32 %v1289, %v1335
    %v1341 = vadd.f32 %v1293, %v1335
    %v1342 = vadd.f32 %v1297, %v1335
    %v1343 = vadd.f32 %v1301, %v1335
    %v1344 = vadd.f32 %v1305, %v1335
    %v1345 = vadd.f32 %v1309, %v1335
    %v1346 = vadd.f32 %v1313, %v1335
    %v1347 = vadd.f32 %v1317, %v1335
    %v1348 = vadd.f32 %v1321, %v1335
    %v1349 = vadd.f32 %v1325, %v1335
    %v1350 = vadd.f32 %v1329, %v1335
    %v1351 = vadd.f32 %v1333, %v1335
    %v1352 = vmul.f32 %v1336, 0.2
    %v1353 = vmul.f32 %v1337, 0.2
    %v1354 = vmul.f32 %v1338, 0.2
    %v1355 = vmul.f32 %v1339, 0.2
    %v1356 = vmul.f32 %v1340, 0.2
    %v1357 = vmul.f32 %v1341, 0.2
    %v1358 = vmul.f32 %v1342, 0.2
    %v1359 = vmul.f32 %v1343, 0.2
    %v1360 = vmul.f32 %v1344, 0.2
    %v1361 = vmul.f32 %v1345, 0.2
    %v1362 = vmul.f32 %v1346, 0.2
    %v1363 = vmul.f32 %v1347, 0.2
    %v1364 = vmul.f32 %v1348, 0.2
    %v1365 = vmul.f32 %v1349, 0.2
    %v1366 = vmul.f32 %v1350, 0.2
    %v1367 = vmul.f32 %v1351, 0.2
    %v1368 = vmax.f32 %v1336, %v1352
    %v1369 = vmax.f32 %v1337, %v1353
    %v1370 = vmax.f32 %v1338, %v1354
    %v1371 = vmax.f32 %v1339, %v1355
    %v1372 = vmax.f32 %v1340, %v1356
    %v1373 = vmax.f32 %v1341, %v1357
    %v1374 = vmax.f32 %v1342, %v1358
    %v1375 = vmax.f32 %v1343, %v1359
    %v1376 = vmax.f32 %v1344, %v1360
    %v1377 = vmax.f32 %v1345, %v1361
    %v1378 = vmax.f32 %v1346, %v1362
    %v1379 = vmax.f32 %v1347, %v1363
    %v1380 = vmax.f32 %v1348, %v1364
    %v1381 = vmax.f32 %v1349, %v1365
    %v1382 = vmax.f32 %v1350, %v1366
    %v1383 = vmax.f32 %v1351, %v1367
    %v1384 = vadd.f32 %v1368, %v93
    %v1385 = vadd.f32 %v1369, %v94
    %v1386 = vadd.f32 %v1370, %v95
    %v1387 = vadd.f32 %v1371, %v96
    %v1388 = vadd.f32 %v1372, %v97
    %v1389 = vadd.f32 %v1373, %v98
    %v1390 = vadd.f32 %v1374, %v99
    %v1391 = vadd.f32 %v1375, %v100
    %v1392 = vadd.f32 %v1376, %v101
    %v1393 = vadd.f32 %v1377, %v102
    %v1394 = vadd.f32 %v1378, %v103
    %v1395 = vadd.f32 %v1379, %v104
    %v1396 = vadd.f32 %v1380, %v105
    %v1397 = vadd.f32 %v1381, %v106
    %v1398 = vadd.f32 %v1382, %v107
    %v1399 = vadd.f32 %v1383, %v108
    %1400 = vmax.xlane.f32.xlu0 %v1384
    %v1401 = vpop.xlane.xlu0 %1400
    %1402 = vmax.xlane.f32.xlu0 %v1385
    %v1403 = vpop.xlane.xlu0 %1402
    %1404 = vmax.xlane.f32.xlu0 %v1386
    %v1405 = vpop.xlane.xlu0 %1404
    %1406 = vmax.xlane.f32.xlu0 %v1387
    %v1407 = vpop.xlane.xlu0 %1406
    %1408 = vmax.xlane.f32.xlu0 %v1388
    %v1409 = vpop.xlane.xlu0 %1408
    %1410 = vmax.xlane.f32.xlu0 %v1389
    %v1411 = vpop.xlane.xlu0 %1410
    %1412 = vmax.xlane.f32.xlu0 %v1390
    %v1413 = vpop.xlane.xlu0 %1412
    %1414 = vmax.xlane.f32.xlu0 %v1391
    %v1415 = vpop.xlane.xlu0 %1414
    %1416 = vmax.xlane.f32.xlu0 %v1392
    %v1417 = vpop.xlane.xlu0 %1416
    %1418 = vmax.xlane.f32.xlu0 %v1393
    %v1419 = vpop.xlane.xlu0 %1418
    %1420 = vmax.xlane.f32.xlu0 %v1394
    %v1421 = vpop.xlane.xlu0 %1420
    %1422 = vmax.xlane.f32.xlu0 %v1395
    %v1423 = vpop.xlane.xlu0 %1422
    %1424 = vmax.xlane.f32.xlu0 %v1396
    %v1425 = vpop.xlane.xlu0 %1424
    %1426 = vmax.xlane.f32.xlu0 %v1397
    %v1427 = vpop.xlane.xlu0 %1426
    %1428 = vmax.xlane.f32.xlu0 %v1398
    %v1429 = vpop.xlane.xlu0 %1428
    %1430 = vmax.xlane.f32.xlu0 %v1399
    %v1431 = vpop.xlane.xlu0 %1430
    %v1432 = vsub.f32 %v1384, %v1401
    %v1433 = vsub.f32 %v1385, %v1403
    %v1434 = vsub.f32 %v1386, %v1405
    %v1435 = vsub.f32 %v1387, %v1407
    %v1436 = vsub.f32 %v1388, %v1409
    %v1437 = vsub.f32 %v1389, %v1411
    %v1438 = vsub.f32 %v1390, %v1413
    %v1439 = vsub.f32 %v1391, %v1415
    %v1440 = vsub.f32 %v1392, %v1417
    %v1441 = vsub.f32 %v1393, %v1419
    %v1442 = vsub.f32 %v1394, %v1421
    %v1443 = vsub.f32 %v1395, %v1423
    %v1444 = vsub.f32 %v1396, %v1425
    %v1445 = vsub.f32 %v1397, %v1427
    %v1446 = vsub.f32 %v1398, %v1429
    %v1447 = vsub.f32 %v1399, %v1431
    %v1448 = vmul.f32 %v1432, 1.442695
    %v1449 = vpow.pop %v1448
    %v1450 = vmul.f32 %v1433, 1.442695
    %v1451 = vpow.pop %v1450
    %v1452 = vmul.f32 %v1434, 1.442695
    %v1453 = vpow.pop %v1452
    %v1454 = vmul.f32 %v1435, 1.442695
    %v1455 = vpow.pop %v1454
    %v1456 = vmul.f32 %v1436, 1.442695
    %v1457 = vpow.pop %v1456
    %v1458 = vmul.f32 %v1437, 1.442695
    %v1459 = vpow.pop %v1458
    %v1460 = vmul.f32 %v1438, 1.442695
    %v1461 = vpow.pop %v1460
    %v1462 = vmul.f32 %v1439, 1.442695
    %v1463 = vpow.pop %v1462
    %v1464 = vmul.f32 %v1440, 1.442695
    %v1465 = vpow.pop %v1464
    %v1466 = vmul.f32 %v1441, 1.442695
    %v1467 = vpow.pop %v1466
    %v1468 = vmul.f32 %v1442, 1.442695
    %v1469 = vpow.pop %v1468
    %v1470 = vmul.f32 %v1443, 1.442695
    %v1471 = vpow.pop %v1470
    %v1472 = vmul.f32 %v1444, 1.442695
    %v1473 = vpow.pop %v1472
    %v1474 = vmul.f32 %v1445, 1.442695
    %v1475 = vpow.pop %v1474
    %v1476 = vmul.f32 %v1446, 1.442695
    %v1477 = vpow.pop %v1476
    %v1478 = vmul.f32 %v1447, 1.442695
    %v1479 = vpow.pop %v1478
    %1480 = vadd.xlane.f32.xlu0 %v1449
    %v1481 = vpop.xlane.xlu0 %1480
    %1482 = vadd.xlane.f32.xlu0 %v1451
    %v1483 = vpop.xlane.xlu0 %1482
    %1484 = vadd.xlane.f32.xlu0 %v1453
    %v1485 = vpop.xlane.xlu0 %1484
    %1486 = vadd.xlane.f32.xlu0 %v1455
    %v1487 = vpop.xlane.xlu0 %1486
    %1488 = vadd.xlane.f32.xlu0 %v1457
    %v1489 = vpop.xlane.xlu0 %1488
    %1490 = vadd.xlane.f32.xlu0 %v1459
    %v1491 = vpop.xlane.xlu0 %1490
    %1492 = vadd.xlane.f32.xlu0 %v1461
    %v1493 = vpop.xlane.xlu0 %1492
    %1494 = vadd.xlane.f32.xlu0 %v1463
    %v1495 = vpop.xlane.xlu0 %1494
    %1496 = vadd.xlane.f32.xlu0 %v1465
    %v1497 = vpop.xlane.xlu0 %1496
    %1498 = vadd.xlane.f32.xlu0 %v1467
    %v1499 = vpop.xlane.xlu0 %1498
    %1500 = vadd.xlane.f32.xlu0 %v1469
    %v1501 = vpop.xlane.xlu0 %1500
    %1502 = vadd.xlane.f32.xlu0 %v1471
    %v1503 = vpop.xlane.xlu0 %1502
    %1504 = vadd.xlane.f32.xlu0 %v1473
    %v1505 = vpop.xlane.xlu0 %1504
    %1506 = vadd.xlane.f32.xlu0 %v1475
    %v1507 = vpop.xlane.xlu0 %1506
    %1508 = vadd.xlane.f32.xlu0 %v1477
    %v1509 = vpop.xlane.xlu0 %1508
    %1510 = vadd.xlane.f32.xlu0 %v1479
    %v1511 = vpop.xlane.xlu0 %1510
    %v1512 = vrcp.pop %v1481
    %v1513 = vrcp.pop %v1483
    %v1514 = vrcp.pop %v1485
    %v1515 = vrcp.pop %v1487
    %v1516 = vrcp.pop %v1489
    %v1517 = vrcp.pop %v1491
    %v1518 = vrcp.pop %v1493
    %v1519 = vrcp.pop %v1495
    %v1520 = vrcp.pop %v1497
    %v1521 = vrcp.pop %v1499
    %v1522 = vrcp.pop %v1501
    %v1523 = vrcp.pop %v1503
    %v1524 = vrcp.pop %v1505
    %v1525 = vrcp.pop %v1507
    %v1526 = vrcp.pop %v1509
    %v1527 = vrcp.pop %v1511
    %v1528 = vmul.f32 %v1512, 0.25
    %v1529 = vmul.f32 %v1513, 0.25
    %v1530 = vmul.f32 %v1514, 0.25
    %v1531 = vmul.f32 %v1515, 0.25
    %v1532 = vmul.f32 %v1516, 0.25
    %v1533 = vmul.f32 %v1517, 0.25
    %v1534 = vmul.f32 %v1518, 0.25
    %v1535 = vmul.f32 %v1519, 0.25
    %v1536 = vmul.f32 %v1520, 0.25
    %v1537 = vmul.f32 %v1521, 0.25
    %v1538 = vmul.f32 %v1522, 0.25
    %v1539 = vmul.f32 %v1523, 0.25
    %v1540 = vmul.f32 %v1524, 0.25
    %v1541 = vmul.f32 %v1525, 0.25
    %v1542 = vmul.f32 %v1526, 0.25
    %v1543 = vmul.f32 %v1527, 0.25
    %v1544 = vmul.f32 %v1449, %v1528
    %v1545 = vmul.f32 %v1451, %v1529
    %v1546 = vmul.f32 %v1453, %v1530
    %v1547 = vmul.f32 %v1455, %v1531
    %v1548 = vmul.f32 %v1457, %v1532
    %v1549 = vmul.f32 %v1459, %v1533
    %v1550 = vmul.f32 %v1461, %v1534
    %v1551 = vmul.f32 %v1463, %v1535
    %v1552 = vmul.f32 %v1465, %v1536
    %v1553 = vmul.f32 %v1467, %v1537
    %v1554 = vmul.f32 %v1469, %v1538
    %v1555 = vmul.f32 %v1471, %v1539
    %v1556 = vmul.f32 %v1473, %v1540
    %v1557 = vmul.f32 %v1475, %v1541
    %v1558 = vmul.f32 %v1477, %v1542
    %v1559 = vmul.f32 %v1479, %v1543
    %1560 = vmatpush.msra.mxu0 %v383
    %1561 = vmatpush.msra.mxu0 %v380
    %1562 = vmatpush.msra.mxu0 %v377
    %1563 = vmatpush.msra.mxu0 %v374
    %1564 = vmatpush.msra.mxu0 %v371
    %1565 = vmatpush.msra.mxu0 %v368
    %1566 = vmatpush.msra.mxu0 %v365
    %1567 = vmatpush.msra.mxu0 %v362
    %1568 = vmatpush.msra.mxu0 %v359
    %1569 = vmatpush.msra.mxu0 %v356
    %1570 = vmatpush.msra.mxu0 %v353
    %1571 = vmatpush.msra.mxu0 %v350
    %1572 = vmatpush.msra.mxu0 %v347
    %1573 = vmatpush.msra.mxu0 %v344
    %1574 = vmatpush.msra.mxu0 %v341
    %1575 = vmatpush.msra.mxu0 %v338
    %1576 = vmatmul.f32.gmra.mxu0 %v1544
    %v1577 = vpop.f32.mrf.mxu0
    %v1578 = vadd.f32 0.0, %v1577
    %1579 = vmatmul.f32.gmra.mxu0 %v1545
    %v1580 = vpop.f32.mrf.mxu0
    %v1581 = vadd.f32 0.0, %v1580
    %1582 = vmatmul.f32.gmra.mxu0 %v1546
    %v1583 = vpop.f32.mrf.mxu0
    %v1584 = vadd.f32 0.0, %v1583
    %1585 = vmatmul.f32.gmra.mxu0 %v1547
    %v1586 = vpop.f32.mrf.mxu0
    %v1587 = vadd.f32 0.0, %v1586
    %1588 = vmatmul.f32.gmra.mxu0 %v1548
    %v1589 = vpop.f32.mrf.mxu0
    %v1590 = vadd.f32 0.0, %v1589
    %1591 = vmatmul.f32.gmra.mxu0 %v1549
    %v1592 = vpop.f32.mrf.mxu0
    %v1593 = vadd.f32 0.0, %v1592
    %1594 = vmatmul.f32.gmra.mxu0 %v1550
    %v1595 = vpop.f32.mrf.mxu0
    %v1596 = vadd.f32 0.0, %v1595
    %1597 = vmatmul.f32.gmra.mxu0 %v1551
    %v1598 = vpop.f32.mrf.mxu0
    %v1599 = vadd.f32 0.0, %v1598
    %1600 = vmatmul.f32.gmra.mxu0 %v1552
    %v1601 = vpop.f32.mrf.mxu0
    %v1602 = vadd.f32 0.0, %v1601
    %1603 = vmatmul.f32.gmra.mxu0 %v1553
    %v1604 = vpop.f32.mrf.mxu0
    %v1605 = vadd.f32 0.0, %v1604
    %1606 = vmatmul.f32.gmra.mxu0 %v1554
    %v1607 = vpop.f32.mrf.mxu0
    %v1608 = vadd.f32 0.0, %v1607
    %1609 = vmatmul.f32.gmra.mxu0 %v1555
    %v1610 = vpop.f32.mrf.mxu0
    %v1611 = vadd.f32 0.0, %v1610
    %1612 = vmatmul.f32.gmra.mxu0 %v1556
    %v1613 = vpop.f32.mrf.mxu0
    %v1614 = vadd.f32 0.0, %v1613
    %1615 = vmatmul.f32.gmra.mxu0 %v1557
    %v1616 = vpop.f32.mrf.mxu0
    %v1617 = vadd.f32 0.0, %v1616
    %1618 = vmatmul.f32.gmra.mxu0 %v1558
    %v1619 = vpop.f32.mrf.mxu0
    %v1620 = vadd.f32 0.0, %v1619
    %1621 = vmatmul.f32.gmra.mxu0 %v1559
    %v1622 = vpop.f32.mrf.mxu0
    %v1623 = vadd.f32 0.0, %v1622
    %1624 = vdwg.mxu0
    %v1625 = vadd.f32 %v1224, %v1578
    %v1626 = vadd.f32 %v1227, %v1581
    %v1627 = vadd.f32 %v1230, %v1584
    %v1628 = vadd.f32 %v1233, %v1587
    %v1629 = vadd.f32 %v1236, %v1590
    %v1630 = vadd.f32 %v1239, %v1593
    %v1631 = vadd.f32 %v1242, %v1596
    %v1632 = vadd.f32 %v1245, %v1599
    %v1633 = vadd.f32 %v1248, %v1602
    %v1634 = vadd.f32 %v1251, %v1605
    %v1635 = vadd.f32 %v1254, %v1608
    %v1636 = vadd.f32 %v1257, %v1611
    %v1637 = vadd.f32 %v1260, %v1614
    %v1638 = vadd.f32 %v1263, %v1617
    %v1639 = vadd.f32 %v1266, %v1620
    %v1640 = vadd.f32 %v1269, %v1623
    %1641 = vset.pattern.permute.xlu0 7
    %1642 = vperm.xlu0 %1641, %v468
    %v1643 = vpop.permute.xlu0 %1642
    %1645 = vset.pattern.permute.xlu0 7
    %1646 = vperm.xlu0 %1645, %v471
    %v1647 = vpop.permute.xlu0 %1646
    %1649 = vset.pattern.permute.xlu0 7
    %1650 = vperm.xlu0 %1649, %v474
    %v1651 = vpop.permute.xlu0 %1650
    %1653 = vset.pattern.permute.xlu0 7
    %1654 = vperm.xlu0 %1653, %v477
    %v1655 = vpop.permute.xlu0 %1654
    %1657 = vset.pattern.permute.xlu0 7
    %1658 = vperm.xlu0 %1657, %v480
    %v1659 = vpop.permute.xlu0 %1658
    %1661 = vset.pattern.permute.xlu0 7
    %1662 = vperm.xlu0 %1661, %v483
    %v1663 = vpop.permute.xlu0 %1662
    %1665 = vset.pattern.permute.xlu0 7
    %1666 = vperm.xlu0 %1665, %v486
    %v1667 = vpop.permute.xlu0 %1666
    %1669 = vset.pattern.permute.xlu0 7
    %1670 = vperm.xlu0 %1669, %v489
    %v1671 = vpop.permute.xlu0 %1670
    %1673 = vset.pattern.permute.xlu0 7
    %1674 = vperm.xlu0 %1673, %v492
    %v1675 = vpop.permute.xlu0 %1674
    %1677 = vset.pattern.permute.xlu0 7
    %1678 = vperm.xlu0 %1677, %v495
    %v1679 = vpop.permute.xlu0 %1678
    %1681 = vset.pattern.permute.xlu0 7
    %1682 = vperm.xlu0 %1681, %v498
    %v1683 = vpop.permute.xlu0 %1682
    %1685 = vset.pattern.permute.xlu0 7
    %1686 = vperm.xlu0 %1685, %v501
    %v1687 = vpop.permute.xlu0 %1686
    %1689 = vset.pattern.permute.xlu0 7
    %1690 = vperm.xlu0 %1689, %v504
    %v1691 = vpop.permute.xlu0 %1690
    %1693 = vset.pattern.permute.xlu0 7
    %1694 = vperm.xlu0 %1693, %v507
    %v1695 = vpop.permute.xlu0 %1694
    %1697 = vset.pattern.permute.xlu0 7
    %1698 = vperm.xlu0 %1697, %v510
    %v1699 = vpop.permute.xlu0 %1698
    %1701 = vset.pattern.permute.xlu0 7
    %1702 = vperm.xlu0 %1701, %v513
    %v1703 = vpop.permute.xlu0 %1702
    %v1705 = vperm.slane %v531, 3
    %v1706 = vadd.f32 %v1643, %v1705
    %v1707 = vadd.f32 %v1647, %v1705
    %v1708 = vadd.f32 %v1651, %v1705
    %v1709 = vadd.f32 %v1655, %v1705
    %v1710 = vadd.f32 %v1659, %v1705
    %v1711 = vadd.f32 %v1663, %v1705
    %v1712 = vadd.f32 %v1667, %v1705
    %v1713 = vadd.f32 %v1671, %v1705
    %v1714 = vadd.f32 %v1675, %v1705
    %v1715 = vadd.f32 %v1679, %v1705
    %v1716 = vadd.f32 %v1683, %v1705
    %v1717 = vadd.f32 %v1687, %v1705
    %v1718 = vadd.f32 %v1691, %v1705
    %v1719 = vadd.f32 %v1695, %v1705
    %v1720 = vadd.f32 %v1699, %v1705
    %v1721 = vadd.f32 %v1703, %v1705
    %v1722 = vmul.f32 %v1706, 0.2
    %v1723 = vmul.f32 %v1707, 0.2
    %v1724 = vmul.f32 %v1708, 0.2
    %v1725 = vmul.f32 %v1709, 0.2
    %v1726 = vmul.f32 %v1710, 0.2
    %v1727 = vmul.f32 %v1711, 0.2
    %v1728 = vmul.f32 %v1712, 0.2
    %v1729 = vmul.f32 %v1713, 0.2
    %v1730 = vmul.f32 %v1714, 0.2
    %v1731 = vmul.f32 %v1715, 0.2
    %v1732 = vmul.f32 %v1716, 0.2
    %v1733 = vmul.f32 %v1717, 0.2
    %v1734 = vmul.f32 %v1718, 0.2
    %v1735 = vmul.f32 %v1719, 0.2
    %v1736 = vmul.f32 %v1720, 0.2
    %v1737 = vmul.f32 %v1721, 0.2
    %v1738 = vmax.f32 %v1706, %v1722
    %v1739 = vmax.f32 %v1707, %v1723
    %v1740 = vmax.f32 %v1708, %v1724
    %v1741 = vmax.f32 %v1709, %v1725
    %v1742 = vmax.f32 %v1710, %v1726
    %v1743 = vmax.f32 %v1711, %v1727
    %v1744 = vmax.f32 %v1712, %v1728
    %v1745 = vmax.f32 %v1713, %v1729
    %v1746 = vmax.f32 %v1714, %v1730
    %v1747 = vmax.f32 %v1715, %v1731
    %v1748 = vmax.f32 %v1716, %v1732
    %v1749 = vmax.f32 %v1717, %v1733
    %v1750 = vmax.f32 %v1718, %v1734
    %v1751 = vmax.f32 %v1719, %v1735
    %v1752 = vmax.f32 %v1720, %v1736
    %v1753 = vmax.f32 %v1721, %v1737
    %v1754 = vadd.f32 %v1738, %v93
    %v1755 = vadd.f32 %v1739, %v94
    %v1756 = vadd.f32 %v1740, %v95
    %v1757 = vadd.f32 %v1741, %v96
    %v1758 = vadd.f32 %v1742, %v97
    %v1759 = vadd.f32 %v1743, %v98
    %v1760 = vadd.f32 %v1744, %v99
    %v1761 = vadd.f32 %v1745, %v100
    %v1762 = vadd.f32 %v1746, %v101
    %v1763 = vadd.f32 %v1747, %v102
    %v1764 = vadd.f32 %v1748, %v103
    %v1765 = vadd.f32 %v1749, %v104
    %v1766 = vadd.f32 %v1750, %v105
    %v1767 = vadd.f32 %v1751, %v106
    %v1768 = vadd.f32 %v1752, %v107
    %v1769 = vadd.f32 %v1753, %v108
    %1770 = vmax.xlane.f32.xlu0 %v1754
    %v1771 = vpop.xlane.xlu0 %1770
    %1772 = vmax.xlane.f32.xlu0 %v1755
    %v1773 = vpop.xlane.xlu0 %1772
    %1774 = vmax.xlane.f32.xlu0 %v1756
    %v1775 = vpop.xlane.xlu0 %1774
    %1776 = vmax.xlane.f32.xlu0 %v1757
    %v1777 = vpop.xlane.xlu0 %1776
    %1778 = vmax.xlane.f32.xlu0 %v1758
    %v1779 = vpop.xlane.xlu0 %1778
    %1780 = vmax.xlane.f32.xlu0 %v1759
    %v1781 = vpop.xlane.xlu0 %1780
    %1782 = vmax.xlane.f32.xlu0 %v1760
    %v1783 = vpop.xlane.xlu0 %1782
    %1784 = vmax.xlane.f32.xlu0 %v1761
    %v1785 = vpop.xlane.xlu0 %1784
    %1786 = vmax.xlane.f32.xlu0 %v1762
    %v1787 = vpop.xlane.xlu0 %1786
    %1788 = vmax.xlane.f32.xlu0 %v1763
    %v1789 = vpop.xlane.xlu0 %1788
    %1790 = vmax.xlane.f32.xlu0 %v1764
    %v1791 = vpop.xlane.xlu0 %1790
    %1792 = vmax.xlane.f32.xlu0 %v1765
    %v1793 = vpop.xlane.xlu0 %1792
    %1794 = vmax.xlane.f32.xlu0 %v1766
    %v1795 = vpop.xlane.xlu0 %1794
    %1796 = vmax.xlane.f32.xlu0 %v1767
    %v1797 = vpop.xlane.xlu0 %1796
    %1798 = vmax.xlane.f32.xlu0 %v1768
    %v1799 = vpop.xlane.xlu0 %1798
    %1800 = vmax.xlane.f32.xlu0 %v1769
    %v1801 = vpop.xlane.xlu0 %1800
    %v1802 = vsub.f32 %v1754, %v1771
    %v1803 = vsub.f32 %v1755, %v1773
    %v1804 = vsub.f32 %v1756, %v1775
    %v1805 = vsub.f32 %v1757, %v1777
    %v1806 = vsub.f32 %v1758, %v1779
    %v1807 = vsub.f32 %v1759, %v1781
    %v1808 = vsub.f32 %v1760, %v1783
    %v1809 = vsub.f32 %v1761, %v1785
    %v1810 = vsub.f32 %v1762, %v1787
    %v1811 = vsub.f32 %v1763, %v1789
    %v1812 = vsub.f32 %v1764, %v1791
    %v1813 = vsub.f32 %v1765, %v1793
    %v1814 = vsub.f32 %v1766, %v1795
    %v1815 = vsub.f32 %v1767, %v1797
    %v1816 = vsub.f32 %v1768, %v1799
    %v1817 = vsub.f32 %v1769, %v1801
    %v1818 = vmul.f32 %v1802, 1.442695
    %v1819 = vpow.pop %v1818
    %v1820 = vmul.f32 %v1803, 1.442695
    %v1821 = vpow.pop %v1820
    %v1822 = vmul.f32 %v1804, 1.442695
    %v1823 = vpow.pop %v1822
    %v1824 = vmul.f32 %v1805, 1.442695
    %v1825 = vpow.pop %v1824
    %v1826 = vmul.f32 %v1806, 1.442695
    %v1827 = vpow.pop %v1826
    %v1828 = vmul.f32 %v1807, 1.442695
    %v1829 = vpow.pop %v1828
    %v1830 = vmul.f32 %v1808, 1.442695
    %v1831 = vpow.pop %v1830
    %v1832 = vmul.f32 %v1809, 1.442695
    %v1833 = vpow.pop %v1832
    %v1834 = vmul.f32 %v1810, 1.442695
    %v1835 = vpow.pop %v1834
    %v1836 = vmul.f32 %v1811, 1.442695
    %v1837 = vpow.pop %v1836
    %v1838 = vmul.f32 %v1812, 1.442695
    %v1839 = vpow.pop %v1838
    %v1840 = vmul.f32 %v1813, 1.442695
    %v1841 = vpow.pop %v1840
    %v1842 = vmul.f32 %v1814, 1.442695
    %v1843 = vpow.pop %v1842
    %v1844 = vmul.f32 %v1815, 1.442695
    %v1845 = vpow.pop %v1844
    %v1846 = vmul.f32 %v1816, 1.442695
    %v1847 = vpow.pop %v1846
    %v1848 = vmul.f32 %v1817, 1.442695
    %v1849 = vpow.pop %v1848
    %1850 = vadd.xlane.f32.xlu0 %v1819
    %v1851 = vpop.xlane.xlu0 %1850
    %1852 = vadd.xlane.f32.xlu0 %v1821
    %v1853 = vpop.xlane.xlu0 %1852
    %1854 = vadd.xlane.f32.xlu0 %v1823
    %v1855 = vpop.xlane.xlu0 %1854
    %1856 = vadd.xlane.f32.xlu0 %v1825
    %v1857 = vpop.xlane.xlu0 %1856
    %1858 = vadd.xlane.f32.xlu0 %v1827
    %v1859 = vpop.xlane.xlu0 %1858
    %1860 = vadd.xlane.f32.xlu0 %v1829
    %v1861 = vpop.xlane.xlu0 %1860
    %1862 = vadd.xlane.f32.xlu0 %v1831
    %v1863 = vpop.xlane.xlu0 %1862
    %1864 = vadd.xlane.f32.xlu0 %v1833
    %v1865 = vpop.xlane.xlu0 %1864
    %1866 = vadd.xlane.f32.xlu0 %v1835
    %v1867 = vpop.xlane.xlu0 %1866
    %1868 = vadd.xlane.f32.xlu0 %v1837
    %v1869 = vpop.xlane.xlu0 %1868
    %1870 = vadd.xlane.f32.xlu0 %v1839
    %v1871 = vpop.xlane.xlu0 %1870
    %1872 = vadd.xlane.f32.xlu0 %v1841
    %v1873 = vpop.xlane.xlu0 %1872
    %1874 = vadd.xlane.f32.xlu0 %v1843
    %v1875 = vpop.xlane.xlu0 %1874
    %1876 = vadd.xlane.f32.xlu0 %v1845
    %v1877 = vpop.xlane.xlu0 %1876
    %1878 = vadd.xlane.f32.xlu0 %v1847
    %v1879 = vpop.xlane.xlu0 %1878
    %1880 = vadd.xlane.f32.xlu0 %v1849
    %v1881 = vpop.xlane.xlu0 %1880
    %v1882 = vrcp.pop %v1851
    %v1883 = vrcp.pop %v1853
    %v1884 = vrcp.pop %v1855
    %v1885 = vrcp.pop %v1857
    %v1886 = vrcp.pop %v1859
    %v1887 = vrcp.pop %v1861
    %v1888 = vrcp.pop %v1863
    %v1889 = vrcp.pop %v1865
    %v1890 = vrcp.pop %v1867
    %v1891 = vrcp.pop %v1869
    %v1892 = vrcp.pop %v1871
    %v1893 = vrcp.pop %v1873
    %v1894 = vrcp.pop %v1875
    %v1895 = vrcp.pop %v1877
    %v1896 = vrcp.pop %v1879
    %v1897 = vrcp.pop %v1881
    %v1898 = vmul.f32 %v1882, 0.25
    %v1899 = vmul.f32 %v1883, 0.25
    %v1900 = vmul.f32 %v1884, 0.25
    %v1901 = vmul.f32 %v1885, 0.25
    %v1902 = vmul.f32 %v1886, 0.25
    %v1903 = vmul.f32 %v1887, 0.25
    %v1904 = vmul.f32 %v1888, 0.25
    %v1905 = vmul.f32 %v1889, 0.25
    %v1906 = vmul.f32 %v1890, 0.25
    %v1907 = vmul.f32 %v1891, 0.25
    %v1908 = vmul.f32 %v1892, 0.25
    %v1909 = vmul.f32 %v1893, 0.25
    %v1910 = vmul.f32 %v1894, 0.25
    %v1911 = vmul.f32 %v1895, 0.25
    %v1912 = vmul.f32 %v1896, 0.25
    %v1913 = vmul.f32 %v1897, 0.25
    %v1914 = vmul.f32 %v1819, %v1898
    %v1915 = vmul.f32 %v1821, %v1899
    %v1916 = vmul.f32 %v1823, %v1900
    %v1917 = vmul.f32 %v1825, %v1901
    %v1918 = vmul.f32 %v1827, %v1902
    %v1919 = vmul.f32 %v1829, %v1903
    %v1920 = vmul.f32 %v1831, %v1904
    %v1921 = vmul.f32 %v1833, %v1905
    %v1922 = vmul.f32 %v1835, %v1906
    %v1923 = vmul.f32 %v1837, %v1907
    %v1924 = vmul.f32 %v1839, %v1908
    %v1925 = vmul.f32 %v1841, %v1909
    %v1926 = vmul.f32 %v1843, %v1910
    %v1927 = vmul.f32 %v1845, %v1911
    %v1928 = vmul.f32 %v1847, %v1912
    %v1929 = vmul.f32 %v1849, %v1913
    %1930 = vmatpush.msra.mxu0 %v448
    %1931 = vmatpush.msra.mxu0 %v445
    %1932 = vmatpush.msra.mxu0 %v442
    %1933 = vmatpush.msra.mxu0 %v439
    %1934 = vmatpush.msra.mxu0 %v436
    %1935 = vmatpush.msra.mxu0 %v433
    %1936 = vmatpush.msra.mxu0 %v430
    %1937 = vmatpush.msra.mxu0 %v427
    %1938 = vmatpush.msra.mxu0 %v424
    %1939 = vmatpush.msra.mxu0 %v421
    %1940 = vmatpush.msra.mxu0 %v418
    %1941 = vmatpush.msra.mxu0 %v415
    %1942 = vmatpush.msra.mxu0 %v412
    %1943 = vmatpush.msra.mxu0 %v409
    %1944 = vmatpush.msra.mxu0 %v406
    %1945 = vmatpush.msra.mxu0 %v403
    %1946 = vmatmul.f32.gmra.mxu0 %v1914
    %v1947 = vpop.f32.mrf.mxu0
    %v1948 = vadd.f32 0.0, %v1947
    %1949 = vmatmul.f32.gmra.mxu0 %v1915
    %v1950 = vpop.f32.mrf.mxu0
    %v1951 = vadd.f32 0.0, %v1950
    %1952 = vmatmul.f32.gmra.mxu0 %v1916
    %v1953 = vpop.f32.mrf.mxu0
    %v1954 = vadd.f32 0.0, %v1953
    %1955 = vmatmul.f32.gmra.mxu0 %v1917
    %v1956 = vpop.f32.mrf.mxu0
    %v1957 = vadd.f32 0.0, %v1956
    %1958 = vmatmul.f32.gmra.mxu0 %v1918
    %v1959 = vpop.f32.mrf.mxu0
    %v1960 = vadd.f32 0.0, %v1959
    %1961 = vmatmul.f32.gmra.mxu0 %v1919
    %v1962 = vpop.f32.mrf.mxu0
    %v1963 = vadd.f32 0.0, %v1962
    %1964 = vmatmul.f32.gmra.mxu0 %v1920
    %v1965 = vpop.f32.mrf.mxu0
    %v1966 = vadd.f32 0.0, %v1965
    %1967 = vmatmul.f32.gmra.mxu0 %v1921
    %v1968 = vpop.f32.mrf.mxu0
    %v1969 = vadd.f32 0.0, %v1968
    %1970 = vmatmul.f32.gmra.mxu0 %v1922
    %v1971 = vpop.f32.mrf.mxu0
    %v1972 = vadd.f32 0.0, %v1971
    %1973 = vmatmul.f32.gmra.mxu0 %v1923
    %v1974 = vpop.f32.mrf.mxu0
    %v1975 = vadd.f32 0.0, %v1974
    %1976 = vmatmul.f32.gmra.mxu0 %v1924
    %v1977 = vpop.f32.mrf.mxu0
    %v1978 = vadd.f32 0.0, %v1977
    %1979 = vmatmul.f32.gmra.mxu0 %v1925
    %v1980 = vpop.f32.mrf.mxu0
    %v1981 = vadd.f32 0.0, %v1980
    %1982 = vmatmul.f32.gmra.mxu0 %v1926
    %v1983 = vpop.f32.mrf.mxu0
    %v1984 = vadd.f32 0.0, %v1983
    %1985 = vmatmul.f32.gmra.mxu0 %v1927
    %v1986 = vpop.f32.mrf.mxu0
    %v1987 = vadd.f32 0.0, %v1986
    %1988 = vmatmul.f32.gmra.mxu0 %v1928
    %v1989 = vpop.f32.mrf.mxu0
    %v1990 = vadd.f32 0.0, %v1989
    %1991 = vmatmul.f32.gmra.mxu0 %v1929
    %v1992 = vpop.f32.mrf.mxu0
    %v1993 = vadd.f32 0.0, %v1992
    %1994 = vdwg.mxu0
    %v1995 = vadd.f32 %v1625, %v1948
    %v1996 = vadd.f32 %v1626, %v1951
    %v1997 = vadd.f32 %v1627, %v1954
    %v1998 = vadd.f32 %v1628, %v1957
    %v1999 = vadd.f32 %v1629, %v1960
    %v2000 = vadd.f32 %v1630, %v1963
    %v2001 = vadd.f32 %v1631, %v1966
    %v2002 = vadd.f32 %v1632, %v1969
    %v2003 = vadd.f32 %v1633, %v1972
    %v2004 = vadd.f32 %v1634, %v1975
    %v2005 = vadd.f32 %v1635, %v1978
    %v2006 = vadd.f32 %v1636, %v1981
    %v2007 = vadd.f32 %v1637, %v1984
    %v2008 = vadd.f32 %v1638, %v1987
    %v2009 = vadd.f32 %v1639, %v1990
    %v2010 = vadd.f32 %v1640, %v1993
    %v2012 = vperm.slane %v189, 0
    %v2014 = vadd.f32 %v1995, %v2012
    %v2015 = vadd.f32 %v1996, %v2012
    %v2016 = vadd.f32 %v1997, %v2012
    %v2017 = vadd.f32 %v1998, %v2012
    %v2018 = vadd.f32 %v1999, %v2012
    %v2019 = vadd.f32 %v2000, %v2012
    %v2020 = vadd.f32 %v2001, %v2012
    %v2021 = vadd.f32 %v2002, %v2012
    %v2022 = vadd.f32 %v2003, %v2012
    %v2023 = vadd.f32 %v2004, %v2012
    %v2024 = vadd.f32 %v2005, %v2012
    %v2025 = vadd.f32 %v2006, %v2012
    %v2026 = vadd.f32 %v2007, %v2012
    %v2027 = vadd.f32 %v2008, %v2012
    %v2028 = vadd.f32 %v2009, %v2012
    %v2029 = vadd.f32 %v2010, %v2012
    %v2030 = vld [vmem:[%s6] sm:$0xff]
    %v2031 = vld [vmem:[%s6 + $0x8] sm:$0xff]
    %v2032 = vld [vmem:[%s6 + $0x10] sm:$0xff]
    %v2033 = vld [vmem:[%s6 + $0x18] sm:$0xff]
    %v2034 = vld [vmem:[%s6 + $0x20] sm:$0xff]
    %v2035 = vld [vmem:[%s6 + $0x28] sm:$0xff]
    %v2036 = vld [vmem:[%s6 + $0x30] sm:$0xff]
    %v2037 = vld [vmem:[%s6 + $0x38] sm:$0xff]
    %v2038 = vld [vmem:[%s6 + $0x40] sm:$0xff]
    %v2039 = vld [vmem:[%s6 + $0x48] sm:$0xff]
    %v2040 = vld [vmem:[%s6 + $0x50] sm:$0xff]
    %v2041 = vld [vmem:[%s6 + $0x58] sm:$0xff]
    %v2042 = vld [vmem:[%s6 + $0x60] sm:$0xff]
    %v2043 = vld [vmem:[%s6 + $0x68] sm:$0xff]
    %v2044 = vld [vmem:[%s6 + $0x70] sm:$0xff]
    %v2045 = vld [vmem:[%s6 + $0x78] sm:$0xff]
    %v2046 = vld [vmem:[%s6 + $0x80] sm:$0xff]
    %v2047 = vld [vmem:[%s6 + $0x88] sm:$0xff]
    %v2048 = vld [vmem:[%s6 + $0x90] sm:$0xff]
    %v2049 = vld [vmem:[%s6 + $0x98] sm:$0xff]
    %v2050 = vld [vmem:[%s6 + $0xa0] sm:$0xff]
    %v2051 = vld [vmem:[%s6 + $0xa8] sm:$0xff]
    %v2052 = vld [vmem:[%s6 + $0xb0] sm:$0xff]
    %v2053 = vld [vmem:[%s6 + $0xb8] sm:$0xff]
    %v2054 = vld [vmem:[%s6 + $0xc0] sm:$0xff]
    %v2055 = vld [vmem:[%s6 + $0xc8] sm:$0xff]
    %v2056 = vld [vmem:[%s6 + $0xd0] sm:$0xff]
    %v2057 = vld [vmem:[%s6 + $0xd8] sm:$0xff]
    %v2058 = vld [vmem:[%s6 + $0xe0] sm:$0xff]
    %v2059 = vld [vmem:[%s6 + $0xe8] sm:$0xff]
    %v2060 = vld [vmem:[%s6 + $0xf0] sm:$0xff]
    %v2061 = vld [vmem:[%s6 + $0xf8] sm:$0xff]
    %v2062 = vld [vmem:[%s6 + $0x100] sm:$0xff]
    %v2063 = vld [vmem:[%s6 + $0x108] sm:$0xff]
    %v2064 = vld [vmem:[%s6 + $0x110] sm:$0xff]
    %v2065 = vld [vmem:[%s6 + $0x118] sm:$0xff]
    %v2066 = vld [vmem:[%s6 + $0x120] sm:$0xff]
    %v2067 = vld [vmem:[%s6 + $0x128] sm:$0xff]
    %v2068 = vld [vmem:[%s6 + $0x130] sm:$0xff]
    %v2069 = vld [vmem:[%s6 + $0x138] sm:$0xff]
    %v2070 = vld [vmem:[%s6 + $0x140] sm:$0xff]
    %v2071 = vld [vmem:[%s6 + $0x148] sm:$0xff]
    %v2072 = vld [vmem:[%s6 + $0x150] sm:$0xff]
    %v2073 = vld [vmem:[%s6 + $0x158] sm:$0xff]
    %v2074 = vld [vmem:[%s6 + $0x160] sm:$0xff]
    %v2075 = vld [vmem:[%s6 + $0x168] sm:$0xff]
    %v2076 = vld [vmem:[%s6 + $0x170] sm:$0xff]
    %v2077 = vld [vmem:[%s6 + $0x178] sm:$0xff]
    %v2078 = vld [vmem:[%s6 + $0x180] sm:$0xff]
    %v2079 = vld [vmem:[%s6 + $0x188] sm:$0xff]
    %v2080 = vld [vmem:[%s6 + $0x190] sm:$0xff]
    %v2081 = vld [vmem:[%s6 + $0x198] sm:$0xff]
    %v2082 = vld [vmem:[%s6 + $0x1a0] sm:$0xff]
    %v2083 = vld [vmem:[%s6 + $0x1a8] sm:$0xff]
    %v2084 = vld [vmem:[%s6 + $0x1b0] sm:$0xff]
    %v2085 = vld [vmem:[%s6 + $0x1b8] sm:$0xff]
    %v2086 = vld [vmem:[%s6 + $0x1c0] sm:$0xff]
    %v2087 = vld [vmem:[%s6 + $0x1c8] sm:$0xff]
    %v2088 = vld [vmem:[%s6 + $0x1d0] sm:$0xff]
    %v2089 = vld [vmem:[%s6 + $0x1d8] sm:$0xff]
    %v2090 = vld [vmem:[%s6 + $0x1e0] sm:$0xff]
    %v2091 = vld [vmem:[%s6 + $0x1e8] sm:$0xff]
    %v2092 = vld [vmem:[%s6 + $0x1f0] sm:$0xff]
    %v2093 = vld [vmem:[%s6 + $0x1f8] sm:$0xff]
    %v2094 = vld [vmem:[%s7] sm:$0xff]
    %v2095 = vld [vmem:[%s7 + $0x8] sm:$0xff]
    %v2096 = vld [vmem:[%s7 + $0x10] sm:$0xff]
    %v2097 = vld [vmem:[%s7 + $0x18] sm:$0xff]
    %v2098 = vld [vmem:[%s7 + $0x20] sm:$0xff]
    %v2099 = vld [vmem:[%s7 + $0x28] sm:$0xff]
    %v2100 = vld [vmem:[%s7 + $0x30] sm:$0xff]
    %v2101 = vld [vmem:[%s7 + $0x38] sm:$0xff]
    %v2102 = vld [vmem:[%s7 + $0x40] sm:$0xff]
    %v2103 = vld [vmem:[%s7 + $0x48] sm:$0xff]
    %v2104 = vld [vmem:[%s7 + $0x50] sm:$0xff]
    %v2105 = vld [vmem:[%s7 + $0x58] sm:$0xff]
    %v2106 = vld [vmem:[%s7 + $0x60] sm:$0xff]
    %v2107 = vld [vmem:[%s7 + $0x68] sm:$0xff]
    %v2108 = vld [vmem:[%s7 + $0x70] sm:$0xff]
    %v2109 = vld [vmem:[%s7 + $0x78] sm:$0xff]
    %v2110 = vld [vmem:[%s8] sm:$0x1]
    %2111 = vmatpush.msra.mxu0 %v2090
    %2112 = vmatpush.msra.mxu0 %v2086
    %2113 = vmatpush.msra.mxu0 %v2082
    %2114 = vmatpush.msra.mxu0 %v2078
    %2115 = vmatpush.msra.mxu0 %v2074
    %2116 = vmatpush.msra.mxu0 %v2070
    %2117 = vmatpush.msra.mxu0 %v2066
    %2118 = vmatpush.msra.mxu0 %v2062
    %2119 = vmatpush.msra.mxu0 %v2058
    %2120 = vmatpush.msra.mxu0 %v2054
    %2121 = vmatpush.msra.mxu0 %v2050
    %2122 = vmatpush.msra.mxu0 %v2046
    %2123 = vmatpush.msra.mxu0 %v2042
    %2124 = vmatpush.msra.mxu0 %v2038
    %2125 = vmatpush.msra.mxu0 %v2034
    %2126 = vmatpush.msra.mxu0 %v2030
    %2127 = vmatmul.f32.gmra.mxu0 %v2014
    %v2128 = vpop.f32.mrf.mxu0
    %v2129 = vadd.f32 0.0, %v2128
    %2130 = vmatmul.f32.gmra.mxu0 %v2015
    %v2131 = vpop.f32.mrf.mxu0
    %v2132 = vadd.f32 0.0, %v2131
    %2133 = vmatmul.f32.gmra.mxu0 %v2016
    %v2134 = vpop.f32.mrf.mxu0
    %v2135 = vadd.f32 0.0, %v2134
    %2136 = vmatmul.f32.gmra.mxu0 %v2017
    %v2137 = vpop.f32.mrf.mxu0
    %v2138 = vadd.f32 0.0, %v2137
    %2139 = vmatmul.f32.gmra.mxu0 %v2018
    %v2140 = vpop.f32.mrf.mxu0
    %v2141 = vadd.f32 0.0, %v2140
    %2142 = vmatmul.f32.gmra.mxu0 %v2019
    %v2143 = vpop.f32.mrf.mxu0
    %v2144 = vadd.f32 0.0, %v2143
    %2145 = vmatmul.f32.gmra.mxu0 %v2020
    %v2146 = vpop.f32.mrf.mxu0
    %v2147 = vadd.f32 0.0, %v2146
    %2148 = vmatmul.f32.gmra.mxu0 %v2021
    %v2149 = vpop.f32.mrf.mxu0
    %v2150 = vadd.f32 0.0, %v2149
    %2151 = vmatmul.f32.gmra.mxu0 %v2022
    %v2152 = vpop.f32.mrf.mxu0
    %v2153 = vadd.f32 0.0, %v2152
    %2154 = vmatmul.f32.gmra.mxu0 %v2023
    %v2155 = vpop.f32.mrf.mxu0
    %v2156 = vadd.f32 0.0, %v2155
    %2157 = vmatmul.f32.gmra.mxu0 %v2024
    %v2158 = vpop.f32.mrf.mxu0
    %v2159 = vadd.f32 0.0, %v2158
    %2160 = vmatmul.f32.gmra.mxu0 %v2025
    %v2161 = vpop.f32.mrf.mxu0
    %v2162 = vadd.f32 0.0, %v2161
    %2163 = vmatmul.f32.gmra.mxu0 %v2026
    %v2164 = vpop.f32.mrf.mxu0
    %v2165 = vadd.f32 0.0, %v2164
    %2166 = vmatmul.f32.gmra.mxu0 %v2027
    %v2167 = vpop.f32.mrf.mxu0
    %v2168 = vadd.f32 0.0, %v2167
    %2169 = vmatmul.f32.gmra.mxu0 %v2028
    %v2170 = vpop.f32.mrf.mxu0
    %v2171 = vadd.f32 0.0, %v2170
    %2172 = vmatmul.f32.gmra.mxu0 %v2029
    %v2173 = vpop.f32.mrf.mxu0
    %v2174 = vadd.f32 0.0, %v2173
    %2175 = vdwg.mxu0
    %2176 = vmatpush.msra.mxu0 %v2091
    %2177 = vmatpush.msra.mxu0 %v2087
    %2178 = vmatpush.msra.mxu0 %v2083
    %2179 = vmatpush.msra.mxu0 %v2079
    %2180 = vmatpush.msra.mxu0 %v2075
    %2181 = vmatpush.msra.mxu0 %v2071
    %2182 = vmatpush.msra.mxu0 %v2067
    %2183 = vmatpush.msra.mxu0 %v2063
    %2184 = vmatpush.msra.mxu0 %v2059
    %2185 = vmatpush.msra.mxu0 %v2055
    %2186 = vmatpush.msra.mxu0 %v2051
    %2187 = vmatpush.msra.mxu0 %v2047
    %2188 = vmatpush.msra.mxu0 %v2043
    %2189 = vmatpush.msra.mxu0 %v2039
    %2190 = vmatpush.msra.mxu0 %v2035
    %2191 = vmatpush.msra.mxu0 %v2031
    %2192 = vmatmul.f32.gmra.mxu0 %v2014
    %v2193 = vpop.f32.mrf.mxu0
    %v2194 = vadd.f32 0.0, %v2193
    %2195 = vmatmul.f32.gmra.mxu0 %v2015
    %v2196 = vpop.f32.mrf.mxu0
    %v2197 = vadd.f32 0.0, %v2196
    %2198 = vmatmul.f32.gmra.mxu0 %v2016
    %v2199 = vpop.f32.mrf.mxu0
    %v2200 = vadd.f32 0.0, %v2199
    %2201 = vmatmul.f32.gmra.mxu0 %v2017
    %v2202 = vpop.f32.mrf.mxu0
    %v2203 = vadd.f32 0.0, %v2202
    %2204 = vmatmul.f32.gmra.mxu0 %v2018
    %v2205 = vpop.f32.mrf.mxu0
    %v2206 = vadd.f32 0.0, %v2205
    %2207 = vmatmul.f32.gmra.mxu0 %v2019
    %v2208 = vpop.f32.mrf.mxu0
    %v2209 = vadd.f32 0.0, %v2208
    %2210 = vmatmul.f32.gmra.mxu0 %v2020
    %v2211 = vpop.f32.mrf.mxu0
    %v2212 = vadd.f32 0.0, %v2211
    %2213 = vmatmul.f32.gmra.mxu0 %v2021
    %v2214 = vpop.f32.mrf.mxu0
    %v2215 = vadd.f32 0.0, %v2214
    %2216 = vmatmul.f32.gmra.mxu0 %v2022
    %v2217 = vpop.f32.mrf.mxu0
    %v2218 = vadd.f32 0.0, %v2217
    %2219 = vmatmul.f32.gmra.mxu0 %v2023
    %v2220 = vpop.f32.mrf.mxu0
    %v2221 = vadd.f32 0.0, %v2220
    %2222 = vmatmul.f32.gmra.mxu0 %v2024
    %v2223 = vpop.f32.mrf.mxu0
    %v2224 = vadd.f32 0.0, %v2223
    %2225 = vmatmul.f32.gmra.mxu0 %v2025
    %v2226 = vpop.f32.mrf.mxu0
    %v2227 = vadd.f32 0.0, %v2226
    %2228 = vmatmul.f32.gmra.mxu0 %v2026
    %v2229 = vpop.f32.mrf.mxu0
    %v2230 = vadd.f32 0.0, %v2229
    %2231 = vmatmul.f32.gmra.mxu0 %v2027
    %v2232 = vpop.f32.mrf.mxu0
    %v2233 = vadd.f32 0.0, %v2232
    %2234 = vmatmul.f32.gmra.mxu0 %v2028
    %v2235 = vpop.f32.mrf.mxu0
    %v2236 = vadd.f32 0.0, %v2235
    %2237 = vmatmul.f32.gmra.mxu0 %v2029
    %v2238 = vpop.f32.mrf.mxu0
    %v2239 = vadd.f32 0.0, %v2238
    %2240 = vdwg.mxu0
    %2241 = vmatpush.msra.mxu0 %v2092
    %2242 = vmatpush.msra.mxu0 %v2088
    %2243 = vmatpush.msra.mxu0 %v2084
    %2244 = vmatpush.msra.mxu0 %v2080
    %2245 = vmatpush.msra.mxu0 %v2076
    %2246 = vmatpush.msra.mxu0 %v2072
    %2247 = vmatpush.msra.mxu0 %v2068
    %2248 = vmatpush.msra.mxu0 %v2064
    %2249 = vmatpush.msra.mxu0 %v2060
    %2250 = vmatpush.msra.mxu0 %v2056
    %2251 = vmatpush.msra.mxu0 %v2052
    %2252 = vmatpush.msra.mxu0 %v2048
    %2253 = vmatpush.msra.mxu0 %v2044
    %2254 = vmatpush.msra.mxu0 %v2040
    %2255 = vmatpush.msra.mxu0 %v2036
    %2256 = vmatpush.msra.mxu0 %v2032
    %2257 = vmatmul.f32.gmra.mxu0 %v2014
    %v2258 = vpop.f32.mrf.mxu0
    %v2259 = vadd.f32 0.0, %v2258
    %2260 = vmatmul.f32.gmra.mxu0 %v2015
    %v2261 = vpop.f32.mrf.mxu0
    %v2262 = vadd.f32 0.0, %v2261
    %2263 = vmatmul.f32.gmra.mxu0 %v2016
    %v2264 = vpop.f32.mrf.mxu0
    %v2265 = vadd.f32 0.0, %v2264
    %2266 = vmatmul.f32.gmra.mxu0 %v2017
    %v2267 = vpop.f32.mrf.mxu0
    %v2268 = vadd.f32 0.0, %v2267
    %2269 = vmatmul.f32.gmra.mxu0 %v2018
    %v2270 = vpop.f32.mrf.mxu0
    %v2271 = vadd.f32 0.0, %v2270
    %2272 = vmatmul.f32.gmra.mxu0 %v2019
    %v2273 = vpop.f32.mrf.mxu0
    %v2274 = vadd.f32 0.0, %v2273
    %2275 = vmatmul.f32.gmra.mxu0 %v2020
    %v2276 = vpop.f32.mrf.mxu0
    %v2277 = vadd.f32 0.0, %v2276
    %2278 = vmatmul.f32.gmra.mxu0 %v2021
    %v2279 = vpop.f32.mrf.mxu0
    %v2280 = vadd.f32 0.0, %v2279
    %2281 = vmatmul.f32.gmra.mxu0 %v2022
    %v2282 = vpop.f32.mrf.mxu0
    %v2283 = vadd.f32 0.0, %v2282
    %2284 = vmatmul.f32.gmra.mxu0 %v2023
    %v2285 = vpop.f32.mrf.mxu0
    %v2286 = vadd.f32 0.0, %v2285
    %2287 = vmatmul.f32.gmra.mxu0 %v2024
    %v2288 = vpop.f32.mrf.mxu0
    %v2289 = vadd.f32 0.0, %v2288
    %2290 = vmatmul.f32.gmra.mxu0 %v2025
    %v2291 = vpop.f32.mrf.mxu0
    %v2292 = vadd.f32 0.0, %v2291
    %2293 = vmatmul.f32.gmra.mxu0 %v2026
    %v2294 = vpop.f32.mrf.mxu0
    %v2295 = vadd.f32 0.0, %v2294
    %2296 = vmatmul.f32.gmra.mxu0 %v2027
    %v2297 = vpop.f32.mrf.mxu0
    %v2298 = vadd.f32 0.0, %v2297
    %2299 = vmatmul.f32.gmra.mxu0 %v2028
    %v2300 = vpop.f32.mrf.mxu0
    %v2301 = vadd.f32 0.0, %v2300
    %2302 = vmatmul.f32.gmra.mxu0 %v2029
    %v2303 = vpop.f32.mrf.mxu0
    %v2304 = vadd.f32 0.0, %v2303
    %2305 = vdwg.mxu0
    %2306 = vmatpush.msra.mxu0 %v2093
    %2307 = vmatpush.msra.mxu0 %v2089
    %2308 = vmatpush.msra.mxu0 %v2085
    %2309 = vmatpush.msra.mxu0 %v2081
    %2310 = vmatpush.msra.mxu0 %v2077
    %2311 = vmatpush.msra.mxu0 %v2073
    %2312 = vmatpush.msra.mxu0 %v2069
    %2313 = vmatpush.msra.mxu0 %v2065
    %2314 = vmatpush.msra.mxu0 %v2061
    %2315 = vmatpush.msra.mxu0 %v2057
    %2316 = vmatpush.msra.mxu0 %v2053
    %2317 = vmatpush.msra.mxu0 %v2049
    %2318 = vmatpush.msra.mxu0 %v2045
    %2319 = vmatpush.msra.mxu0 %v2041
    %2320 = vmatpush.msra.mxu0 %v2037
    %2321 = vmatpush.msra.mxu0 %v2033
    %2322 = vmatmul.f32.gmra.mxu0 %v2014
    %v2323 = vpop.f32.mrf.mxu0
    %v2324 = vadd.f32 0.0, %v2323
    %2325 = vmatmul.f32.gmra.mxu0 %v2015
    %v2326 = vpop.f32.mrf.mxu0
    %v2327 = vadd.f32 0.0, %v2326
    %2328 = vmatmul.f32.gmra.mxu0 %v2016
    %v2329 = vpop.f32.mrf.mxu0
    %v2330 = vadd.f32 0.0, %v2329
    %2331 = vmatmul.f32.gmra.mxu0 %v2017
    %v2332 = vpop.f32.mrf.mxu0
    %v2333 = vadd.f32 0.0, %v2332
    %2334 = vmatmul.f32.gmra.mxu0 %v2018
    %v2335 = vpop.f32.mrf.mxu0
    %v2336 = vadd.f32 0.0, %v2335
    %2337 = vmatmul.f32.gmra.mxu0 %v2019
    %v2338 = vpop.f32.mrf.mxu0
    %v2339 = vadd.f32 0.0, %v2338
    %2340 = vmatmul.f32.gmra.mxu0 %v2020
    %v2341 = vpop.f32.mrf.mxu0
    %v2342 = vadd.f32 0.0, %v2341
    %2343 = vmatmul.f32.gmra.mxu0 %v2021
    %v2344 = vpop.f32.mrf.mxu0
    %v2345 = vadd.f32 0.0, %v2344
    %2346 = vmatmul.f32.gmra.mxu0 %v2022
    %v2347 = vpop.f32.mrf.mxu0
    %v2348 = vadd.f32 0.0, %v2347
    %2349 = vmatmul.f32.gmra.mxu0 %v2023
    %v2350 = vpop.f32.mrf.mxu0
    %v2351 = vadd.f32 0.0, %v2350
    %2352 = vmatmul.f32.gmra.mxu0 %v2024
    %v2353 = vpop.f32.mrf.mxu0
    %v2354 = vadd.f32 0.0, %v2353
    %2355 = vmatmul.f32.gmra.mxu0 %v2025
    %v2356 = vpop.f32.mrf.mxu0
    %v2357 = vadd.f32 0.0, %v2356
    %2358 = vmatmul.f32.gmra.mxu0 %v2026
    %v2359 = vpop.f32.mrf.mxu0
    %v2360 = vadd.f32 0.0, %v2359
    %2361 = vmatmul.f32.gmra.mxu0 %v2027
    %v2362 = vpop.f32.mrf.mxu0
    %v2363 = vadd.f32 0.0, %v2362
    %2364 = vmatmul.f32.gmra.mxu0 %v2028
    %v2365 = vpop.f32.mrf.mxu0
    %v2366 = vadd.f32 0.0, %v2365
    %2367 = vmatmul.f32.gmra.mxu0 %v2029
    %v2368 = vpop.f32.mrf.mxu0
    %v2369 = vadd.f32 0.0, %v2368
    %2370 = vdwg.mxu0
    %2371 = vmatpush.msra.mxu0 %v2109
    %2372 = vmatpush.msra.mxu0 %v2108
    %2373 = vmatpush.msra.mxu0 %v2107
    %2374 = vmatpush.msra.mxu0 %v2106
    %2375 = vmatpush.msra.mxu0 %v2105
    %2376 = vmatpush.msra.mxu0 %v2104
    %2377 = vmatpush.msra.mxu0 %v2103
    %2378 = vmatpush.msra.mxu0 %v2102
    %2379 = vmatpush.msra.mxu0 %v2101
    %2380 = vmatpush.msra.mxu0 %v2100
    %2381 = vmatpush.msra.mxu0 %v2099
    %2382 = vmatpush.msra.mxu0 %v2098
    %2383 = vmatpush.msra.mxu0 %v2097
    %2384 = vmatpush.msra.mxu0 %v2096
    %2385 = vmatpush.msra.mxu0 %v2095
    %2386 = vmatpush.msra.mxu0 %v2094
    %2387 = vmatmul.f32.gmra.mxu0 %v2014
    %v2388 = vpop.f32.mrf.mxu0
    %v2389 = vadd.f32 0.0, %v2388
    %2390 = vmatmul.f32.gmra.mxu0 %v2015
    %v2391 = vpop.f32.mrf.mxu0
    %v2392 = vadd.f32 0.0, %v2391
    %2393 = vmatmul.f32.gmra.mxu0 %v2016
    %v2394 = vpop.f32.mrf.mxu0
    %v2395 = vadd.f32 0.0, %v2394
    %2396 = vmatmul.f32.gmra.mxu0 %v2017
    %v2397 = vpop.f32.mrf.mxu0
    %v2398 = vadd.f32 0.0, %v2397
    %2399 = vmatmul.f32.gmra.mxu0 %v2018
    %v2400 = vpop.f32.mrf.mxu0
    %v2401 = vadd.f32 0.0, %v2400
    %2402 = vmatmul.f32.gmra.mxu0 %v2019
    %v2403 = vpop.f32.mrf.mxu0
    %v2404 = vadd.f32 0.0, %v2403
    %2405 = vmatmul.f32.gmra.mxu0 %v2020
    %v2406 = vpop.f32.mrf.mxu0
    %v2407 = vadd.f32 0.0, %v2406
    %2408 = vmatmul.f32.gmra.mxu0 %v2021
    %v2409 = vpop.f32.mrf.mxu0
    %v2410 = vadd.f32 0.0, %v2409
    %2411 = vmatmul.f32.gmra.mxu0 %v2022
    %v2412 = vpop.f32.mrf.mxu0
    %v2413 = vadd.f32 0.0, %v2412
    %2414 = vmatmul.f32.gmra.mxu0 %v2023
    %v2415 = vpop.f32.mrf.mxu0
    %v2416 = vadd.f32 0.0, %v2415
    %2417 = vmatmul.f32.gmra.mxu0 %v2024
    %v2418 = vpop.f32.mrf.mxu0
    %v2419 = vadd.f32 0.0, %v2418
    %2420 = vmatmul.f32.gmra.mxu0 %v2025
    %v2421 = vpop.f32.mrf.mxu0
    %v2422 = vadd.f32 0.0, %v2421
    %2423 = vmatmul.f32.gmra.mxu0 %v2026
    %v2424 = vpop.f32.mrf.mxu0
    %v2425 = vadd.f32 0.0, %v2424
    %2426 = vmatmul.f32.gmra.mxu0 %v2027
    %v2427 = vpop.f32.mrf.mxu0
    %v2428 = vadd.f32 0.0, %v2427
    %2429 = vmatmul.f32.gmra.mxu0 %v2028
    %v2430 = vpop.f32.mrf.mxu0
    %v2431 = vadd.f32 0.0, %v2430
    %2432 = vmatmul.f32.gmra.mxu0 %v2029
    %v2433 = vpop.f32.mrf.mxu0
    %v2434 = vadd.f32 0.0, %v2433
    %2435 = vdwg.mxu0
    %2436 = vxpose.xlu0.b32.start [1/16] %v2389, 128
    %2437 = vxpose.xlu0.b32.cont [2/16] %v2392, 128
    %2438 = vxpose.xlu0.b32.cont [3/16] %v2395, 128
    %2439 = vxpose.xlu0.b32.cont [4/16] %v2398, 128
    %2440 = vxpose.xlu0.b32.cont [5/16] %v2401, 128
    %2441 = vxpose.xlu0.b32.cont [6/16] %v2404, 128
    %2442 = vxpose.xlu0.b32.cont [7/16] %v2407, 128
    %2443 = vxpose.xlu0.b32.cont [8/16] %v2410, 128
    %2444 = vxpose.xlu0.b32.cont [9/16] %v2413, 128
    %2445 = vxpose.xlu0.b32.cont [10/16] %v2416, 128
    %2446 = vxpose.xlu0.b32.cont [11/16] %v2419, 128
    %2447 = vxpose.xlu0.b32.cont [12/16] %v2422, 128
    %2448 = vxpose.xlu0.b32.cont [13/16] %v2425, 128
    %2449 = vxpose.xlu0.b32.cont [14/16] %v2428, 128
    %2450 = vxpose.xlu0.b32.cont [15/16] %v2431, 128
    %2451 = vxpose.xlu0.b32.end [16/16] %v2434, 128
    %v2452 = vpop.trf.xlu0
    %v2453 = vpop.trf.xlu0
    %v2454 = vpop.trf.xlu0
    %v2455 = vpop.trf.xlu0
    %v2456 = vpop.trf.xlu0
    %v2457 = vpop.trf.xlu0
    %v2458 = vpop.trf.xlu0
    %v2459 = vpop.trf.xlu0
    %v2460 = vpop.trf.xlu0
    %v2461 = vpop.trf.xlu0
    %v2462 = vpop.trf.xlu0
    %v2463 = vpop.trf.xlu0
    %v2464 = vpop.trf.xlu0
    %v2465 = vpop.trf.xlu0
    %v2466 = vpop.trf.xlu0
    %v2467 = vpop.trf.xlu0
    %2469 = vset.pattern.permute.xlu0 4
    %2470 = vperm.xlu0 %2469, %v2389
    %v2471 = vpop.permute.xlu0 %2470
    %2474 = vset.pattern.permute.xlu0 4
    %2475 = vperm.xlu0 %2474, %v2392
    %v2476 = vpop.permute.xlu0 %2475
    %2479 = vset.pattern.permute.xlu0 4
    %2480 = vperm.xlu0 %2479, %v2395
    %v2481 = vpop.permute.xlu0 %2480
    %2484 = vset.pattern.permute.xlu0 4
    %2485 = vperm.xlu0 %2484, %v2398
    %v2486 = vpop.permute.xlu0 %2485
    %2489 = vset.pattern.permute.xlu0 4
    %2490 = vperm.xlu0 %2489, %v2401
    %v2491 = vpop.permute.xlu0 %2490
    %2494 = vset.pattern.permute.xlu0 4
    %2495 = vperm.xlu0 %2494, %v2404
    %v2496 = vpop.permute.xlu0 %2495
    %2499 = vset.pattern.permute.xlu0 4
    %2500 = vperm.xlu0 %2499, %v2407
    %v2501 = vpop.permute.xlu0 %2500
    %2504 = vset.pattern.permute.xlu0 4
    %2505 = vperm.xlu0 %2504, %v2410
    %v2506 = vpop.permute.xlu0 %2505
    %2509 = vset.pattern.permute.xlu0 4
    %2510 = vperm.xlu0 %2509, %v2413
    %v2511 = vpop.permute.xlu0 %2510
    %2514 = vset.pattern.permute.xlu0 4
    %2515 = vperm.xlu0 %2514, %v2416
    %v2516 = vpop.permute.xlu0 %2515
    %2519 = vset.pattern.permute.xlu0 4
    %2520 = vperm.xlu0 %2519, %v2419
    %v2521 = vpop.permute.xlu0 %2520
    %2524 = vset.pattern.permute.xlu0 4
    %2525 = vperm.xlu0 %2524, %v2422
    %v2526 = vpop.permute.xlu0 %2525
    %2529 = vset.pattern.permute.xlu0 4
    %2530 = vperm.xlu0 %2529, %v2425
    %v2531 = vpop.permute.xlu0 %2530
    %2534 = vset.pattern.permute.xlu0 4
    %2535 = vperm.xlu0 %2534, %v2428
    %v2536 = vpop.permute.xlu0 %2535
    %2539 = vset.pattern.permute.xlu0 4
    %2540 = vperm.xlu0 %2539, %v2431
    %v2541 = vpop.permute.xlu0 %2540
    %2544 = vset.pattern.permute.xlu0 4
    %2545 = vperm.xlu0 %2544, %v2434
    %v2546 = vpop.permute.xlu0 %2545
    %v2548 = vperm.slane %v2452, 0
    %v2549 = vadd.f32 %v2471, %v2548
    %v2550 = vadd.f32 %v2476, %v2548
    %v2551 = vadd.f32 %v2481, %v2548
    %v2552 = vadd.f32 %v2486, %v2548
    %v2553 = vadd.f32 %v2491, %v2548
    %v2554 = vadd.f32 %v2496, %v2548
    %v2555 = vadd.f32 %v2501, %v2548
    %v2556 = vadd.f32 %v2506, %v2548
    %v2557 = vadd.f32 %v2511, %v2548
    %v2558 = vadd.f32 %v2516, %v2548
    %v2559 = vadd.f32 %v2521, %v2548
    %v2560 = vadd.f32 %v2526, %v2548
    %v2561 = vadd.f32 %v2531, %v2548
    %v2562 = vadd.f32 %v2536, %v2548
    %v2563 = vadd.f32 %v2541, %v2548
    %v2564 = vadd.f32 %v2546, %v2548
    %v2565 = vmul.f32 %v2549, 0.2
    %v2566 = vmul.f32 %v2550, 0.2
    %v2567 = vmul.f32 %v2551, 0.2
    %v2568 = vmul.f32 %v2552, 0.2
    %v2569 = vmul.f32 %v2553, 0.2
    %v2570 = vmul.f32 %v2554, 0.2
    %v2571 = vmul.f32 %v2555, 0.2
    %v2572 = vmul.f32 %v2556, 0.2
    %v2573 = vmul.f32 %v2557, 0.2
    %v2574 = vmul.f32 %v2558, 0.2
    %v2575 = vmul.f32 %v2559, 0.2
    %v2576 = vmul.f32 %v2560, 0.2
    %v2577 = vmul.f32 %v2561, 0.2
    %v2578 = vmul.f32 %v2562, 0.2
    %v2579 = vmul.f32 %v2563, 0.2
    %v2580 = vmul.f32 %v2564, 0.2
    %v2581 = vmax.f32 %v2549, %v2565
    %v2582 = vmax.f32 %v2550, %v2566
    %v2583 = vmax.f32 %v2551, %v2567
    %v2584 = vmax.f32 %v2552, %v2568
    %v2585 = vmax.f32 %v2553, %v2569
    %v2586 = vmax.f32 %v2554, %v2570
    %v2587 = vmax.f32 %v2555, %v2571
    %v2588 = vmax.f32 %v2556, %v2572
    %v2589 = vmax.f32 %v2557, %v2573
    %v2590 = vmax.f32 %v2558, %v2574
    %v2591 = vmax.f32 %v2559, %v2575
    %v2592 = vmax.f32 %v2560, %v2576
    %v2593 = vmax.f32 %v2561, %v2577
    %v2594 = vmax.f32 %v2562, %v2578
    %v2595 = vmax.f32 %v2563, %v2579
    %v2596 = vmax.f32 %v2564, %v2580
    %v2597 = vadd.f32 %v2581, %v93
    %v2598 = vadd.f32 %v2582, %v94
    %v2599 = vadd.f32 %v2583, %v95
    %v2600 = vadd.f32 %v2584, %v96
    %v2601 = vadd.f32 %v2585, %v97
    %v2602 = vadd.f32 %v2586, %v98
    %v2603 = vadd.f32 %v2587, %v99
    %v2604 = vadd.f32 %v2588, %v100
    %v2605 = vadd.f32 %v2589, %v101
    %v2606 = vadd.f32 %v2590, %v102
    %v2607 = vadd.f32 %v2591, %v103
    %v2608 = vadd.f32 %v2592, %v104
    %v2609 = vadd.f32 %v2593, %v105
    %v2610 = vadd.f32 %v2594, %v106
    %v2611 = vadd.f32 %v2595, %v107
    %v2612 = vadd.f32 %v2596, %v108
    %2613 = vmax.xlane.f32.xlu0 %v2597
    %v2614 = vpop.xlane.xlu0 %2613
    %2615 = vmax.xlane.f32.xlu0 %v2598
    %v2616 = vpop.xlane.xlu0 %2615
    %2617 = vmax.xlane.f32.xlu0 %v2599
    %v2618 = vpop.xlane.xlu0 %2617
    %2619 = vmax.xlane.f32.xlu0 %v2600
    %v2620 = vpop.xlane.xlu0 %2619
    %2621 = vmax.xlane.f32.xlu0 %v2601
    %v2622 = vpop.xlane.xlu0 %2621
    %2623 = vmax.xlane.f32.xlu0 %v2602
    %v2624 = vpop.xlane.xlu0 %2623
    %2625 = vmax.xlane.f32.xlu0 %v2603
    %v2626 = vpop.xlane.xlu0 %2625
    %2627 = vmax.xlane.f32.xlu0 %v2604
    %v2628 = vpop.xlane.xlu0 %2627
    %2629 = vmax.xlane.f32.xlu0 %v2605
    %v2630 = vpop.xlane.xlu0 %2629
    %2631 = vmax.xlane.f32.xlu0 %v2606
    %v2632 = vpop.xlane.xlu0 %2631
    %2633 = vmax.xlane.f32.xlu0 %v2607
    %v2634 = vpop.xlane.xlu0 %2633
    %2635 = vmax.xlane.f32.xlu0 %v2608
    %v2636 = vpop.xlane.xlu0 %2635
    %2637 = vmax.xlane.f32.xlu0 %v2609
    %v2638 = vpop.xlane.xlu0 %2637
    %2639 = vmax.xlane.f32.xlu0 %v2610
    %v2640 = vpop.xlane.xlu0 %2639
    %2641 = vmax.xlane.f32.xlu0 %v2611
    %v2642 = vpop.xlane.xlu0 %2641
    %2643 = vmax.xlane.f32.xlu0 %v2612
    %v2644 = vpop.xlane.xlu0 %2643
    %v2645 = vsub.f32 %v2597, %v2614
    %v2646 = vsub.f32 %v2598, %v2616
    %v2647 = vsub.f32 %v2599, %v2618
    %v2648 = vsub.f32 %v2600, %v2620
    %v2649 = vsub.f32 %v2601, %v2622
    %v2650 = vsub.f32 %v2602, %v2624
    %v2651 = vsub.f32 %v2603, %v2626
    %v2652 = vsub.f32 %v2604, %v2628
    %v2653 = vsub.f32 %v2605, %v2630
    %v2654 = vsub.f32 %v2606, %v2632
    %v2655 = vsub.f32 %v2607, %v2634
    %v2656 = vsub.f32 %v2608, %v2636
    %v2657 = vsub.f32 %v2609, %v2638
    %v2658 = vsub.f32 %v2610, %v2640
    %v2659 = vsub.f32 %v2611, %v2642
    %v2660 = vsub.f32 %v2612, %v2644
    %v2661 = vmul.f32 %v2645, 1.442695
    %v2662 = vpow.pop %v2661
    %v2663 = vmul.f32 %v2646, 1.442695
    %v2664 = vpow.pop %v2663
    %v2665 = vmul.f32 %v2647, 1.442695
    %v2666 = vpow.pop %v2665
    %v2667 = vmul.f32 %v2648, 1.442695
    %v2668 = vpow.pop %v2667
    %v2669 = vmul.f32 %v2649, 1.442695
    %v2670 = vpow.pop %v2669
    %v2671 = vmul.f32 %v2650, 1.442695
    %v2672 = vpow.pop %v2671
    %v2673 = vmul.f32 %v2651, 1.442695
    %v2674 = vpow.pop %v2673
    %v2675 = vmul.f32 %v2652, 1.442695
    %v2676 = vpow.pop %v2675
    %v2677 = vmul.f32 %v2653, 1.442695
    %v2678 = vpow.pop %v2677
    %v2679 = vmul.f32 %v2654, 1.442695
    %v2680 = vpow.pop %v2679
    %v2681 = vmul.f32 %v2655, 1.442695
    %v2682 = vpow.pop %v2681
    %v2683 = vmul.f32 %v2656, 1.442695
    %v2684 = vpow.pop %v2683
    %v2685 = vmul.f32 %v2657, 1.442695
    %v2686 = vpow.pop %v2685
    %v2687 = vmul.f32 %v2658, 1.442695
    %v2688 = vpow.pop %v2687
    %v2689 = vmul.f32 %v2659, 1.442695
    %v2690 = vpow.pop %v2689
    %v2691 = vmul.f32 %v2660, 1.442695
    %v2692 = vpow.pop %v2691
    %2693 = vadd.xlane.f32.xlu0 %v2662
    %v2694 = vpop.xlane.xlu0 %2693
    %2695 = vadd.xlane.f32.xlu0 %v2664
    %v2696 = vpop.xlane.xlu0 %2695
    %2697 = vadd.xlane.f32.xlu0 %v2666
    %v2698 = vpop.xlane.xlu0 %2697
    %2699 = vadd.xlane.f32.xlu0 %v2668
    %v2700 = vpop.xlane.xlu0 %2699
    %2701 = vadd.xlane.f32.xlu0 %v2670
    %v2702 = vpop.xlane.xlu0 %2701
    %2703 = vadd.xlane.f32.xlu0 %v2672
    %v2704 = vpop.xlane.xlu0 %2703
    %2705 = vadd.xlane.f32.xlu0 %v2674
    %v2706 = vpop.xlane.xlu0 %2705
    %2707 = vadd.xlane.f32.xlu0 %v2676
    %v2708 = vpop.xlane.xlu0 %2707
    %2709 = vadd.xlane.f32.xlu0 %v2678
    %v2710 = vpop.xlane.xlu0 %2709
    %2711 = vadd.xlane.f32.xlu0 %v2680
    %v2712 = vpop.xlane.xlu0 %2711
    %2713 = vadd.xlane.f32.xlu0 %v2682
    %v2714 = vpop.xlane.xlu0 %2713
    %2715 = vadd.xlane.f32.xlu0 %v2684
    %v2716 = vpop.xlane.xlu0 %2715
    %2717 = vadd.xlane.f32.xlu0 %v2686
    %v2718 = vpop.xlane.xlu0 %2717
    %2719 = vadd.xlane.f32.xlu0 %v2688
    %v2720 = vpop.xlane.xlu0 %2719
    %2721 = vadd.xlane.f32.xlu0 %v2690
    %v2722 = vpop.xlane.xlu0 %2721
    %2723 = vadd.xlane.f32.xlu0 %v2692
    %v2724 = vpop.xlane.xlu0 %2723
    %v2725 = vrcp.pop %v2694
    %v2726 = vrcp.pop %v2696
    %v2727 = vrcp.pop %v2698
    %v2728 = vrcp.pop %v2700
    %v2729 = vrcp.pop %v2702
    %v2730 = vrcp.pop %v2704
    %v2731 = vrcp.pop %v2706
    %v2732 = vrcp.pop %v2708
    %v2733 = vrcp.pop %v2710
    %v2734 = vrcp.pop %v2712
    %v2735 = vrcp.pop %v2714
    %v2736 = vrcp.pop %v2716
    %v2737 = vrcp.pop %v2718
    %v2738 = vrcp.pop %v2720
    %v2739 = vrcp.pop %v2722
    %v2740 = vrcp.pop %v2724
    %v2741 = vmul.f32 %v2725, 0.25
    %v2742 = vmul.f32 %v2726, 0.25
    %v2743 = vmul.f32 %v2727, 0.25
    %v2744 = vmul.f32 %v2728, 0.25
    %v2745 = vmul.f32 %v2729, 0.25
    %v2746 = vmul.f32 %v2730, 0.25
    %v2747 = vmul.f32 %v2731, 0.25
    %v2748 = vmul.f32 %v2732, 0.25
    %v2749 = vmul.f32 %v2733, 0.25
    %v2750 = vmul.f32 %v2734, 0.25
    %v2751 = vmul.f32 %v2735, 0.25
    %v2752 = vmul.f32 %v2736, 0.25
    %v2753 = vmul.f32 %v2737, 0.25
    %v2754 = vmul.f32 %v2738, 0.25
    %v2755 = vmul.f32 %v2739, 0.25
    %v2756 = vmul.f32 %v2740, 0.25
    %v2757 = vmul.f32 %v2662, %v2741
    %v2758 = vmul.f32 %v2664, %v2742
    %v2759 = vmul.f32 %v2666, %v2743
    %v2760 = vmul.f32 %v2668, %v2744
    %v2761 = vmul.f32 %v2670, %v2745
    %v2762 = vmul.f32 %v2672, %v2746
    %v2763 = vmul.f32 %v2674, %v2747
    %v2764 = vmul.f32 %v2676, %v2748
    %v2765 = vmul.f32 %v2678, %v2749
    %v2766 = vmul.f32 %v2680, %v2750
    %v2767 = vmul.f32 %v2682, %v2751
    %v2768 = vmul.f32 %v2684, %v2752
    %v2769 = vmul.f32 %v2686, %v2753
    %v2770 = vmul.f32 %v2688, %v2754
    %v2771 = vmul.f32 %v2690, %v2755
    %v2772 = vmul.f32 %v2692, %v2756
    %2773 = vset.pattern.permute.xlu0 5
    %2774 = vperm.xlu0 %2773, %v2389
    %v2775 = vpop.permute.xlu0 %2774
    %2777 = vset.pattern.permute.xlu0 5
    %2778 = vperm.xlu0 %2777, %v2392
    %v2779 = vpop.permute.xlu0 %2778
    %2781 = vset.pattern.permute.xlu0 5
    %2782 = vperm.xlu0 %2781, %v2395
    %v2783 = vpop.permute.xlu0 %2782
    %2785 = vset.pattern.permute.xlu0 5
    %2786 = vperm.xlu0 %2785, %v2398
    %v2787 = vpop.permute.xlu0 %2786
    %2789 = vset.pattern.permute.xlu0 5
    %2790 = vperm.xlu0 %2789, %v2401
    %v2791 = vpop.permute.xlu0 %2790
    %2793 = vset.pattern.permute.xlu0 5
    %2794 = vperm.xlu0 %2793, %v2404
    %v2795 = vpop.permute.xlu0 %2794
    %2797 = vset.pattern.permute.xlu0 5
    %2798 = vperm.xlu0 %2797, %v2407
    %v2799 = vpop.permute.xlu0 %2798
    %2801 = vset.pattern.permute.xlu0 5
    %2802 = vperm.xlu0 %2801, %v2410
    %v2803 = vpop.permute.xlu0 %2802
    %2805 = vset.pattern.permute.xlu0 5
    %2806 = vperm.xlu0 %2805, %v2413
    %v2807 = vpop.permute.xlu0 %2806
    %2809 = vset.pattern.permute.xlu0 5
    %2810 = vperm.xlu0 %2809, %v2416
    %v2811 = vpop.permute.xlu0 %2810
    %2813 = vset.pattern.permute.xlu0 5
    %2814 = vperm.xlu0 %2813, %v2419
    %v2815 = vpop.permute.xlu0 %2814
    %2817 = vset.pattern.permute.xlu0 5
    %2818 = vperm.xlu0 %2817, %v2422
    %v2819 = vpop.permute.xlu0 %2818
    %2821 = vset.pattern.permute.xlu0 5
    %2822 = vperm.xlu0 %2821, %v2425
    %v2823 = vpop.permute.xlu0 %2822
    %2825 = vset.pattern.permute.xlu0 5
    %2826 = vperm.xlu0 %2825, %v2428
    %v2827 = vpop.permute.xlu0 %2826
    %2829 = vset.pattern.permute.xlu0 5
    %2830 = vperm.xlu0 %2829, %v2431
    %v2831 = vpop.permute.xlu0 %2830
    %2833 = vset.pattern.permute.xlu0 5
    %2834 = vperm.xlu0 %2833, %v2434
    %v2835 = vpop.permute.xlu0 %2834
    %v2837 = vperm.slane %v2452, 1
    %v2838 = vadd.f32 %v2775, %v2837
    %v2839 = vadd.f32 %v2779, %v2837
    %v2840 = vadd.f32 %v2783, %v2837
    %v2841 = vadd.f32 %v2787, %v2837
    %v2842 = vadd.f32 %v2791, %v2837
    %v2843 = vadd.f32 %v2795, %v2837
    %v2844 = vadd.f32 %v2799, %v2837
    %v2845 = vadd.f32 %v2803, %v2837
    %v2846 = vadd.f32 %v2807, %v2837
    %v2847 = vadd.f32 %v2811, %v2837
    %v2848 = vadd.f32 %v2815, %v2837
    %v2849 = vadd.f32 %v2819, %v2837
    %v2850 = vadd.f32 %v2823, %v2837
    %v2851 = vadd.f32 %v2827, %v2837
    %v2852 = vadd.f32 %v2831, %v2837
    %v2853 = vadd.f32 %v2835, %v2837
    %v2854 = vmul.f32 %v2838, 0.2
    %v2855 = vmul.f32 %v2839, 0.2
    %v2856 = vmul.f32 %v2840, 0.2
    %v2857 = vmul.f32 %v2841, 0.2
    %v2858 = vmul.f32 %v2842, 0.2
    %v2859 = vmul.f32 %v2843, 0.2
    %v2860 = vmul.f32 %v2844, 0.2
    %v2861 = vmul.f32 %v2845, 0.2
    %v2862 = vmul.f32 %v2846, 0.2
    %v2863 = vmul.f32 %v2847, 0.2
    %v2864 = vmul.f32 %v2848, 0.2
    %v2865 = vmul.f32 %v2849, 0.2
    %v2866 = vmul.f32 %v2850, 0.2
    %v2867 = vmul.f32 %v2851, 0.2
    %v2868 = vmul.f32 %v2852, 0.2
    %v2869 = vmul.f32 %v2853, 0.2
    %v2870 = vmax.f32 %v2838, %v2854
    %v2871 = vmax.f32 %v2839, %v2855
    %v2872 = vmax.f32 %v2840, %v2856
    %v2873 = vmax.f32 %v2841, %v2857
    %v2874 = vmax.f32 %v2842, %v2858
    %v2875 = vmax.f32 %v2843, %v2859
    %v2876 = vmax.f32 %v2844, %v2860
    %v2877 = vmax.f32 %v2845, %v2861
    %v2878 = vmax.f32 %v2846, %v2862
    %v2879 = vmax.f32 %v2847, %v2863
    %v2880 = vmax.f32 %v2848, %v2864
    %v2881 = vmax.f32 %v2849, %v2865
    %v2882 = vmax.f32 %v2850, %v2866
    %v2883 = vmax.f32 %v2851, %v2867
    %v2884 = vmax.f32 %v2852, %v2868
    %v2885 = vmax.f32 %v2853, %v2869
    %v2886 = vadd.f32 %v2870, %v93
    %v2887 = vadd.f32 %v2871, %v94
    %v2888 = vadd.f32 %v2872, %v95
    %v2889 = vadd.f32 %v2873, %v96
    %v2890 = vadd.f32 %v2874, %v97
    %v2891 = vadd.f32 %v2875, %v98
    %v2892 = vadd.f32 %v2876, %v99
    %v2893 = vadd.f32 %v2877, %v100
    %v2894 = vadd.f32 %v2878, %v101
    %v2895 = vadd.f32 %v2879, %v102
    %v2896 = vadd.f32 %v2880, %v103
    %v2897 = vadd.f32 %v2881, %v104
    %v2898 = vadd.f32 %v2882, %v105
    %v2899 = vadd.f32 %v2883, %v106
    %v2900 = vadd.f32 %v2884, %v107
    %v2901 = vadd.f32 %v2885, %v108
    %2902 = vmax.xlane.f32.xlu0 %v2886
    %v2903 = vpop.xlane.xlu0 %2902
    %2904 = vmax.xlane.f32.xlu0 %v2887
    %v2905 = vpop.xlane.xlu0 %2904
    %2906 = vmax.xlane.f32.xlu0 %v2888
    %v2907 = vpop.xlane.xlu0 %2906
    %2908 = vmax.xlane.f32.xlu0 %v2889
    %v2909 = vpop.xlane.xlu0 %2908
    %2910 = vmax.xlane.f32.xlu0 %v2890
    %v2911 = vpop.xlane.xlu0 %2910
    %2912 = vmax.xlane.f32.xlu0 %v2891
    %v2913 = vpop.xlane.xlu0 %2912
    %2914 = vmax.xlane.f32.xlu0 %v2892
    %v2915 = vpop.xlane.xlu0 %2914
    %2916 = vmax.xlane.f32.xlu0 %v2893
    %v2917 = vpop.xlane.xlu0 %2916
    %2918 = vmax.xlane.f32.xlu0 %v2894
    %v2919 = vpop.xlane.xlu0 %2918
    %2920 = vmax.xlane.f32.xlu0 %v2895
    %v2921 = vpop.xlane.xlu0 %2920
    %2922 = vmax.xlane.f32.xlu0 %v2896
    %v2923 = vpop.xlane.xlu0 %2922
    %2924 = vmax.xlane.f32.xlu0 %v2897
    %v2925 = vpop.xlane.xlu0 %2924
    %2926 = vmax.xlane.f32.xlu0 %v2898
    %v2927 = vpop.xlane.xlu0 %2926
    %2928 = vmax.xlane.f32.xlu0 %v2899
    %v2929 = vpop.xlane.xlu0 %2928
    %2930 = vmax.xlane.f32.xlu0 %v2900
    %v2931 = vpop.xlane.xlu0 %2930
    %2932 = vmax.xlane.f32.xlu0 %v2901
    %v2933 = vpop.xlane.xlu0 %2932
    %v2934 = vsub.f32 %v2886, %v2903
    %v2935 = vsub.f32 %v2887, %v2905
    %v2936 = vsub.f32 %v2888, %v2907
    %v2937 = vsub.f32 %v2889, %v2909
    %v2938 = vsub.f32 %v2890, %v2911
    %v2939 = vsub.f32 %v2891, %v2913
    %v2940 = vsub.f32 %v2892, %v2915
    %v2941 = vsub.f32 %v2893, %v2917
    %v2942 = vsub.f32 %v2894, %v2919
    %v2943 = vsub.f32 %v2895, %v2921
    %v2944 = vsub.f32 %v2896, %v2923
    %v2945 = vsub.f32 %v2897, %v2925
    %v2946 = vsub.f32 %v2898, %v2927
    %v2947 = vsub.f32 %v2899, %v2929
    %v2948 = vsub.f32 %v2900, %v2931
    %v2949 = vsub.f32 %v2901, %v2933
    %v2950 = vmul.f32 %v2934, 1.442695
    %v2951 = vpow.pop %v2950
    %v2952 = vmul.f32 %v2935, 1.442695
    %v2953 = vpow.pop %v2952
    %v2954 = vmul.f32 %v2936, 1.442695
    %v2955 = vpow.pop %v2954
    %v2956 = vmul.f32 %v2937, 1.442695
    %v2957 = vpow.pop %v2956
    %v2958 = vmul.f32 %v2938, 1.442695
    %v2959 = vpow.pop %v2958
    %v2960 = vmul.f32 %v2939, 1.442695
    %v2961 = vpow.pop %v2960
    %v2962 = vmul.f32 %v2940, 1.442695
    %v2963 = vpow.pop %v2962
    %v2964 = vmul.f32 %v2941, 1.442695
    %v2965 = vpow.pop %v2964
    %v2966 = vmul.f32 %v2942, 1.442695
    %v2967 = vpow.pop %v2966
    %v2968 = vmul.f32 %v2943, 1.442695
    %v2969 = vpow.pop %v2968
    %v2970 = vmul.f32 %v2944, 1.442695
    %v2971 = vpow.pop %v2970
    %v2972 = vmul.f32 %v2945, 1.442695
    %v2973 = vpow.pop %v2972
    %v2974 = vmul.f32 %v2946, 1.442695
    %v2975 = vpow.pop %v2974
    %v2976 = vmul.f32 %v2947, 1.442695
    %v2977 = vpow.pop %v2976
    %v2978 = vmul.f32 %v2948, 1.442695
    %v2979 = vpow.pop %v2978
    %v2980 = vmul.f32 %v2949, 1.442695
    %v2981 = vpow.pop %v2980
    %2982 = vadd.xlane.f32.xlu0 %v2951
    %v2983 = vpop.xlane.xlu0 %2982
    %2984 = vadd.xlane.f32.xlu0 %v2953
    %v2985 = vpop.xlane.xlu0 %2984
    %2986 = vadd.xlane.f32.xlu0 %v2955
    %v2987 = vpop.xlane.xlu0 %2986
    %2988 = vadd.xlane.f32.xlu0 %v2957
    %v2989 = vpop.xlane.xlu0 %2988
    %2990 = vadd.xlane.f32.xlu0 %v2959
    %v2991 = vpop.xlane.xlu0 %2990
    %2992 = vadd.xlane.f32.xlu0 %v2961
    %v2993 = vpop.xlane.xlu0 %2992
    %2994 = vadd.xlane.f32.xlu0 %v2963
    %v2995 = vpop.xlane.xlu0 %2994
    %2996 = vadd.xlane.f32.xlu0 %v2965
    %v2997 = vpop.xlane.xlu0 %2996
    %2998 = vadd.xlane.f32.xlu0 %v2967
    %v2999 = vpop.xlane.xlu0 %2998
    %3000 = vadd.xlane.f32.xlu0 %v2969
    %v3001 = vpop.xlane.xlu0 %3000
    %3002 = vadd.xlane.f32.xlu0 %v2971
    %v3003 = vpop.xlane.xlu0 %3002
    %3004 = vadd.xlane.f32.xlu0 %v2973
    %v3005 = vpop.xlane.xlu0 %3004
    %3006 = vadd.xlane.f32.xlu0 %v2975
    %v3007 = vpop.xlane.xlu0 %3006
    %3008 = vadd.xlane.f32.xlu0 %v2977
    %v3009 = vpop.xlane.xlu0 %3008
    %3010 = vadd.xlane.f32.xlu0 %v2979
    %v3011 = vpop.xlane.xlu0 %3010
    %3012 = vadd.xlane.f32.xlu0 %v2981
    %v3013 = vpop.xlane.xlu0 %3012
    %v3014 = vrcp.pop %v2983
    %v3015 = vrcp.pop %v2985
    %v3016 = vrcp.pop %v2987
    %v3017 = vrcp.pop %v2989
    %v3018 = vrcp.pop %v2991
    %v3019 = vrcp.pop %v2993
    %v3020 = vrcp.pop %v2995
    %v3021 = vrcp.pop %v2997
    %v3022 = vrcp.pop %v2999
    %v3023 = vrcp.pop %v3001
    %v3024 = vrcp.pop %v3003
    %v3025 = vrcp.pop %v3005
    %v3026 = vrcp.pop %v3007
    %v3027 = vrcp.pop %v3009
    %v3028 = vrcp.pop %v3011
    %v3029 = vrcp.pop %v3013
    %v3030 = vmul.f32 %v3014, 0.25
    %v3031 = vmul.f32 %v3015, 0.25
    %v3032 = vmul.f32 %v3016, 0.25
    %v3033 = vmul.f32 %v3017, 0.25
    %v3034 = vmul.f32 %v3018, 0.25
    %v3035 = vmul.f32 %v3019, 0.25
    %v3036 = vmul.f32 %v3020, 0.25
    %v3037 = vmul.f32 %v3021, 0.25
    %v3038 = vmul.f32 %v3022, 0.25
    %v3039 = vmul.f32 %v3023, 0.25
    %v3040 = vmul.f32 %v3024, 0.25
    %v3041 = vmul.f32 %v3025, 0.25
    %v3042 = vmul.f32 %v3026, 0.25
    %v3043 = vmul.f32 %v3027, 0.25
    %v3044 = vmul.f32 %v3028, 0.25
    %v3045 = vmul.f32 %v3029, 0.25
    %v3046 = vmul.f32 %v2951, %v3030
    %v3047 = vmul.f32 %v2953, %v3031
    %v3048 = vmul.f32 %v2955, %v3032
    %v3049 = vmul.f32 %v2957, %v3033
    %v3050 = vmul.f32 %v2959, %v3034
    %v3051 = vmul.f32 %v2961, %v3035
    %v3052 = vmul.f32 %v2963, %v3036
    %v3053 = vmul.f32 %v2965, %v3037
    %v3054 = vmul.f32 %v2967, %v3038
    %v3055 = vmul.f32 %v2969, %v3039
    %v3056 = vmul.f32 %v2971, %v3040
    %v3057 = vmul.f32 %v2973, %v3041
    %v3058 = vmul.f32 %v2975, %v3042
    %v3059 = vmul.f32 %v2977, %v3043
    %v3060 = vmul.f32 %v2979, %v3044
    %v3061 = vmul.f32 %v2981, %v3045
    %3062 = vmatpush.msra.mxu0 %v2239
    %3063 = vmatpush.msra.mxu0 %v2236
    %3064 = vmatpush.msra.mxu0 %v2233
    %3065 = vmatpush.msra.mxu0 %v2230
    %3066 = vmatpush.msra.mxu0 %v2227
    %3067 = vmatpush.msra.mxu0 %v2224
    %3068 = vmatpush.msra.mxu0 %v2221
    %3069 = vmatpush.msra.mxu0 %v2218
    %3070 = vmatpush.msra.mxu0 %v2215
    %3071 = vmatpush.msra.mxu0 %v2212
    %3072 = vmatpush.msra.mxu0 %v2209
    %3073 = vmatpush.msra.mxu0 %v2206
    %3074 = vmatpush.msra.mxu0 %v2203
    %3075 = vmatpush.msra.mxu0 %v2200
    %3076 = vmatpush.msra.mxu0 %v2197
    %3077 = vmatpush.msra.mxu0 %v2194
    %3078 = vmatmul.f32.gmra.mxu0 %v3046
    %v3079 = vpop.f32.mrf.mxu0
    %v3080 = vadd.f32 0.0, %v3079
    %3081 = vmatmul.f32.gmra.mxu0 %v3047
    %v3082 = vpop.f32.mrf.mxu0
    %v3083 = vadd.f32 0.0, %v3082
    %3084 = vmatmul.f32.gmra.mxu0 %v3048
    %v3085 = vpop.f32.mrf.mxu0
    %v3086 = vadd.f32 0.0, %v3085
    %3087 = vmatmul.f32.gmra.mxu0 %v3049
    %v3088 = vpop.f32.mrf.mxu0
    %v3089 = vadd.f32 0.0, %v3088
    %3090 = vmatmul.f32.gmra.mxu0 %v3050
    %v3091 = vpop.f32.mrf.mxu0
    %v3092 = vadd.f32 0.0, %v3091
    %3093 = vmatmul.f32.gmra.mxu0 %v3051
    %v3094 = vpop.f32.mrf.mxu0
    %v3095 = vadd.f32 0.0, %v3094
    %3096 = vmatmul.f32.gmra.mxu0 %v3052
    %v3097 = vpop.f32.mrf.mxu0
    %v3098 = vadd.f32 0.0, %v3097
    %3099 = vmatmul.f32.gmra.mxu0 %v3053
    %v3100 = vpop.f32.mrf.mxu0
    %v3101 = vadd.f32 0.0, %v3100
    %3102 = vmatmul.f32.gmra.mxu0 %v3054
    %v3103 = vpop.f32.mrf.mxu0
    %v3104 = vadd.f32 0.0, %v3103
    %3105 = vmatmul.f32.gmra.mxu0 %v3055
    %v3106 = vpop.f32.mrf.mxu0
    %v3107 = vadd.f32 0.0, %v3106
    %3108 = vmatmul.f32.gmra.mxu0 %v3056
    %v3109 = vpop.f32.mrf.mxu0
    %v3110 = vadd.f32 0.0, %v3109
    %3111 = vmatmul.f32.gmra.mxu0 %v3057
    %v3112 = vpop.f32.mrf.mxu0
    %v3113 = vadd.f32 0.0, %v3112
    %3114 = vmatmul.f32.gmra.mxu0 %v3058
    %v3115 = vpop.f32.mrf.mxu0
    %v3116 = vadd.f32 0.0, %v3115
    %3117 = vmatmul.f32.gmra.mxu0 %v3059
    %v3118 = vpop.f32.mrf.mxu0
    %v3119 = vadd.f32 0.0, %v3118
    %3120 = vmatmul.f32.gmra.mxu0 %v3060
    %v3121 = vpop.f32.mrf.mxu0
    %v3122 = vadd.f32 0.0, %v3121
    %3123 = vmatmul.f32.gmra.mxu0 %v3061
    %v3124 = vpop.f32.mrf.mxu0
    %v3125 = vadd.f32 0.0, %v3124
    %3126 = vdwg.mxu0
    %3127 = vmatpush.msra.mxu0 %v2174
    %3128 = vmatpush.msra.mxu0 %v2171
    %3129 = vmatpush.msra.mxu0 %v2168
    %3130 = vmatpush.msra.mxu0 %v2165
    %3131 = vmatpush.msra.mxu0 %v2162
    %3132 = vmatpush.msra.mxu0 %v2159
    %3133 = vmatpush.msra.mxu0 %v2156
    %3134 = vmatpush.msra.mxu0 %v2153
    %3135 = vmatpush.msra.mxu0 %v2150
    %3136 = vmatpush.msra.mxu0 %v2147
    %3137 = vmatpush.msra.mxu0 %v2144
    %3138 = vmatpush.msra.mxu0 %v2141
    %3139 = vmatpush.msra.mxu0 %v2138
    %3140 = vmatpush.msra.mxu0 %v2135
    %3141 = vmatpush.msra.mxu0 %v2132
    %3142 = vmatpush.msra.mxu0 %v2129
    %3143 = vmatmul.f32.gmra.mxu0 %v2757
    %v3144 = vpop.f32.mrf.mxu0
    %v3145 = vadd.f32 %v3080, %v3144
    %3146 = vmatmul.f32.gmra.mxu0 %v2758
    %v3147 = vpop.f32.mrf.mxu0
    %v3148 = vadd.f32 %v3083, %v3147
    %3149 = vmatmul.f32.gmra.mxu0 %v2759
    %v3150 = vpop.f32.mrf.mxu0
    %v3151 = vadd.f32 %v3086, %v3150
    %3152 = vmatmul.f32.gmra.mxu0 %v2760
    %v3153 = vpop.f32.mrf.mxu0
    %v3154 = vadd.f32 %v3089, %v3153
    %3155 = vmatmul.f32.gmra.mxu0 %v2761
    %v3156 = vpop.f32.mrf.mxu0
    %v3157 = vadd.f32 %v3092, %v3156
    %3158 = vmatmul.f32.gmra.mxu0 %v2762
    %v3159 = vpop.f32.mrf.mxu0
    %v3160 = vadd.f32 %v3095, %v3159
    %3161 = vmatmul.f32.gmra.mxu0 %v2763
    %v3162 = vpop.f32.mrf.mxu0
    %v3163 = vadd.f32 %v3098, %v3162
    %3164 = vmatmul.f32.gmra.mxu0 %v2764
    %v3165 = vpop.f32.mrf.mxu0
    %v3166 = vadd.f32 %v3101, %v3165
    %3167 = vmatmul.f32.gmra.mxu0 %v2765
    %v3168 = vpop.f32.mrf.mxu0
    %v3169 = vadd.f32 %v3104, %v3168
    %3170 = vmatmul.f32.gmra.mxu0 %v2766
    %v3171 = vpop.f32.mrf.mxu0
    %v3172 = vadd.f32 %v3107, %v3171
    %3173 = vmatmul.f32.gmra.mxu0 %v2767
    %v3174 = vpop.f32.mrf.mxu0
    %v3175 = vadd.f32 %v3110, %v3174
    %3176 = vmatmul.f32.gmra.mxu0 %v2768
    %v3177 = vpop.f32.mrf.mxu0
    %v3178 = vadd.f32 %v3113, %v3177
    %3179 = vmatmul.f32.gmra.mxu0 %v2769
    %v3180 = vpop.f32.mrf.mxu0
    %v3181 = vadd.f32 %v3116, %v3180
    %3182 = vmatmul.f32.gmra.mxu0 %v2770
    %v3183 = vpop.f32.mrf.mxu0
    %v3184 = vadd.f32 %v3119, %v3183
    %3185 = vmatmul.f32.gmra.mxu0 %v2771
    %v3186 = vpop.f32.mrf.mxu0
    %v3187 = vadd.f32 %v3122, %v3186
    %3188 = vmatmul.f32.gmra.mxu0 %v2772
    %v3189 = vpop.f32.mrf.mxu0
    %v3190 = vadd.f32 %v3125, %v3189
    %3191 = vdwg.mxu0
    %3192 = vset.pattern.permute.xlu0 6
    %3193 = vperm.xlu0 %3192, %v2389
    %v3194 = vpop.permute.xlu0 %3193
    %3196 = vset.pattern.permute.xlu0 6
    %3197 = vperm.xlu0 %3196, %v2392
    %v3198 = vpop.permute.xlu0 %3197
    %3200 = vset.pattern.permute.xlu0 6
    %3201 = vperm.xlu0 %3200, %v2395
    %v3202 = vpop.permute.xlu0 %3201
    %3204 = vset.pattern.permute.xlu0 6
    %3205 = vperm.xlu0 %3204, %v2398
    %v3206 = vpop.permute.xlu0 %3205
    %3208 = vset.pattern.permute.xlu0 6
    %3209 = vperm.xlu0 %3208, %v2401
    %v3210 = vpop.permute.xlu0 %3209
    %3212 = vset.pattern.permute.xlu0 6
    %3213 = vperm.xlu0 %3212, %v2404
    %v3214 = vpop.permute.xlu0 %3213
    %3216 = vset.pattern.permute.xlu0 6
    %3217 = vperm.xlu0 %3216, %v2407
    %v3218 = vpop.permute.xlu0 %3217
    %3220 = vset.pattern.permute.xlu0 6
    %3221 = vperm.xlu0 %3220, %v2410
    %v3222 = vpop.permute.xlu0 %3221
    %3224 = vset.pattern.permute.xlu0 6
    %3225 = vperm.xlu0 %3224, %v2413
    %v3226 = vpop.permute.xlu0 %3225
    %3228 = vset.pattern.permute.xlu0 6
    %3229 = vperm.xlu0 %3228, %v2416
    %v3230 = vpop.permute.xlu0 %3229
    %3232 = vset.pattern.permute.xlu0 6
    %3233 = vperm.xlu0 %3232, %v2419
    %v3234 = vpop.permute.xlu0 %3233
    %3236 = vset.pattern.permute.xlu0 6
    %3237 = vperm.xlu0 %3236, %v2422
    %v3238 = vpop.permute.xlu0 %3237
    %3240 = vset.pattern.permute.xlu0 6
    %3241 = vperm.xlu0 %3240, %v2425
    %v3242 = vpop.permute.xlu0 %3241
    %3244 = vset.pattern.permute.xlu0 6
    %3245 = vperm.xlu0 %3244, %v2428
    %v3246 = vpop.permute.xlu0 %3245
    %3248 = vset.pattern.permute.xlu0 6
    %3249 = vperm.xlu0 %3248, %v2431
    %v3250 = vpop.permute.xlu0 %3249
    %3252 = vset.pattern.permute.xlu0 6
    %3253 = vperm.xlu0 %3252, %v2434
    %v3254 = vpop.permute.xlu0 %3253
    %v3256 = vperm.slane %v2452, 2
    %v3257 = vadd.f32 %v3194, %v3256
    %v3258 = vadd.f32 %v3198, %v3256
    %v3259 = vadd.f32 %v3202, %v3256
    %v3260 = vadd.f32 %v3206, %v3256
    %v3261 = vadd.f32 %v3210, %v3256
    %v3262 = vadd.f32 %v3214, %v3256
    %v3263 = vadd.f32 %v3218, %v3256
    %v3264 = vadd.f32 %v3222, %v3256
    %v3265 = vadd.f32 %v3226, %v3256
    %v3266 = vadd.f32 %v3230, %v3256
    %v3267 = vadd.f32 %v3234, %v3256
    %v3268 = vadd.f32 %v3238, %v3256
    %v3269 = vadd.f32 %v3242, %v3256
    %v3270 = vadd.f32 %v3246, %v3256
    %v3271 = vadd.f32 %v3250, %v3256
    %v3272 = vadd.f32 %v3254, %v3256
    %v3273 = vmul.f32 %v3257, 0.2
    %v3274 = vmul.f32 %v3258, 0.2
    %v3275 = vmul.f32 %v3259, 0.2
    %v3276 = vmul.f32 %v3260, 0.2
    %v3277 = vmul.f32 %v3261, 0.2
    %v3278 = vmul.f32 %v3262, 0.2
    %v3279 = vmul.f32 %v3263, 0.2
    %v3280 = vmul.f32 %v3264, 0.2
    %v3281 = vmul.f32 %v3265, 0.2
    %v3282 = vmul.f32 %v3266, 0.2
    %v3283 = vmul.f32 %v3267, 0.2
    %v3284 = vmul.f32 %v3268, 0.2
    %v3285 = vmul.f32 %v3269, 0.2
    %v3286 = vmul.f32 %v3270, 0.2
    %v3287 = vmul.f32 %v3271, 0.2
    %v3288 = vmul.f32 %v3272, 0.2
    %v3289 = vmax.f32 %v3257, %v3273
    %v3290 = vmax.f32 %v3258, %v3274
    %v3291 = vmax.f32 %v3259, %v3275
    %v3292 = vmax.f32 %v3260, %v3276
    %v3293 = vmax.f32 %v3261, %v3277
    %v3294 = vmax.f32 %v3262, %v3278
    %v3295 = vmax.f32 %v3263, %v3279
    %v3296 = vmax.f32 %v3264, %v3280
    %v3297 = vmax.f32 %v3265, %v3281
    %v3298 = vmax.f32 %v3266, %v3282
    %v3299 = vmax.f32 %v3267, %v3283
    %v3300 = vmax.f32 %v3268, %v3284
    %v3301 = vmax.f32 %v3269, %v3285
    %v3302 = vmax.f32 %v3270, %v3286
    %v3303 = vmax.f32 %v3271, %v3287
    %v3304 = vmax.f32 %v3272, %v3288
    %v3305 = vadd.f32 %v3289, %v93
    %v3306 = vadd.f32 %v3290, %v94
    %v3307 = vadd.f32 %v3291, %v95
    %v3308 = vadd.f32 %v3292, %v96
    %v3309 = vadd.f32 %v3293, %v97
    %v3310 = vadd.f32 %v3294, %v98
    %v3311 = vadd.f32 %v3295, %v99
    %v3312 = vadd.f32 %v3296, %v100
    %v3313 = vadd.f32 %v3297, %v101
    %v3314 = vadd.f32 %v3298, %v102
    %v3315 = vadd.f32 %v3299, %v103
    %v3316 = vadd.f32 %v3300, %v104
    %v3317 = vadd.f32 %v3301, %v105
    %v3318 = vadd.f32 %v3302, %v106
    %v3319 = vadd.f32 %v3303, %v107
    %v3320 = vadd.f32 %v3304, %v108
    %3321 = vmax.xlane.f32.xlu0 %v3305
    %v3322 = vpop.xlane.xlu0 %3321
    %3323 = vmax.xlane.f32.xlu0 %v3306
    %v3324 = vpop.xlane.xlu0 %3323
    %3325 = vmax.xlane.f32.xlu0 %v3307
    %v3326 = vpop.xlane.xlu0 %3325
    %3327 = vmax.xlane.f32.xlu0 %v3308
    %v3328 = vpop.xlane.xlu0 %3327
    %3329 = vmax.xlane.f32.xlu0 %v3309
    %v3330 = vpop.xlane.xlu0 %3329
    %3331 = vmax.xlane.f32.xlu0 %v3310
    %v3332 = vpop.xlane.xlu0 %3331
    %3333 = vmax.xlane.f32.xlu0 %v3311
    %v3334 = vpop.xlane.xlu0 %3333
    %3335 = vmax.xlane.f32.xlu0 %v3312
    %v3336 = vpop.xlane.xlu0 %3335
    %3337 = vmax.xlane.f32.xlu0 %v3313
    %v3338 = vpop.xlane.xlu0 %3337
    %3339 = vmax.xlane.f32.xlu0 %v3314
    %v3340 = vpop.xlane.xlu0 %3339
    %3341 = vmax.xlane.f32.xlu0 %v3315
    %v3342 = vpop.xlane.xlu0 %3341
    %3343 = vmax.xlane.f32.xlu0 %v3316
    %v3344 = vpop.xlane.xlu0 %3343
    %3345 = vmax.xlane.f32.xlu0 %v3317
    %v3346 = vpop.xlane.xlu0 %3345
    %3347 = vmax.xlane.f32.xlu0 %v3318
    %v3348 = vpop.xlane.xlu0 %3347
    %3349 = vmax.xlane.f32.xlu0 %v3319
    %v3350 = vpop.xlane.xlu0 %3349
    %3351 = vmax.xlane.f32.xlu0 %v3320
    %v3352 = vpop.xlane.xlu0 %3351
    %v3353 = vsub.f32 %v3305, %v3322
    %v3354 = vsub.f32 %v3306, %v3324
    %v3355 = vsub.f32 %v3307, %v3326
    %v3356 = vsub.f32 %v3308, %v3328
    %v3357 = vsub.f32 %v3309, %v3330
    %v3358 = vsub.f32 %v3310, %v3332
    %v3359 = vsub.f32 %v3311, %v3334
    %v3360 = vsub.f32 %v3312, %v3336
    %v3361 = vsub.f32 %v3313, %v3338
    %v3362 = vsub.f32 %v3314, %v3340
    %v3363 = vsub.f32 %v3315, %v3342
    %v3364 = vsub.f32 %v3316, %v3344
    %v3365 = vsub.f32 %v3317, %v3346
    %v3366 = vsub.f32 %v3318, %v3348
    %v3367 = vsub.f32 %v3319, %v3350
    %v3368 = vsub.f32 %v3320, %v3352
    %v3369 = vmul.f32 %v3353, 1.442695
    %v3370 = vpow.pop %v3369
    %v3371 = vmul.f32 %v3354, 1.442695
    %v3372 = vpow.pop %v3371
    %v3373 = vmul.f32 %v3355, 1.442695
    %v3374 = vpow.pop %v3373
    %v3375 = vmul.f32 %v3356, 1.442695
    %v3376 = vpow.pop %v3375
    %v3377 = vmul.f32 %v3357, 1.442695
    %v3378 = vpow.pop %v3377
    %v3379 = vmul.f32 %v3358, 1.442695
    %v3380 = vpow.pop %v3379
    %v3381 = vmul.f32 %v3359, 1.442695
    %v3382 = vpow.pop %v3381
    %v3383 = vmul.f32 %v3360, 1.442695
    %v3384 = vpow.pop %v3383
    %v3385 = vmul.f32 %v3361, 1.442695
    %v3386 = vpow.pop %v3385
    %v3387 = vmul.f32 %v3362, 1.442695
    %v3388 = vpow.pop %v3387
    %v3389 = vmul.f32 %v3363, 1.442695
    %v3390 = vpow.pop %v3389
    %v3391 = vmul.f32 %v3364, 1.442695
    %v3392 = vpow.pop %v3391
    %v3393 = vmul.f32 %v3365, 1.442695
    %v3394 = vpow.pop %v3393
    %v3395 = vmul.f32 %v3366, 1.442695
    %v3396 = vpow.pop %v3395
    %v3397 = vmul.f32 %v3367, 1.442695
    %v3398 = vpow.pop %v3397
    %v3399 = vmul.f32 %v3368, 1.442695
    %v3400 = vpow.pop %v3399
    %3401 = vadd.xlane.f32.xlu0 %v3370
    %v3402 = vpop.xlane.xlu0 %3401
    %3403 = vadd.xlane.f32.xlu0 %v3372
    %v3404 = vpop.xlane.xlu0 %3403
    %3405 = vadd.xlane.f32.xlu0 %v3374
    %v3406 = vpop.xlane.xlu0 %3405
    %3407 = vadd.xlane.f32.xlu0 %v3376
    %v3408 = vpop.xlane.xlu0 %3407
    %3409 = vadd.xlane.f32.xlu0 %v3378
    %v3410 = vpop.xlane.xlu0 %3409
    %3411 = vadd.xlane.f32.xlu0 %v3380
    %v3412 = vpop.xlane.xlu0 %3411
    %3413 = vadd.xlane.f32.xlu0 %v3382
    %v3414 = vpop.xlane.xlu0 %3413
    %3415 = vadd.xlane.f32.xlu0 %v3384
    %v3416 = vpop.xlane.xlu0 %3415
    %3417 = vadd.xlane.f32.xlu0 %v3386
    %v3418 = vpop.xlane.xlu0 %3417
    %3419 = vadd.xlane.f32.xlu0 %v3388
    %v3420 = vpop.xlane.xlu0 %3419
    %3421 = vadd.xlane.f32.xlu0 %v3390
    %v3422 = vpop.xlane.xlu0 %3421
    %3423 = vadd.xlane.f32.xlu0 %v3392
    %v3424 = vpop.xlane.xlu0 %3423
    %3425 = vadd.xlane.f32.xlu0 %v3394
    %v3426 = vpop.xlane.xlu0 %3425
    %3427 = vadd.xlane.f32.xlu0 %v3396
    %v3428 = vpop.xlane.xlu0 %3427
    %3429 = vadd.xlane.f32.xlu0 %v3398
    %v3430 = vpop.xlane.xlu0 %3429
    %3431 = vadd.xlane.f32.xlu0 %v3400
    %v3432 = vpop.xlane.xlu0 %3431
    %v3433 = vrcp.pop %v3402
    %v3434 = vrcp.pop %v3404
    %v3435 = vrcp.pop %v3406
    %v3436 = vrcp.pop %v3408
    %v3437 = vrcp.pop %v3410
    %v3438 = vrcp.pop %v3412
    %v3439 = vrcp.pop %v3414
    %v3440 = vrcp.pop %v3416
    %v3441 = vrcp.pop %v3418
    %v3442 = vrcp.pop %v3420
    %v3443 = vrcp.pop %v3422
    %v3444 = vrcp.pop %v3424
    %v3445 = vrcp.pop %v3426
    %v3446 = vrcp.pop %v3428
    %v3447 = vrcp.pop %v3430
    %v3448 = vrcp.pop %v3432
    %v3449 = vmul.f32 %v3433, 0.25
    %v3450 = vmul.f32 %v3434, 0.25
    %v3451 = vmul.f32 %v3435, 0.25
    %v3452 = vmul.f32 %v3436, 0.25
    %v3453 = vmul.f32 %v3437, 0.25
    %v3454 = vmul.f32 %v3438, 0.25
    %v3455 = vmul.f32 %v3439, 0.25
    %v3456 = vmul.f32 %v3440, 0.25
    %v3457 = vmul.f32 %v3441, 0.25
    %v3458 = vmul.f32 %v3442, 0.25
    %v3459 = vmul.f32 %v3443, 0.25
    %v3460 = vmul.f32 %v3444, 0.25
    %v3461 = vmul.f32 %v3445, 0.25
    %v3462 = vmul.f32 %v3446, 0.25
    %v3463 = vmul.f32 %v3447, 0.25
    %v3464 = vmul.f32 %v3448, 0.25
    %v3465 = vmul.f32 %v3370, %v3449
    %v3466 = vmul.f32 %v3372, %v3450
    %v3467 = vmul.f32 %v3374, %v3451
    %v3468 = vmul.f32 %v3376, %v3452
    %v3469 = vmul.f32 %v3378, %v3453
    %v3470 = vmul.f32 %v3380, %v3454
    %v3471 = vmul.f32 %v3382, %v3455
    %v3472 = vmul.f32 %v3384, %v3456
    %v3473 = vmul.f32 %v3386, %v3457
    %v3474 = vmul.f32 %v3388, %v3458
    %v3475 = vmul.f32 %v3390, %v3459
    %v3476 = vmul.f32 %v3392, %v3460
    %v3477 = vmul.f32 %v3394, %v3461
    %v3478 = vmul.f32 %v3396, %v3462
    %v3479 = vmul.f32 %v3398, %v3463
    %v3480 = vmul.f32 %v3400, %v3464
    %3481 = vmatpush.msra.mxu0 %v2304
    %3482 = vmatpush.msra.mxu0 %v2301
    %3483 = vmatpush.msra.mxu0 %v2298
    %3484 = vmatpush.msra.mxu0 %v2295
    %3485 = vmatpush.msra.mxu0 %v2292
    %3486 = vmatpush.msra.mxu0 %v2289
    %3487 = vmatpush.msra.mxu0 %v2286
    %3488 = vmatpush.msra.mxu0 %v2283
    %3489 = vmatpush.msra.mxu0 %v2280
    %3490 = vmatpush.msra.mxu0 %v2277
    %3491 = vmatpush.msra.mxu0 %v2274
    %3492 = vmatpush.msra.mxu0 %v2271
    %3493 = vmatpush.msra.mxu0 %v2268
    %3494 = vmatpush.msra.mxu0 %v2265
    %3495 = vmatpush.msra.mxu0 %v2262
    %3496 = vmatpush.msra.mxu0 %v2259
    %3497 = vmatmul.f32.gmra.mxu0 %v3465
    %v3498 = vpop.f32.mrf.mxu0
    %v3499 = vadd.f32 0.0, %v3498
    %3500 = vmatmul.f32.gmra.mxu0 %v3466
    %v3501 = vpop.f32.mrf.mxu0
    %v3502 = vadd.f32 0.0, %v3501
    %3503 = vmatmul.f32.gmra.mxu0 %v3467
    %v3504 = vpop.f32.mrf.mxu0
    %v3505 = vadd.f32 0.0, %v3504
    %3506 = vmatmul.f32.gmra.mxu0 %v3468
    %v3507 = vpop.f32.mrf.mxu0
    %v3508 = vadd.f32 0.0, %v3507
    %3509 = vmatmul.f32.gmra.mxu0 %v3469
    %v3510 = vpop.f32.mrf.mxu0
    %v3511 = vadd.f32 0.0, %v3510
    %3512 = vmatmul.f32.gmra.mxu0 %v3470
    %v3513 = vpop.f32.mrf.mxu0
    %v3514 = vadd.f32 0.0, %v3513
    %3515 = vmatmul.f32.gmra.mxu0 %v3471
    %v3516 = vpop.f32.mrf.mxu0
    %v3517 = vadd.f32 0.0, %v3516
    %3518 = vmatmul.f32.gmra.mxu0 %v3472
    %v3519 = vpop.f32.mrf.mxu0
    %v3520 = vadd.f32 0.0, %v3519
    %3521 = vmatmul.f32.gmra.mxu0 %v3473
    %v3522 = vpop.f32.mrf.mxu0
    %v3523 = vadd.f32 0.0, %v3522
    %3524 = vmatmul.f32.gmra.mxu0 %v3474
    %v3525 = vpop.f32.mrf.mxu0
    %v3526 = vadd.f32 0.0, %v3525
    %3527 = vmatmul.f32.gmra.mxu0 %v3475
    %v3528 = vpop.f32.mrf.mxu0
    %v3529 = vadd.f32 0.0, %v3528
    %3530 = vmatmul.f32.gmra.mxu0 %v3476
    %v3531 = vpop.f32.mrf.mxu0
    %v3532 = vadd.f32 0.0, %v3531
    %3533 = vmatmul.f32.gmra.mxu0 %v3477
    %v3534 = vpop.f32.mrf.mxu0
    %v3535 = vadd.f32 0.0, %v3534
    %3536 = vmatmul.f32.gmra.mxu0 %v3478
    %v3537 = vpop.f32.mrf.mxu0
    %v3538 = vadd.f32 0.0, %v3537
    %3539 = vmatmul.f32.gmra.mxu0 %v3479
    %v3540 = vpop.f32.mrf.mxu0
    %v3541 = vadd.f32 0.0, %v3540
    %3542 = vmatmul.f32.gmra.mxu0 %v3480
    %v3543 = vpop.f32.mrf.mxu0
    %v3544 = vadd.f32 0.0, %v3543
    %3545 = vdwg.mxu0
    %v3546 = vadd.f32 %v3145, %v3499
    %v3547 = vadd.f32 %v3148, %v3502
    %v3548 = vadd.f32 %v3151, %v3505
    %v3549 = vadd.f32 %v3154, %v3508
    %v3550 = vadd.f32 %v3157, %v3511
    %v3551 = vadd.f32 %v3160, %v3514
    %v3552 = vadd.f32 %v3163, %v3517
    %v3553 = vadd.f32 %v3166, %v3520
    %v3554 = vadd.f32 %v3169, %v3523
    %v3555 = vadd.f32 %v3172, %v3526
    %v3556 = vadd.f32 %v3175, %v3529
    %v3557 = vadd.f32 %v3178, %v3532
    %v3558 = vadd.f32 %v3181, %v3535
    %v3559 = vadd.f32 %v3184, %v3538
    %v3560 = vadd.f32 %v3187, %v3541
    %v3561 = vadd.f32 %v3190, %v3544
    %3562 = vset.pattern.permute.xlu0 7
    %3563 = vperm.xlu0 %3562, %v2389
    %v3564 = vpop.permute.xlu0 %3563
    %3566 = vset.pattern.permute.xlu0 7
    %3567 = vperm.xlu0 %3566, %v2392
    %v3568 = vpop.permute.xlu0 %3567
    %3570 = vset.pattern.permute.xlu0 7
    %3571 = vperm.xlu0 %3570, %v2395
    %v3572 = vpop.permute.xlu0 %3571
    %3574 = vset.pattern.permute.xlu0 7
    %3575 = vperm.xlu0 %3574, %v2398
    %v3576 = vpop.permute.xlu0 %3575
    %3578 = vset.pattern.permute.xlu0 7
    %3579 = vperm.xlu0 %3578, %v2401
    %v3580 = vpop.permute.xlu0 %3579
    %3582 = vset.pattern.permute.xlu0 7
    %3583 = vperm.xlu0 %3582, %v2404
    %v3584 = vpop.permute.xlu0 %3583
    %3586 = vset.pattern.permute.xlu0 7
    %3587 = vperm.xlu0 %3586, %v2407
    %v3588 = vpop.permute.xlu0 %3587
    %3590 = vset.pattern.permute.xlu0 7
    %3591 = vperm.xlu0 %3590, %v2410
    %v3592 = vpop.permute.xlu0 %3591
    %3594 = vset.pattern.permute.xlu0 7
    %3595 = vperm.xlu0 %3594, %v2413
    %v3596 = vpop.permute.xlu0 %3595
    %3598 = vset.pattern.permute.xlu0 7
    %3599 = vperm.xlu0 %3598, %v2416
    %v3600 = vpop.permute.xlu0 %3599
    %3602 = vset.pattern.permute.xlu0 7
    %3603 = vperm.xlu0 %3602, %v2419
    %v3604 = vpop.permute.xlu0 %3603
    %3606 = vset.pattern.permute.xlu0 7
    %3607 = vperm.xlu0 %3606, %v2422
    %v3608 = vpop.permute.xlu0 %3607
    %3610 = vset.pattern.permute.xlu0 7
    %3611 = vperm.xlu0 %3610, %v2425
    %v3612 = vpop.permute.xlu0 %3611
    %3614 = vset.pattern.permute.xlu0 7
    %3615 = vperm.xlu0 %3614, %v2428
    %v3616 = vpop.permute.xlu0 %3615
    %3618 = vset.pattern.permute.xlu0 7
    %3619 = vperm.xlu0 %3618, %v2431
    %v3620 = vpop.permute.xlu0 %3619
    %3622 = vset.pattern.permute.xlu0 7
    %3623 = vperm.xlu0 %3622, %v2434
    %v3624 = vpop.permute.xlu0 %3623
    %v3626 = vperm.slane %v2452, 3
    %v3627 = vadd.f32 %v3564, %v3626
    %v3628 = vadd.f32 %v3568, %v3626
    %v3629 = vadd.f32 %v3572, %v3626
    %v3630 = vadd.f32 %v3576, %v3626
    %v3631 = vadd.f32 %v3580, %v3626
    %v3632 = vadd.f32 %v3584, %v3626
    %v3633 = vadd.f32 %v3588, %v3626
    %v3634 = vadd.f32 %v3592, %v3626
    %v3635 = vadd.f32 %v3596, %v3626
    %v3636 = vadd.f32 %v3600, %v3626
    %v3637 = vadd.f32 %v3604, %v3626
    %v3638 = vadd.f32 %v3608, %v3626
    %v3639 = vadd.f32 %v3612, %v3626
    %v3640 = vadd.f32 %v3616, %v3626
    %v3641 = vadd.f32 %v3620, %v3626
    %v3642 = vadd.f32 %v3624, %v3626
    %v3643 = vmul.f32 %v3627, 0.2
    %v3644 = vmul.f32 %v3628, 0.2
    %v3645 = vmul.f32 %v3629, 0.2
    %v3646 = vmul.f32 %v3630, 0.2
    %v3647 = vmul.f32 %v3631, 0.2
    %v3648 = vmul.f32 %v3632, 0.2
    %v3649 = vmul.f32 %v3633, 0.2
    %v3650 = vmul.f32 %v3634, 0.2
    %v3651 = vmul.f32 %v3635, 0.2
    %v3652 = vmul.f32 %v3636, 0.2
    %v3653 = vmul.f32 %v3637, 0.2
    %v3654 = vmul.f32 %v3638, 0.2
    %v3655 = vmul.f32 %v3639, 0.2
    %v3656 = vmul.f32 %v3640, 0.2
    %v3657 = vmul.f32 %v3641, 0.2
    %v3658 = vmul.f32 %v3642, 0.2
    %v3659 = vmax.f32 %v3627, %v3643
    %v3660 = vmax.f32 %v3628, %v3644
    %v3661 = vmax.f32 %v3629, %v3645
    %v3662 = vmax.f32 %v3630, %v3646
    %v3663 = vmax.f32 %v3631, %v3647
    %v3664 = vmax.f32 %v3632, %v3648
    %v3665 = vmax.f32 %v3633, %v3649
    %v3666 = vmax.f32 %v3634, %v3650
    %v3667 = vmax.f32 %v3635, %v3651
    %v3668 = vmax.f32 %v3636, %v3652
    %v3669 = vmax.f32 %v3637, %v3653
    %v3670 = vmax.f32 %v3638, %v3654
    %v3671 = vmax.f32 %v3639, %v3655
    %v3672 = vmax.f32 %v3640, %v3656
    %v3673 = vmax.f32 %v3641, %v3657
    %v3674 = vmax.f32 %v3642, %v3658
    %v3675 = vadd.f32 %v3659, %v93
    %v3676 = vadd.f32 %v3660, %v94
    %v3677 = vadd.f32 %v3661, %v95
    %v3678 = vadd.f32 %v3662, %v96
    %v3679 = vadd.f32 %v3663, %v97
    %v3680 = vadd.f32 %v3664, %v98
    %v3681 = vadd.f32 %v3665, %v99
    %v3682 = vadd.f32 %v3666, %v100
    %v3683 = vadd.f32 %v3667, %v101
    %v3684 = vadd.f32 %v3668, %v102
    %v3685 = vadd.f32 %v3669, %v103
    %v3686 = vadd.f32 %v3670, %v104
    %v3687 = vadd.f32 %v3671, %v105
    %v3688 = vadd.f32 %v3672, %v106
    %v3689 = vadd.f32 %v3673, %v107
    %v3690 = vadd.f32 %v3674, %v108
    %3691 = vmax.xlane.f32.xlu0 %v3675
    %v3692 = vpop.xlane.xlu0 %3691
    %3693 = vmax.xlane.f32.xlu0 %v3676
    %v3694 = vpop.xlane.xlu0 %3693
    %3695 = vmax.xlane.f32.xlu0 %v3677
    %v3696 = vpop.xlane.xlu0 %3695
    %3697 = vmax.xlane.f32.xlu0 %v3678
    %v3698 = vpop.xlane.xlu0 %3697
    %3699 = vmax.xlane.f32.xlu0 %v3679
    %v3700 = vpop.xlane.xlu0 %3699
    %3701 = vmax.xlane.f32.xlu0 %v3680
    %v3702 = vpop.xlane.xlu0 %3701
    %3703 = vmax.xlane.f32.xlu0 %v3681
    %v3704 = vpop.xlane.xlu0 %3703
    %3705 = vmax.xlane.f32.xlu0 %v3682
    %v3706 = vpop.xlane.xlu0 %3705
    %3707 = vmax.xlane.f32.xlu0 %v3683
    %v3708 = vpop.xlane.xlu0 %3707
    %3709 = vmax.xlane.f32.xlu0 %v3684
    %v3710 = vpop.xlane.xlu0 %3709
    %3711 = vmax.xlane.f32.xlu0 %v3685
    %v3712 = vpop.xlane.xlu0 %3711
    %3713 = vmax.xlane.f32.xlu0 %v3686
    %v3714 = vpop.xlane.xlu0 %3713
    %3715 = vmax.xlane.f32.xlu0 %v3687
    %v3716 = vpop.xlane.xlu0 %3715
    %3717 = vmax.xlane.f32.xlu0 %v3688
    %v3718 = vpop.xlane.xlu0 %3717
    %3719 = vmax.xlane.f32.xlu0 %v3689
    %v3720 = vpop.xlane.xlu0 %3719
    %3721 = vmax.xlane.f32.xlu0 %v3690
    %v3722 = vpop.xlane.xlu0 %3721
    %v3723 = vsub.f32 %v3675, %v3692
    %v3724 = vsub.f32 %v3676, %v3694
    %v3725 = vsub.f32 %v3677, %v3696
    %v3726 = vsub.f32 %v3678, %v3698
    %v3727 = vsub.f32 %v3679, %v3700
    %v3728 = vsub.f32 %v3680, %v3702
    %v3729 = vsub.f32 %v3681, %v3704
    %v3730 = vsub.f32 %v3682, %v3706
    %v3731 = vsub.f32 %v3683, %v3708
    %v3732 = vsub.f32 %v3684, %v3710
    %v3733 = vsub.f32 %v3685, %v3712
    %v3734 = vsub.f32 %v3686, %v3714
    %v3735 = vsub.f32 %v3687, %v3716
    %v3736 = vsub.f32 %v3688, %v3718
    %v3737 = vsub.f32 %v3689, %v3720
    %v3738 = vsub.f32 %v3690, %v3722
    %v3739 = vmul.f32 %v3723, 1.442695
    %v3740 = vpow.pop %v3739
    %v3741 = vmul.f32 %v3724, 1.442695
    %v3742 = vpow.pop %v3741
    %v3743 = vmul.f32 %v3725, 1.442695
    %v3744 = vpow.pop %v3743
    %v3745 = vmul.f32 %v3726, 1.442695
    %v3746 = vpow.pop %v3745
    %v3747 = vmul.f32 %v3727, 1.442695
    %v3748 = vpow.pop %v3747
    %v3749 = vmul.f32 %v3728, 1.442695
    %v3750 = vpow.pop %v3749
    %v3751 = vmul.f32 %v3729, 1.442695
    %v3752 = vpow.pop %v3751
    %v3753 = vmul.f32 %v3730, 1.442695
    %v3754 = vpow.pop %v3753
    %v3755 = vmul.f32 %v3731, 1.442695
    %v3756 = vpow.pop %v3755
    %v3757 = vmul.f32 %v3732, 1.442695
    %v3758 = vpow.pop %v3757
    %v3759 = vmul.f32 %v3733, 1.442695
    %v3760 = vpow.pop %v3759
    %v3761 = vmul.f32 %v3734, 1.442695
    %v3762 = vpow.pop %v3761
    %v3763 = vmul.f32 %v3735, 1.442695
    %v3764 = vpow.pop %v3763
    %v3765 = vmul.f32 %v3736, 1.442695
    %v3766 = vpow.pop %v3765
    %v3767 = vmul.f32 %v3737, 1.442695
    %v3768 = vpow.pop %v3767
    %v3769 = vmul.f32 %v3738, 1.442695
    %v3770 = vpow.pop %v3769
    %3771 = vadd.xlane.f32.xlu0 %v3740
    %v3772 = vpop.xlane.xlu0 %3771
    %3773 = vadd.xlane.f32.xlu0 %v3742
    %v3774 = vpop.xlane.xlu0 %3773
    %3775 = vadd.xlane.f32.xlu0 %v3744
    %v3776 = vpop.xlane.xlu0 %3775
    %3777 = vadd.xlane.f32.xlu0 %v3746
    %v3778 = vpop.xlane.xlu0 %3777
    %3779 = vadd.xlane.f32.xlu0 %v3748
    %v3780 = vpop.xlane.xlu0 %3779
    %3781 = vadd.xlane.f32.xlu0 %v3750
    %v3782 = vpop.xlane.xlu0 %3781
    %3783 = vadd.xlane.f32.xlu0 %v3752
    %v3784 = vpop.xlane.xlu0 %3783
    %3785 = vadd.xlane.f32.xlu0 %v3754
    %v3786 = vpop.xlane.xlu0 %3785
    %3787 = vadd.xlane.f32.xlu0 %v3756
    %v3788 = vpop.xlane.xlu0 %3787
    %3789 = vadd.xlane.f32.xlu0 %v3758
    %v3790 = vpop.xlane.xlu0 %3789
    %3791 = vadd.xlane.f32.xlu0 %v3760
    %v3792 = vpop.xlane.xlu0 %3791
    %3793 = vadd.xlane.f32.xlu0 %v3762
    %v3794 = vpop.xlane.xlu0 %3793
    %3795 = vadd.xlane.f32.xlu0 %v3764
    %v3796 = vpop.xlane.xlu0 %3795
    %3797 = vadd.xlane.f32.xlu0 %v3766
    %v3798 = vpop.xlane.xlu0 %3797
    %3799 = vadd.xlane.f32.xlu0 %v3768
    %v3800 = vpop.xlane.xlu0 %3799
    %3801 = vadd.xlane.f32.xlu0 %v3770
    %v3802 = vpop.xlane.xlu0 %3801
    %v3803 = vrcp.pop %v3772
    %v3804 = vrcp.pop %v3774
    %v3805 = vrcp.pop %v3776
    %v3806 = vrcp.pop %v3778
    %v3807 = vrcp.pop %v3780
    %v3808 = vrcp.pop %v3782
    %v3809 = vrcp.pop %v3784
    %v3810 = vrcp.pop %v3786
    %v3811 = vrcp.pop %v3788
    %v3812 = vrcp.pop %v3790
    %v3813 = vrcp.pop %v3792
    %v3814 = vrcp.pop %v3794
    %v3815 = vrcp.pop %v3796
    %v3816 = vrcp.pop %v3798
    %v3817 = vrcp.pop %v3800
    %v3818 = vrcp.pop %v3802
    %v3819 = vmul.f32 %v3803, 0.25
    %v3820 = vmul.f32 %v3804, 0.25
    %v3821 = vmul.f32 %v3805, 0.25
    %v3822 = vmul.f32 %v3806, 0.25
    %v3823 = vmul.f32 %v3807, 0.25
    %v3824 = vmul.f32 %v3808, 0.25
    %v3825 = vmul.f32 %v3809, 0.25
    %v3826 = vmul.f32 %v3810, 0.25
    %v3827 = vmul.f32 %v3811, 0.25
    %v3828 = vmul.f32 %v3812, 0.25
    %v3829 = vmul.f32 %v3813, 0.25
    %v3830 = vmul.f32 %v3814, 0.25
    %v3831 = vmul.f32 %v3815, 0.25
    %v3832 = vmul.f32 %v3816, 0.25
    %v3833 = vmul.f32 %v3817, 0.25
    %v3834 = vmul.f32 %v3818, 0.25
    %v3835 = vmul.f32 %v3740, %v3819
    %v3836 = vmul.f32 %v3742, %v3820
    %v3837 = vmul.f32 %v3744, %v3821
    %v3838 = vmul.f32 %v3746, %v3822
    %v3839 = vmul.f32 %v3748, %v3823
    %v3840 = vmul.f32 %v3750, %v3824
    %v3841 = vmul.f32 %v3752, %v3825
    %v3842 = vmul.f32 %v3754, %v3826
    %v3843 = vmul.f32 %v3756, %v3827
    %v3844 = vmul.f32 %v3758, %v3828
    %v3845 = vmul.f32 %v3760, %v3829
    %v3846 = vmul.f32 %v3762, %v3830
    %v3847 = vmul.f32 %v3764, %v3831
    %v3848 = vmul.f32 %v3766, %v3832
    %v3849 = vmul.f32 %v3768, %v3833
    %v3850 = vmul.f32 %v3770, %v3834
    %3851 = vmatpush.msra.mxu0 %v2369
    %3852 = vmatpush.msra.mxu0 %v2366
    %3853 = vmatpush.msra.mxu0 %v2363
    %3854 = vmatpush.msra.mxu0 %v2360
    %3855 = vmatpush.msra.mxu0 %v2357
    %3856 = vmatpush.msra.mxu0 %v2354
    %3857 = vmatpush.msra.mxu0 %v2351
    %3858 = vmatpush.msra.mxu0 %v2348
    %3859 = vmatpush.msra.mxu0 %v2345
    %3860 = vmatpush.msra.mxu0 %v2342
    %3861 = vmatpush.msra.mxu0 %v2339
    %3862 = vmatpush.msra.mxu0 %v2336
    %3863 = vmatpush.msra.mxu0 %v2333
    %3864 = vmatpush.msra.mxu0 %v2330
    %3865 = vmatpush.msra.mxu0 %v2327
    %3866 = vmatpush.msra.mxu0 %v2324
    %3867 = vmatmul.f32.gmra.mxu0 %v3835
    %v3868 = vpop.f32.mrf.mxu0
    %v3869 = vadd.f32 0.0, %v3868
    %3870 = vmatmul.f32.gmra.mxu0 %v3836
    %v3871 = vpop.f32.mrf.mxu0
    %v3872 = vadd.f32 0.0, %v3871
    %3873 = vmatmul.f32.gmra.mxu0 %v3837
    %v3874 = vpop.f32.mrf.mxu0
    %v3875 = vadd.f32 0.0, %v3874
    %3876 = vmatmul.f32.gmra.mxu0 %v3838
    %v3877 = vpop.f32.mrf.mxu0
    %v3878 = vadd.f32 0.0, %v3877
    %3879 = vmatmul.f32.gmra.mxu0 %v3839
    %v3880 = vpop.f32.mrf.mxu0
    %v3881 = vadd.f32 0.0, %v3880
    %3882 = vmatmul.f32.gmra.mxu0 %v3840
    %v3883 = vpop.f32.mrf.mxu0
    %v3884 = vadd.f32 0.0, %v3883
    %3885 = vmatmul.f32.gmra.mxu0 %v3841
    %v3886 = vpop.f32.mrf.mxu0
    %v3887 = vadd.f32 0.0, %v3886
    %3888 = vmatmul.f32.gmra.mxu0 %v3842
    %v3889 = vpop.f32.mrf.mxu0
    %v3890 = vadd.f32 0.0, %v3889
    %3891 = vmatmul.f32.gmra.mxu0 %v3843
    %v3892 = vpop.f32.mrf.mxu0
    %v3893 = vadd.f32 0.0, %v3892
    %3894 = vmatmul.f32.gmra.mxu0 %v3844
    %v3895 = vpop.f32.mrf.mxu0
    %v3896 = vadd.f32 0.0, %v3895
    %3897 = vmatmul.f32.gmra.mxu0 %v3845
    %v3898 = vpop.f32.mrf.mxu0
    %v3899 = vadd.f32 0.0, %v3898
    %3900 = vmatmul.f32.gmra.mxu0 %v3846
    %v3901 = vpop.f32.mrf.mxu0
    %v3902 = vadd.f32 0.0, %v3901
    %3903 = vmatmul.f32.gmra.mxu0 %v3847
    %v3904 = vpop.f32.mrf.mxu0
    %v3905 = vadd.f32 0.0, %v3904
    %3906 = vmatmul.f32.gmra.mxu0 %v3848
    %v3907 = vpop.f32.mrf.mxu0
    %v3908 = vadd.f32 0.0, %v3907
    %3909 = vmatmul.f32.gmra.mxu0 %v3849
    %v3910 = vpop.f32.mrf.mxu0
    %v3911 = vadd.f32 0.0, %v3910
    %3912 = vmatmul.f32.gmra.mxu0 %v3850
    %v3913 = vpop.f32.mrf.mxu0
    %v3914 = vadd.f32 0.0, %v3913
    %3915 = vdwg.mxu0
    %v3916 = vadd.f32 %v3546, %v3869
    %v3917 = vadd.f32 %v3547, %v3872
    %v3918 = vadd.f32 %v3548, %v3875
    %v3919 = vadd.f32 %v3549, %v3878
    %v3920 = vadd.f32 %v3550, %v3881
    %v3921 = vadd.f32 %v3551, %v3884
    %v3922 = vadd.f32 %v3552, %v3887
    %v3923 = vadd.f32 %v3553, %v3890
    %v3924 = vadd.f32 %v3554, %v3893
    %v3925 = vadd.f32 %v3555, %v3896
    %v3926 = vadd.f32 %v3556, %v3899
    %v3927 = vadd.f32 %v3557, %v3902
    %v3928 = vadd.f32 %v3558, %v3905
    %v3929 = vadd.f32 %v3559, %v3908
    %v3930 = vadd.f32 %v3560, %v3911
    %v3931 = vadd.f32 %v3561, %v3914
    %v3933 = vperm.slane %v2110, 0
    %v3935 = vadd.f32 %v3916, %v3933
    %v3936 = vadd.f32 %v3917, %v3933
    %v3937 = vadd.f32 %v3918, %v3933
    %v3938 = vadd.f32 %v3919, %v3933
    %v3939 = vadd.f32 %v3920, %v3933
    %v3940 = vadd.f32 %v3921, %v3933
    %v3941 = vadd.f32 %v3922, %v3933
    %v3942 = vadd.f32 %v3923, %v3933
    %v3943 = vadd.f32 %v3924, %v3933
    %v3944 = vadd.f32 %v3925, %v3933
    %v3945 = vadd.f32 %v3926, %v3933
    %v3946 = vadd.f32 %v3927, %v3933
    %v3947 = vadd.f32 %v3928, %v3933
    %v3948 = vadd.f32 %v3929, %v3933
    %v3949 = vadd.f32 %v3930, %v3933
    %v3950 = vadd.f32 %v3931, %v3933
    %v3951 = vld [vmem:[%s2] sm:$0x3]
    %3952 = vmatpush.msra.mxu0 %v3950
    %3953 = vmatpush.msra.mxu0 %v3949
    %3954 = vmatpush.msra.mxu0 %v3948
    %3955 = vmatpush.msra.mxu0 %v3947
    %3956 = vmatpush.msra.mxu0 %v3946
    %3957 = vmatpush.msra.mxu0 %v3945
    %3958 = vmatpush.msra.mxu0 %v3944
    %3959 = vmatpush.msra.mxu0 %v3943
    %3960 = vmatpush.msra.mxu0 %v3942
    %3961 = vmatpush.msra.mxu0 %v3941
    %3962 = vmatpush.msra.mxu0 %v3940
    %3963 = vmatpush.msra.mxu0 %v3939
    %3964 = vmatpush.msra.mxu0 %v3938
    %3965 = vmatpush.msra.mxu0 %v3937
    %3966 = vmatpush.msra.mxu0 %v3936
    %3967 = vmatpush.msra.mxu0 %v3935
    %3968 = vmatmul.f32.gmra.mxu0 %v3951
    %v3969 = vpop.f32.mrf.mxu0
    %v3970 = vadd.f32 0.0, %v3969
    %3971 = vdwg.mxu0
    %v3972 = vld [vmem:[%s9] sm:$0xff]
    %v3973 = vld [vmem:[%s9 + $0x8] sm:$0xff]
    %v3974 = vld [vmem:[%s9 + $0x10] sm:$0xff]
    %v3975 = vld [vmem:[%s9 + $0x18] sm:$0xff]
    %v3976 = vld [vmem:[%s9 + $0x20] sm:$0xff]
    %v3977 = vld [vmem:[%s9 + $0x28] sm:$0xff]
    %v3978 = vld [vmem:[%s9 + $0x30] sm:$0xff]
    %v3979 = vld [vmem:[%s9 + $0x38] sm:$0xff]
    %v3980 = vld [vmem:[%s9 + $0x40] sm:$0xff]
    %v3981 = vld [vmem:[%s9 + $0x48] sm:$0xff]
    %v3982 = vld [vmem:[%s9 + $0x50] sm:$0xff]
    %v3983 = vld [vmem:[%s9 + $0x58] sm:$0xff]
    %v3984 = vld [vmem:[%s9 + $0x60] sm:$0xff]
    %v3985 = vld [vmem:[%s9 + $0x68] sm:$0xff]
    %v3986 = vld [vmem:[%s9 + $0x70] sm:$0xff]
    %v3987 = vld [vmem:[%s9 + $0x78] sm:$0xff]
    %v3988 = vld [vmem:[%s10] sm:$0x1]
    %v3990 = vperm.slane %v3988, 0
    %3992 = vmatpush.msra.mxu0 %v3987
    %3993 = vmatpush.msra.mxu0 %v3986
    %3994 = vmatpush.msra.mxu0 %v3985
    %3995 = vmatpush.msra.mxu0 %v3984
    %3996 = vmatpush.msra.mxu0 %v3983
    %3997 = vmatpush.msra.mxu0 %v3982
    %3998 = vmatpush.msra.mxu0 %v3981
    %3999 = vmatpush.msra.mxu0 %v3980
    %4000 = vmatpush.msra.mxu0 %v3979
    %4001 = vmatpush.msra.mxu0 %v3978
    %4002 = vmatpush.msra.mxu0 %v3977
    %4003 = vmatpush.msra.mxu0 %v3976
    %4004 = vmatpush.msra.mxu0 %v3975
    %4005 = vmatpush.msra.mxu0 %v3974
    %4006 = vmatpush.msra.mxu0 %v3973
    %4007 = vmatpush.msra.mxu0 %v3972
    %4008 = vmatmul.f32.gmra.mxu0 %v3970
    %v4009 = vpop.f32.mrf.mxu0
    %v4010 = vadd.f32 %v3990, %v4009
    %4011 = vdwg.mxu0
    %v4012 = vmax.f32 %v4010, 0.0
    %v4013 = vld [vmem:[%s11] sm:$0xff]
    %v4014 = vld [vmem:[%s11 + $0x8] sm:$0xff]
    %v4015 = vld [vmem:[%s11 + $0x10] sm:$0xff]
    %v4016 = vld [vmem:[%s11 + $0x18] sm:$0xff]
    %v4017 = vld [vmem:[%s11 + $0x20] sm:$0xff]
    %v4018 = vld [vmem:[%s11 + $0x28] sm:$0xff]
    %v4019 = vld [vmem:[%s11 + $0x30] sm:$0xff]
    %v4020 = vld [vmem:[%s11 + $0x38] sm:$0xff]
    %v4021 = vld [vmem:[%s11 + $0x40] sm:$0xff]
    %v4022 = vld [vmem:[%s11 + $0x48] sm:$0xff]
    %v4023 = vld [vmem:[%s11 + $0x50] sm:$0xff]
    %v4024 = vld [vmem:[%s11 + $0x58] sm:$0xff]
    %v4025 = vld [vmem:[%s11 + $0x60] sm:$0xff]
    %v4026 = vld [vmem:[%s11 + $0x68] sm:$0xff]
    %v4027 = vld [vmem:[%s11 + $0x70] sm:$0xff]
    %v4028 = vld [vmem:[%s11 + $0x78] sm:$0xff]
    %v4029 = vld [vmem:[%s12] sm:$0x1]
    %v4031 = vperm.slane %v4029, 0
    %4033 = vmatpush.msra.mxu0 %v4028
    %4034 = vmatpush.msra.mxu0 %v4027
    %4035 = vmatpush.msra.mxu0 %v4026
    %4036 = vmatpush.msra.mxu0 %v4025
    %4037 = vmatpush.msra.mxu0 %v4024
    %4038 = vmatpush.msra.mxu0 %v4023
    %4039 = vmatpush.msra.mxu0 %v4022
    %4040 = vmatpush.msra.mxu0 %v4021
    %4041 = vmatpush.msra.mxu0 %v4020
    %4042 = vmatpush.msra.mxu0 %v4019
    %4043 = vmatpush.msra.mxu0 %v4018
    %4044 = vmatpush.msra.mxu0 %v4017
    %4045 = vmatpush.msra.mxu0 %v4016
    %4046 = vmatpush.msra.mxu0 %v4015
    %4047 = vmatpush.msra.mxu0 %v4014
    %4048 = vmatpush.msra.mxu0 %v4013
    %4049 = vmatmul.f32.gmra.mxu0 %v4012
    %v4050 = vpop.f32.mrf.mxu0
    %v4051 = vadd.f32 %v4031, %v4050
    %4052 = vdwg.mxu0
    %4053 = vst [vmem:[#allocation2] sm:$0x3] %v4051
    // Predicated region
    $region54: #{net_forward.1} parent=1 // pred_check
      _
    $region55: #{net_forward.1} parent=1 // pred_check_branch
      %4055 = sbr.rel (0) target = $region57
    $region56: #{net_forward.1} parent=1 // pred_region
      %4057 = vsyncadd [#allocation3], 0
      %s4059 = sshll.u32 [#allocation2], 4
      %s4060 = int_to_ptr.vmem [resolvable:$true] %s4059
      %s4061 = sshll.u32 %s13, 4
      %s4062 = int_to_ptr.hbm [resolvable:$true] %s4061
      %4064 = dma.vmem_to_hbm [thread:$0]  %s4060, 32, %s4062, [#allocation3]
    $region57: #{net_forward.1} parent=1 // pred_fallthru
      _
    // Predicated region
    $region58: #{net_forward.1} parent=1 // pred_check
      _
    $region59: #{net_forward.1} parent=1 // pred_check_branch
      %4066 = sbr.rel (0) target = $region61
    $region60: #{net_forward.1} parent=1 // pred_region
      %4068 = dma.done [#allocation3], 32
    $region61: #{net_forward.1} parent=1 // pred_fallthru
      _
    %4069 = vsyncpa [#allocation3], 1

</llo_original>
